<compile_context>
chip_gen: v7x
topology: tpu7x:2x2x1
jax: 0.10.0
libtpu: 0.0.40
codegen_flags: <defaults>
</compile_context>

<pallas_src>
import functools

import jax
import jax.numpy as jnp
from jax.experimental import pallas as pl
from jax.experimental.pallas import tpu as pltpu


def _round_up(n, m):
    return (n + m - 1) // m * m


# ---------------------------------------------------------------------------
# fused kernel: out = x * conv_w(conv(img)) + conv_b(conv(img))
# ---------------------------------------------------------------------------

def _acm_fused_kernel(wc_ref, wwb_ref, mask_ref, img_ref, x_ref, o_ref, *,
                      wp, cnp):
    """One batch element, full (padded, flattened) spatial extent.

    wc_ref  : (9, Cmid, Cg)    bf16  conv filters, tap-major t = ky*3 + kx
    wwb_ref : (9, 2*Cnp, Cmid) bf16  stacked conv_weight / conv_bias filters
    mask_ref: (1, L)           f32   1.0 at interior (non-padding) pixels
    img_ref : (1, Cg, L)       f32   img with zero ring, flattened to L lanes
    x_ref   : (1, Cnp, L)      f32   x in the same padded/flattened layout
    o_ref   : (1, Cnp, L)            output (interior lanes valid)
    """
    img = img_ref[0]                                   # (Cg, L)
    L = img.shape[-1]
    # tap order matches the (ky, kx) flatten of the filters: dy=ky-1, dx=kx-1
    offs = [dy * wp + dx for dy in (-1, 0, 1) for dx in (-1, 0, 1)]

    # ---- stage 1: out_code = conv3x3(img), 9 shifted-tap MXU dots, f32 acc
    acc1 = None
    for t, off in enumerate(offs):
        src = img if off == 0 else pltpu.roll(img, (-off) % L, axis=1)
        d = jnp.dot(wc_ref[t], src.astype(jnp.bfloat16),
                    preferred_element_type=jnp.float32)
        acc1 = d if acc1 is None else acc1 + d          # (Cmid, L)

    # zero the padding ring (this IS the zero padding of the second convs),
    # cast once to bf16 as the MXU operand of stage 2.
    out_code = (acc1 * mask_ref[...]).astype(jnp.bfloat16)

    # ---- stage 2: weight & bias maps with one stacked dot per tap.
    # Roll the small (2*Cnp, L) f32 result instead of the big out_code tile.
    acc2 = None
    for t, off in enumerate(offs):
        r = jnp.dot(wwb_ref[t], out_code, preferred_element_type=jnp.float32)
        if off != 0:
            r = pltpu.roll(r, (-off) % L, axis=1)
        acc2 = r if acc2 is None else acc2 + r          # (2*Cnp, L)

    w_map = acc2[:cnp, :]                               # sublane-aligned split
    b_map = acc2[cnp:, :]
    o_ref[0] = (x_ref[0] * w_map + b_map).astype(o_ref.dtype)


# ---------------------------------------------------------------------------
# wrapper: layout plumbing only (padding / flattening / filter restacking)
# ---------------------------------------------------------------------------

def acm_forward(x, img, w_conv, w_weight, w_bias):
    """ACM.forward(x, img) with the module's three conv3x3 filters.

    x        : (B, Cn,  H, W)
    img      : (B, Cg,  H, W)          (Cg = cfg.GAN.GF_DIM)
    w_conv   : (Cmid, Cg,  3, 3)       (Cmid = 128 in the module)
    w_weight : (Cn,   Cmid, 3, 3)
    w_bias   : (Cn,   Cmid, 3, 3)
    """
    B, Cn, H, W = x.shape
    Cg = img.shape[1]
    Cmid = w_conv.shape[0]

    Hp, Wp = H + 2, W + 2
    hw_p = Hp * Wp
    L = _round_up(hw_p, 128)            # lane-dense flattened spatial extent
    Cnp = _round_up(Cn, 8)              # sublane-aligned output channels

    # img: 1-pixel zero ring, flatten (Hp*Wp), lane-pad to L.
    img_p = jnp.pad(img, ((0, 0), (0, 0), (1, 1), (1, 1))).reshape(B, Cg, hw_p)
    img_p = jnp.pad(img_p, ((0, 0), (0, 0), (0, L - hw_p))).astype(jnp.float32)

    # x: same spatial layout, channels padded to Cnp.
    x_p = jnp.pad(x, ((0, 0), (0, Cnp - Cn), (1, 1), (1, 1))).reshape(B, Cnp, hw_p)
    x_p = jnp.pad(x_p.astype(jnp.float32), ((0, 0), (0, 0), (0, L - hw_p)))

    # filters -> tap-major (9, Cout, Cin), bf16 MXU operands.
    wc = jnp.transpose(w_conv, (2, 3, 0, 1)).reshape(9, Cmid, Cg)
    wc = wc.astype(jnp.bfloat16)
    w_w = jnp.pad(w_weight, ((0, Cnp - Cn), (0, 0), (0, 0), (0, 0)))
    w_b = jnp.pad(w_bias, ((0, Cnp - Cn), (0, 0), (0, 0), (0, 0)))
    wwb = jnp.concatenate([w_w, w_b], axis=0)                 # (2*Cnp, Cmid, 3, 3)
    wwb = jnp.transpose(wwb, (2, 3, 0, 1)).reshape(9, 2 * Cnp, Cmid)
    wwb = wwb.astype(jnp.bfloat16)

    # interior mask over the padded/flattened spatial layout.
    f = jnp.arange(L, dtype=jnp.int32)
    row = f // Wp
    col = f % Wp
    interior = (row >= 1) & (row <= H) & (col >= 1) & (col <= W) & (f < hw_p)
    mask = interior.astype(jnp.float32).reshape(1, L)

    kernel = functools.partial(_acm_fused_kernel, wp=Wp, cnp=Cnp)

    out = pl.pallas_call(
        kernel,
        out_shape=jax.ShapeDtypeStruct((B, Cnp, L), x.dtype),
        grid_spec=pltpu.PrefetchScalarGridSpec(
            num_scalar_prefetch=0,
            grid=(B,),
            in_specs=[
                pl.BlockSpec((9, Cmid, Cg), lambda b: (0, 0, 0)),       # resident
                pl.BlockSpec((9, 2 * Cnp, Cmid), lambda b: (0, 0, 0)),  # resident
                pl.BlockSpec((1, L), lambda b: (0, 0)),                 # resident
                pl.BlockSpec((1, Cg, L), lambda b: (b, 0, 0)),
                pl.BlockSpec((1, Cnp, L), lambda b: (b, 0, 0)),
            ],
            out_specs=pl.BlockSpec((1, Cnp, L), lambda b: (b, 0, 0)),
        ),
        compiler_params=pltpu.CompilerParams(
            dimension_semantics=("parallel",),
            vmem_limit_bytes=48 * 1024 * 1024,
        ),
    )(wc, wwb, mask, img_p, x_p)

    # drop channel padding, lane tail and the spatial ring.
    out = out[:, :Cn, :hw_p].reshape(B, Cn, Hp, Wp)[:, :, 1:H + 1, 1:W + 1]
    return out


# ---------------------------------------------------------------------------
# self-test
# ---------------------------------------------------------------------------

def _conv3x3_ref(a, w):
    return jax.lax.conv_general_dilated(
        a, w, window_strides=(1, 1), padding=((1, 1), (1, 1)),
        dimension_numbers=("NCHW", "OIHW", "NCHW"))


if __name__ == "__main__":
    key = jax.random.PRNGKey(0)
    k1, k2, k3, k4, k5 = jax.random.split(key, 5)

    B, channel_num, H, W = 2, 4, 16, 16
    gf_dim, mid = 8, 128   # cfg.GAN.GF_DIM placeholder; 128 is hard-coded in ACM

    x = jax.random.normal(k1, (B, channel_num, H, W), dtype=jnp.float32)
    img = jax.random.normal(k2, (B, gf_dim, H, W), dtype=jnp.float32)
    w_conv = jax.random.normal(k3, (mid, gf_dim, 3, 3), jnp.float32) * (gf_dim * 9) ** -0.5
    w_weight = jax.random.normal(k4, (channel_num, mid, 3, 3), jnp.float32) * (mid * 9) ** -0.5
    w_bias = jax.random.normal(k5, (channel_num, mid, 3, 3), jnp.float32) * (mid * 9) ** -0.5

    acm = jax.jit(acm_forward)
    y = acm(x, img, w_conv, w_weight, w_bias)
    jax.block_until_ready(y)

    # Pure-JAX f32 reference of the same forward pass.
    out_code_ref = _conv3x3_ref(img, w_conv)
    y_ref = x * _conv3x3_ref(out_code_ref, w_weight) + _conv3x3_ref(out_code_ref, w_bias)

    assert y.shape == (B, channel_num, H, W)
    rel_err = float(jnp.max(jnp.abs(y - y_ref)) / (jnp.max(jnp.abs(y_ref)) + 1e-6))
    assert rel_err < 3e-2, f"mismatch vs reference, rel_err={rel_err}"

    print("KERNEL_OK")
</pallas_src>

<mosaic_0001>
module attributes {stable_mosaic.version = 11 : i64} {
  func.func @_acm_fused_kernel(%arg0: i32, %arg1: memref<9x128x8xbf16, #tpu.memory_space<vmem>>, %arg2: memref<9x16x128xbf16, #tpu.memory_space<vmem>>, %arg3: memref<1x384xf32, #tpu.memory_space<vmem>>, %arg4: memref<1x8x384xf32, #tpu.memory_space<vmem>>, %arg5: memref<1x8x384xf32, #tpu.memory_space<vmem>>, %arg6: memref<1x8x384xf32, #tpu.memory_space<vmem>>) attributes {dimension_semantics = [#tpu.dimension_semantics<parallel>], iteration_bounds = array<i64: 2>, scalar_prefetch = 0 : i64, scratch_operands = 0 : i64, tpu.core_type = #tpu.core_type<tc>, window_params = [{pipeline_mode = #tpu.pipeline_mode<synchronous>, transform_indices = @transform_0, window_bounds = array<i64: 9, 128, 8>}, {pipeline_mode = #tpu.pipeline_mode<synchronous>, transform_indices = @transform_1, window_bounds = array<i64: 9, 16, 128>}, {pipeline_mode = #tpu.pipeline_mode<synchronous>, transform_indices = @transform_2, window_bounds = array<i64: 1, 384>}, {transform_indices = @transform_3, window_bounds = array<i64: 1, 8, 384>}, {transform_indices = @transform_4, window_bounds = array<i64: 1, 8, 384>}, {transform_indices = @transform_5, window_bounds = array<i64: 1, 8, 384>}]} {
    %c0 = arith.constant 0 : index
    %c0_0 = arith.constant 0 : index
    %c0_1 = arith.constant 0 : index
    %0 = vector.load %arg4[%c0, %c0_0, %c0_1] : memref<1x8x384xf32, #tpu.memory_space<vmem>>, vector<1x8x384xf32>
    %1 = vector.shape_cast %0 : vector<1x8x384xf32> to vector<8x384xf32>
    %c19_i32 = arith.constant 19 : i32
    %2 = tpu.dynamic_rotate %1 by %c19_i32 dim 1 : vector<8x384xf32>, i32 -> vector<8x384xf32>
    %c0_2 = arith.constant 0 : index
    %c0_3 = arith.constant 0 : index
    %c0_4 = arith.constant 0 : index
    %3 = vector.load %arg1[%c0_2, %c0_3, %c0_4] : memref<9x128x8xbf16, #tpu.memory_space<vmem>>, vector<1x128x8xbf16>
    %4 = vector.shape_cast %3 : vector<1x128x8xbf16> to vector<128x8xbf16>
    %5 = arith.truncf %2 : vector<8x384xf32> to vector<8x384xbf16>
    %cst = arith.constant dense<0.000000e+00> : vector<128x384xf32>
    %6 = tpu.matmul %4, %5, %cst {dimension_numbers = #tpu.dot_dimension_numbers<[1], [0], [0], [1], [0, 0, 1, 1], [], []>} : vector<128x8xbf16>, vector<8x384xbf16>, vector<128x384xf32> -> vector<128x384xf32>
    %c18_i32 = arith.constant 18 : i32
    %7 = tpu.dynamic_rotate %1 by %c18_i32 dim 1 : vector<8x384xf32>, i32 -> vector<8x384xf32>
    %c1 = arith.constant 1 : index
    %c0_5 = arith.constant 0 : index
    %c0_6 = arith.constant 0 : index
    %8 = vector.load %arg1[%c1, %c0_5, %c0_6] : memref<9x128x8xbf16, #tpu.memory_space<vmem>>, vector<1x128x8xbf16>
    %9 = vector.shape_cast %8 : vector<1x128x8xbf16> to vector<128x8xbf16>
    %10 = arith.truncf %7 : vector<8x384xf32> to vector<8x384xbf16>
    %cst_7 = arith.constant dense<0.000000e+00> : vector<128x384xf32>
    %11 = tpu.matmul %9, %10, %cst_7 {dimension_numbers = #tpu.dot_dimension_numbers<[1], [0], [0], [1], [0, 0, 1, 1], [], []>} : vector<128x8xbf16>, vector<8x384xbf16>, vector<128x384xf32> -> vector<128x384xf32>
    %12 = arith.addf %6, %11 : vector<128x384xf32>
    %c17_i32 = arith.constant 17 : i32
    %13 = tpu.dynamic_rotate %1 by %c17_i32 dim 1 : vector<8x384xf32>, i32 -> vector<8x384xf32>
    %c2 = arith.constant 2 : index
    %c0_8 = arith.constant 0 : index
    %c0_9 = arith.constant 0 : index
    %14 = vector.load %arg1[%c2, %c0_8, %c0_9] : memref<9x128x8xbf16, #tpu.memory_space<vmem>>, vector<1x128x8xbf16>
    %15 = vector.shape_cast %14 : vector<1x128x8xbf16> to vector<128x8xbf16>
    %16 = arith.truncf %13 : vector<8x384xf32> to vector<8x384xbf16>
    %cst_10 = arith.constant dense<0.000000e+00> : vector<128x384xf32>
    %17 = tpu.matmul %15, %16, %cst_10 {dimension_numbers = #tpu.dot_dimension_numbers<[1], [0], [0], [1], [0, 0, 1, 1], [], []>} : vector<128x8xbf16>, vector<8x384xbf16>, vector<128x384xf32> -> vector<128x384xf32>
    %18 = arith.addf %12, %17 : vector<128x384xf32>
    %c1_i32 = arith.constant 1 : i32
    %19 = tpu.dynamic_rotate %1 by %c1_i32 dim 1 : vector<8x384xf32>, i32 -> vector<8x384xf32>
    %c3 = arith.constant 3 : index
    %c0_11 = arith.constant 0 : index
    %c0_12 = arith.constant 0 : index
    %20 = vector.load %arg1[%c3, %c0_11, %c0_12] : memref<9x128x8xbf16, #tpu.memory_space<vmem>>, vector<1x128x8xbf16>
    %21 = vector.shape_cast %20 : vector<1x128x8xbf16> to vector<128x8xbf16>
    %22 = arith.truncf %19 : vector<8x384xf32> to vector<8x384xbf16>
    %cst_13 = arith.constant dense<0.000000e+00> : vector<128x384xf32>
    %23 = tpu.matmul %21, %22, %cst_13 {dimension_numbers = #tpu.dot_dimension_numbers<[1], [0], [0], [1], [0, 0, 1, 1], [], []>} : vector<128x8xbf16>, vector<8x384xbf16>, vector<128x384xf32> -> vector<128x384xf32>
    %24 = arith.addf %18, %23 : vector<128x384xf32>
    %c4 = arith.constant 4 : index
    %c0_14 = arith.constant 0 : index
    %c0_15 = arith.constant 0 : index
    %25 = vector.load %arg1[%c4, %c0_14, %c0_15] : memref<9x128x8xbf16, #tpu.memory_space<vmem>>, vector<1x128x8xbf16>
    %26 = vector.shape_cast %25 : vector<1x128x8xbf16> to vector<128x8xbf16>
    %27 = arith.truncf %1 : vector<8x384xf32> to vector<8x384xbf16>
    %cst_16 = arith.constant dense<0.000000e+00> : vector<128x384xf32>
    %28 = tpu.matmul %26, %27, %cst_16 {dimension_numbers = #tpu.dot_dimension_numbers<[1], [0], [0], [1], [0, 0, 1, 1], [], []>} : vector<128x8xbf16>, vector<8x384xbf16>, vector<128x384xf32> -> vector<128x384xf32>
    %29 = arith.addf %24, %28 : vector<128x384xf32>
    %c383_i32 = arith.constant 383 : i32
    %30 = tpu.dynamic_rotate %1 by %c383_i32 dim 1 : vector<8x384xf32>, i32 -> vector<8x384xf32>
    %c5 = arith.constant 5 : index
    %c0_17 = arith.constant 0 : index
    %c0_18 = arith.constant 0 : index
    %31 = vector.load %arg1[%c5, %c0_17, %c0_18] : memref<9x128x8xbf16, #tpu.memory_space<vmem>>, vector<1x128x8xbf16>
    %32 = vector.shape_cast %31 : vector<1x128x8xbf16> to vector<128x8xbf16>
    %33 = arith.truncf %30 : vector<8x384xf32> to vector<8x384xbf16>
    %cst_19 = arith.constant dense<0.000000e+00> : vector<128x384xf32>
    %34 = tpu.matmul %32, %33, %cst_19 {dimension_numbers = #tpu.dot_dimension_numbers<[1], [0], [0], [1], [0, 0, 1, 1], [], []>} : vector<128x8xbf16>, vector<8x384xbf16>, vector<128x384xf32> -> vector<128x384xf32>
    %35 = arith.addf %29, %34 : vector<128x384xf32>
    %c367_i32 = arith.constant 367 : i32
    %36 = tpu.dynamic_rotate %1 by %c367_i32 dim 1 : vector<8x384xf32>, i32 -> vector<8x384xf32>
    %c6 = arith.constant 6 : index
    %c0_20 = arith.constant 0 : index
    %c0_21 = arith.constant 0 : index
    %37 = vector.load %arg1[%c6, %c0_20, %c0_21] : memref<9x128x8xbf16, #tpu.memory_space<vmem>>, vector<1x128x8xbf16>
    %38 = vector.shape_cast %37 : vector<1x128x8xbf16> to vector<128x8xbf16>
    %39 = arith.truncf %36 : vector<8x384xf32> to vector<8x384xbf16>
    %cst_22 = arith.constant dense<0.000000e+00> : vector<128x384xf32>
    %40 = tpu.matmul %38, %39, %cst_22 {dimension_numbers = #tpu.dot_dimension_numbers<[1], [0], [0], [1], [0, 0, 1, 1], [], []>} : vector<128x8xbf16>, vector<8x384xbf16>, vector<128x384xf32> -> vector<128x384xf32>
    %41 = arith.addf %35, %40 : vector<128x384xf32>
    %c366_i32 = arith.constant 366 : i32
    %42 = tpu.dynamic_rotate %1 by %c366_i32 dim 1 : vector<8x384xf32>, i32 -> vector<8x384xf32>
    %c7 = arith.constant 7 : index
    %c0_23 = arith.constant 0 : index
    %c0_24 = arith.constant 0 : index
    %43 = vector.load %arg1[%c7, %c0_23, %c0_24] : memref<9x128x8xbf16, #tpu.memory_space<vmem>>, vector<1x128x8xbf16>
    %44 = vector.shape_cast %43 : vector<1x128x8xbf16> to vector<128x8xbf16>
    %45 = arith.truncf %42 : vector<8x384xf32> to vector<8x384xbf16>
    %cst_25 = arith.constant dense<0.000000e+00> : vector<128x384xf32>
    %46 = tpu.matmul %44, %45, %cst_25 {dimension_numbers = #tpu.dot_dimension_numbers<[1], [0], [0], [1], [0, 0, 1, 1], [], []>} : vector<128x8xbf16>, vector<8x384xbf16>, vector<128x384xf32> -> vector<128x384xf32>
    %47 = arith.addf %41, %46 : vector<128x384xf32>
    %c365_i32 = arith.constant 365 : i32
    %48 = tpu.dynamic_rotate %1 by %c365_i32 dim 1 : vector<8x384xf32>, i32 -> vector<8x384xf32>
    %c8 = arith.constant 8 : index
    %c0_26 = arith.constant 0 : index
    %c0_27 = arith.constant 0 : index
    %49 = vector.load %arg1[%c8, %c0_26, %c0_27] : memref<9x128x8xbf16, #tpu.memory_space<vmem>>, vector<1x128x8xbf16>
    %50 = vector.shape_cast %49 : vector<1x128x8xbf16> to vector<128x8xbf16>
    %51 = arith.truncf %48 : vector<8x384xf32> to vector<8x384xbf16>
    %cst_28 = arith.constant dense<0.000000e+00> : vector<128x384xf32>
    %52 = tpu.matmul %50, %51, %cst_28 {dimension_numbers = #tpu.dot_dimension_numbers<[1], [0], [0], [1], [0, 0, 1, 1], [], []>} : vector<128x8xbf16>, vector<8x384xbf16>, vector<128x384xf32> -> vector<128x384xf32>
    %53 = arith.addf %47, %52 : vector<128x384xf32>
    %c0_29 = arith.constant 0 : index
    %c0_30 = arith.constant 0 : index
    %54 = vector.load %arg3[%c0_29, %c0_30] : memref<1x384xf32, #tpu.memory_space<vmem>>, vector<1x384xf32>
    %55 = vector.broadcast %54 : vector<1x384xf32> to vector<128x384xf32>
    %56 = arith.mulf %53, %55 : vector<128x384xf32>
    %57 = arith.truncf %56 : vector<128x384xf32> to vector<128x384xbf16>
    %c0_31 = arith.constant 0 : index
    %c0_32 = arith.constant 0 : index
    %c0_33 = arith.constant 0 : index
    %58 = vector.load %arg2[%c0_31, %c0_32, %c0_33] : memref<9x16x128xbf16, #tpu.memory_space<vmem>>, vector<1x16x128xbf16>
    %59 = vector.shape_cast %58 : vector<1x16x128xbf16> to vector<16x128xbf16>
    %cst_34 = arith.constant dense<0.000000e+00> : vector<16x384xf32>
    %60 = tpu.matmul %59, %57, %cst_34 {dimension_numbers = #tpu.dot_dimension_numbers<[1], [0], [0], [1], [0, 0, 1, 1], [], []>} : vector<16x128xbf16>, vector<128x384xbf16>, vector<16x384xf32> -> vector<16x384xf32>
    %c19_i32_35 = arith.constant 19 : i32
    %61 = tpu.dynamic_rotate %60 by %c19_i32_35 dim 1 : vector<16x384xf32>, i32 -> vector<16x384xf32>
    %c1_36 = arith.constant 1 : index
    %c0_37 = arith.constant 0 : index
    %c0_38 = arith.constant 0 : index
    %62 = vector.load %arg2[%c1_36, %c0_37, %c0_38] : memref<9x16x128xbf16, #tpu.memory_space<vmem>>, vector<1x16x128xbf16>
    %63 = vector.shape_cast %62 : vector<1x16x128xbf16> to vector<16x128xbf16>
    %cst_39 = arith.constant dense<0.000000e+00> : vector<16x384xf32>
    %64 = tpu.matmul %63, %57, %cst_39 {dimension_numbers = #tpu.dot_dimension_numbers<[1], [0], [0], [1], [0, 0, 1, 1], [], []>} : vector<16x128xbf16>, vector<128x384xbf16>, vector<16x384xf32> -> vector<16x384xf32>
    %c18_i32_40 = arith.constant 18 : i32
    %65 = tpu.dynamic_rotate %64 by %c18_i32_40 dim 1 : vector<16x384xf32>, i32 -> vector<16x384xf32>
    %66 = arith.addf %61, %65 : vector<16x384xf32>
    %c2_41 = arith.constant 2 : index
    %c0_42 = arith.constant 0 : index
    %c0_43 = arith.constant 0 : index
    %67 = vector.load %arg2[%c2_41, %c0_42, %c0_43] : memref<9x16x128xbf16, #tpu.memory_space<vmem>>, vector<1x16x128xbf16>
    %68 = vector.shape_cast %67 : vector<1x16x128xbf16> to vector<16x128xbf16>
    %cst_44 = arith.constant dense<0.000000e+00> : vector<16x384xf32>
    %69 = tpu.matmul %68, %57, %cst_44 {dimension_numbers = #tpu.dot_dimension_numbers<[1], [0], [0], [1], [0, 0, 1, 1], [], []>} : vector<16x128xbf16>, vector<128x384xbf16>, vector<16x384xf32> -> vector<16x384xf32>
    %c17_i32_45 = arith.constant 17 : i32
    %70 = tpu.dynamic_rotate %69 by %c17_i32_45 dim 1 : vector<16x384xf32>, i32 -> vector<16x384xf32>
    %71 = arith.addf %66, %70 : vector<16x384xf32>
    %c3_46 = arith.constant 3 : index
    %c0_47 = arith.constant 0 : index
    %c0_48 = arith.constant 0 : index
    %72 = vector.load %arg2[%c3_46, %c0_47, %c0_48] : memref<9x16x128xbf16, #tpu.memory_space<vmem>>, vector<1x16x128xbf16>
    %73 = vector.shape_cast %72 : vector<1x16x128xbf16> to vector<16x128xbf16>
    %cst_49 = arith.constant dense<0.000000e+00> : vector<16x384xf32>
    %74 = tpu.matmul %73, %57, %cst_49 {dimension_numbers = #tpu.dot_dimension_numbers<[1], [0], [0], [1], [0, 0, 1, 1], [], []>} : vector<16x128xbf16>, vector<128x384xbf16>, vector<16x384xf32> -> vector<16x384xf32>
    %c1_i32_50 = arith.constant 1 : i32
    %75 = tpu.dynamic_rotate %74 by %c1_i32_50 dim 1 : vector<16x384xf32>, i32 -> vector<16x384xf32>
    %76 = arith.addf %71, %75 : vector<16x384xf32>
    %c4_51 = arith.constant 4 : index
    %c0_52 = arith.constant 0 : index
    %c0_53 = arith.constant 0 : index
    %77 = vector.load %arg2[%c4_51, %c0_52, %c0_53] : memref<9x16x128xbf16, #tpu.memory_space<vmem>>, vector<1x16x128xbf16>
    %78 = vector.shape_cast %77 : vector<1x16x128xbf16> to vector<16x128xbf16>
    %cst_54 = arith.constant dense<0.000000e+00> : vector<16x384xf32>
    %79 = tpu.matmul %78, %57, %cst_54 {dimension_numbers = #tpu.dot_dimension_numbers<[1], [0], [0], [1], [0, 0, 1, 1], [], []>} : vector<16x128xbf16>, vector<128x384xbf16>, vector<16x384xf32> -> vector<16x384xf32>
    %80 = arith.addf %76, %79 : vector<16x384xf32>
    %c5_55 = arith.constant 5 : index
    %c0_56 = arith.constant 0 : index
    %c0_57 = arith.constant 0 : index
    %81 = vector.load %arg2[%c5_55, %c0_56, %c0_57] : memref<9x16x128xbf16, #tpu.memory_space<vmem>>, vector<1x16x128xbf16>
    %82 = vector.shape_cast %81 : vector<1x16x128xbf16> to vector<16x128xbf16>
    %cst_58 = arith.constant dense<0.000000e+00> : vector<16x384xf32>
    %83 = tpu.matmul %82, %57, %cst_58 {dimension_numbers = #tpu.dot_dimension_numbers<[1], [0], [0], [1], [0, 0, 1, 1], [], []>} : vector<16x128xbf16>, vector<128x384xbf16>, vector<16x384xf32> -> vector<16x384xf32>
    %c383_i32_59 = arith.constant 383 : i32
    %84 = tpu.dynamic_rotate %83 by %c383_i32_59 dim 1 : vector<16x384xf32>, i32 -> vector<16x384xf32>
    %85 = arith.addf %80, %84 : vector<16x384xf32>
    %c6_60 = arith.constant 6 : index
    %c0_61 = arith.constant 0 : index
    %c0_62 = arith.constant 0 : index
    %86 = vector.load %arg2[%c6_60, %c0_61, %c0_62] : memref<9x16x128xbf16, #tpu.memory_space<vmem>>, vector<1x16x128xbf16>
    %87 = vector.shape_cast %86 : vector<1x16x128xbf16> to vector<16x128xbf16>
    %cst_63 = arith.constant dense<0.000000e+00> : vector<16x384xf32>
    %88 = tpu.matmul %87, %57, %cst_63 {dimension_numbers = #tpu.dot_dimension_numbers<[1], [0], [0], [1], [0, 0, 1, 1], [], []>} : vector<16x128xbf16>, vector<128x384xbf16>, vector<16x384xf32> -> vector<16x384xf32>
    %c367_i32_64 = arith.constant 367 : i32
    %89 = tpu.dynamic_rotate %88 by %c367_i32_64 dim 1 : vector<16x384xf32>, i32 -> vector<16x384xf32>
    %90 = arith.addf %85, %89 : vector<16x384xf32>
    %c7_65 = arith.constant 7 : index
    %c0_66 = arith.constant 0 : index
    %c0_67 = arith.constant 0 : index
    %91 = vector.load %arg2[%c7_65, %c0_66, %c0_67] : memref<9x16x128xbf16, #tpu.memory_space<vmem>>, vector<1x16x128xbf16>
    %92 = vector.shape_cast %91 : vector<1x16x128xbf16> to vector<16x128xbf16>
    %cst_68 = arith.constant dense<0.000000e+00> : vector<16x384xf32>
    %93 = tpu.matmul %92, %57, %cst_68 {dimension_numbers = #tpu.dot_dimension_numbers<[1], [0], [0], [1], [0, 0, 1, 1], [], []>} : vector<16x128xbf16>, vector<128x384xbf16>, vector<16x384xf32> -> vector<16x384xf32>
    %c366_i32_69 = arith.constant 366 : i32
    %94 = tpu.dynamic_rotate %93 by %c366_i32_69 dim 1 : vector<16x384xf32>, i32 -> vector<16x384xf32>
    %95 = arith.addf %90, %94 : vector<16x384xf32>
    %c8_70 = arith.constant 8 : index
    %c0_71 = arith.constant 0 : index
    %c0_72 = arith.constant 0 : index
    %96 = vector.load %arg2[%c8_70, %c0_71, %c0_72] : memref<9x16x128xbf16, #tpu.memory_space<vmem>>, vector<1x16x128xbf16>
    %97 = vector.shape_cast %96 : vector<1x16x128xbf16> to vector<16x128xbf16>
    %cst_73 = arith.constant dense<0.000000e+00> : vector<16x384xf32>
    %98 = tpu.matmul %97, %57, %cst_73 {dimension_numbers = #tpu.dot_dimension_numbers<[1], [0], [0], [1], [0, 0, 1, 1], [], []>} : vector<16x128xbf16>, vector<128x384xbf16>, vector<16x384xf32> -> vector<16x384xf32>
    %c365_i32_74 = arith.constant 365 : i32
    %99 = tpu.dynamic_rotate %98 by %c365_i32_74 dim 1 : vector<16x384xf32>, i32 -> vector<16x384xf32>
    %100 = arith.addf %95, %99 : vector<16x384xf32>
    %101 = vector.extract_strided_slice %100 {offsets = [0, 0], sizes = [8, 384], strides = [1, 1]} : vector<16x384xf32> to vector<8x384xf32>
    %102 = vector.extract_strided_slice %100 {offsets = [8, 0], sizes = [8, 384], strides = [1, 1]} : vector<16x384xf32> to vector<8x384xf32>
    %c0_75 = arith.constant 0 : index
    %c0_76 = arith.constant 0 : index
    %c0_77 = arith.constant 0 : index
    %103 = vector.load %arg5[%c0_75, %c0_76, %c0_77] : memref<1x8x384xf32, #tpu.memory_space<vmem>>, vector<1x8x384xf32>
    %104 = vector.shape_cast %103 : vector<1x8x384xf32> to vector<8x384xf32>
    %105 = arith.mulf %104, %101 : vector<8x384xf32>
    %106 = arith.addf %105, %102 : vector<8x384xf32>
    %c0_78 = arith.constant 0 : index
    %c0_79 = arith.constant 0 : index
    %c0_80 = arith.constant 0 : index
    %107 = vector.load %arg6[%c0_78, %c0_79, %c0_80] : memref<1x8x384xf32, #tpu.memory_space<vmem>>, vector<1x8x384xf32>
    %108 = vector.shape_cast %107 : vector<1x8x384xf32> to vector<8x384xf32>
    %109 = vector.shape_cast %106 : vector<8x384xf32> to vector<1x8x384xf32>
    tpu.vector_store %arg6[%c0_78, %c0_79, %c0_80], %109 {strides = array<i32>} : memref<1x8x384xf32, #tpu.memory_space<vmem>>, vector<1x8x384xf32>,
    return
  }
  func.func @transform_0(%arg0: i32) -> (i32, i32, i32) {
    %c0_i32 = arith.constant 0 : i32
    %c0_i32_0 = arith.constant 0 : i32
    %c0_i32_1 = arith.constant 0 : i32
    %c0_i32_2 = arith.constant 0 : i32
    return %c0_i32, %c0_i32_0, %c0_i32_1 : i32, i32, i32
  }
  func.func @transform_1(%arg0: i32) -> (i32, i32, i32) {
    %c0_i32 = arith.constant 0 : i32
    %c0_i32_0 = arith.constant 0 : i32
    %c0_i32_1 = arith.constant 0 : i32
    %c0_i32_2 = arith.constant 0 : i32
    return %c0_i32, %c0_i32_0, %c0_i32_1 : i32, i32, i32
  }
  func.func @transform_2(%arg0: i32) -> (i32, i32) {
    %c0_i32 = arith.constant 0 : i32
    %c0_i32_0 = arith.constant 0 : i32
    %c0_i32_1 = arith.constant 0 : i32
    return %c0_i32, %c0_i32_0 : i32, i32
  }
  func.func @transform_3(%arg0: i32) -> (i32, i32, i32) {
    %c0_i32 = arith.constant 0 : i32
    %c0_i32_0 = arith.constant 0 : i32
    %c0_i32_1 = arith.constant 0 : i32
    return %arg0, %c0_i32, %c0_i32_0 : i32, i32, i32
  }
  func.func @transform_4(%arg0: i32) -> (i32, i32, i32) {
    %c0_i32 = arith.constant 0 : i32
    %c0_i32_0 = arith.constant 0 : i32
    %c0_i32_1 = arith.constant 0 : i32
    return %arg0, %c0_i32, %c0_i32_0 : i32, i32, i32
  }
  func.func @transform_5(%arg0: i32) -> (i32, i32, i32) {
    %c0_i32 = arith.constant 0 : i32
    %c0_i32_0 = arith.constant 0 : i32
    %c0_i32_1 = arith.constant 0 : i32
    return %arg0, %c0_i32, %c0_i32_0 : i32, i32, i32
  }
}

</mosaic_0001>

<llo_original>
// kernel: acm_forward.1
$region0: #{acm_forward.1}
  #allocation0 [shape = 'u32[]', space=smem, size = 0x4, offset = 0x4, fixed_abs, tag = 'smem constant byte address 0x4 - core index']
  #allocation1 [shape = 'u32[144,128]{1,0:T(1,128)}', space=vmem, size = 0x12000, scoped, tag = 'internal scratch']
  %s0 = inlined_call_operand.vmem [shape: bf16[9,128,8], index: 0, kind: input, shape index: {}]
  %s1 = inlined_call_operand.vmem [shape: bf16[9,16,128], index: 1, kind: input, shape index: {}]
  %s2 = inlined_call_operand.vmem [shape: f32[1,384], index: 2, kind: input, shape index: {}]
  %s3 = inlined_call_operand.vmem [shape: f32[2,8,384], index: 3, kind: input, shape index: {}]
  %s4 = inlined_call_operand.vmem [shape: f32[2,8,384], index: 4, kind: input, shape index: {}]
  %s5 = inlined_call_operand.vmem [shape: f32[2,8,384], index: 5, kind: output, shape index: {}]
  %s6 = sld [smem:[#allocation0]]
  $region53: #{acm_forward.1} parent=0
    _
  %s8 = ssub.s32 1, %s6
  %s9 = scalar_select 0, %s8, %s6
  loop: start=0, step=1, limit=4
  $region2: #{acm_forward.1} parent=0 // loop_pre_header
    _
  $region3: #{acm_forward.1} parent=0 // loop_header
    %s11 = sphi 0, %s15
    %p12 = scmp.ge.s32.totalorder %s11, 4
    %s19 = sphi 0, %s19
    %s21 = sphi 0, %s19
    %s22 = sphi 0, %s21
    %s36 = sphi 0, %s22
    %s40 = sphi 0, %s40
    %s42 = sphi 0, %s40
    %s43 = sphi 0, %s42
    %s57 = sphi 0, %s43
    %s61 = sphi 0, %s61
    %s63 = sphi 0, %s61
    %s64 = sphi 0, %s63
    %s78 = sphi 0, %s64
    %s84 = sphi 0, %s86
    %s87 = sphi 0, %s84
    %s88 = sphi 0, %s87
    %s104 = sphi 0, %s88
    %s110 = sphi 0, %s112
    %s113 = sphi 0, %s110
    %s114 = sphi 0, %s113
    %s130 = sphi 0, %s114
    %s136 = sphi 0, %s138
    %s139 = sphi 0, %s136
    %s140 = sphi 0, %s139
    %s156 = sphi 0, %s140
  $region4: #{acm_forward.1} parent=0 // loop_header_branch
    %14 = sbr.rel (%p12) target = $region8
  $region5: #{acm_forward.1} parent=0 // loop_body
    %s16 = ssub.s32 %s11, 1
    %s17 = ssub.s32 %s11, 2
    %s18 = sadd.s32 %s11, 1
    %s20 = sadd.s32 %s19, 1
    %p23 = scmp.eq.s32.totalorder %s11, 1
    %p24 = scmp.ne.s32.totalorder %s19, %s21
    %p25 = scmp.eq.s32.totalorder %s11, 0
    %p26 = por %p24, %p25
    %p27 = scmp.ne.s32.totalorder %s19, %s21
    %p28 = scmp.eq.s32.totalorder %s16, 1
    %p29 = por %p27, %p28
    %p30 = scmp.ne.s32.totalorder %s21, %s22
    %p31 = scmp.eq.s32.totalorder %s16, 0
    %p32 = por %p30, %p31
    %p33 = scmp.ne.s32.totalorder %s21, %s22
    %p34 = scmp.eq.s32.totalorder %s17, 1
    %p35 = por %p33, %p34
    %p37 = scmp.ne.s32.totalorder %s22, %s36
    %p38 = scmp.eq.s32.totalorder %s17, 0
    %p39 = por %p37, %p38
    %s41 = sadd.s32 %s40, 1
    %p44 = scmp.eq.s32.totalorder %s11, 1
    %p45 = scmp.ne.s32.totalorder %s40, %s42
    %p46 = scmp.eq.s32.totalorder %s11, 0
    %p47 = por %p45, %p46
    %p48 = scmp.ne.s32.totalorder %s40, %s42
    %p49 = scmp.eq.s32.totalorder %s16, 1
    %p50 = por %p48, %p49
    %p51 = scmp.ne.s32.totalorder %s42, %s43
    %p52 = scmp.eq.s32.totalorder %s16, 0
    %p53 = por %p51, %p52
    %p54 = scmp.ne.s32.totalorder %s42, %s43
    %p55 = scmp.eq.s32.totalorder %s17, 1
    %p56 = por %p54, %p55
    %p58 = scmp.ne.s32.totalorder %s43, %s57
    %p59 = scmp.eq.s32.totalorder %s17, 0
    %p60 = por %p58, %p59
    %s62 = sadd.s32 %s61, 1
    %p65 = scmp.eq.s32.totalorder %s11, 1
    %p66 = scmp.ne.s32.totalorder %s61, %s63
    %p67 = scmp.eq.s32.totalorder %s11, 0
    %p68 = por %p66, %p67
    %p69 = scmp.ne.s32.totalorder %s61, %s63
    %p70 = scmp.eq.s32.totalorder %s16, 1
    %p71 = por %p69, %p70
    %p72 = scmp.ne.s32.totalorder %s63, %s64
    %p73 = scmp.eq.s32.totalorder %s16, 0
    %p74 = por %p72, %p73
    %p75 = scmp.ne.s32.totalorder %s63, %s64
    %p76 = scmp.eq.s32.totalorder %s17, 1
    %p77 = por %p75, %p76
    %p79 = scmp.ne.s32.totalorder %s64, %s78
    %p80 = scmp.eq.s32.totalorder %s17, 0
    %p81 = por %p79, %p80
    %s82 = ssub.s32 %s11, %s18
    %p83 = scmp.eq.s32.totalorder %s82, 0
    %s85 = sadd.s32 %s84, 1
    %s86 = scalar_select %p83, %s84, %s85
    %p89 = pneg %p83
    %p90 = scmp.eq.s32.totalorder %s11, 1
    %p91 = por %p89, %p90
    %p92 = scmp.ne.s32.totalorder %s84, %s87
    %p93 = scmp.eq.s32.totalorder %s11, 0
    %p94 = por %p92, %p93
    %p95 = scmp.ne.s32.totalorder %s84, %s87
    %p96 = scmp.eq.s32.totalorder %s16, 1
    %p97 = por %p95, %p96
    %p98 = scmp.ne.s32.totalorder %s87, %s88
    %p99 = scmp.eq.s32.totalorder %s16, 0
    %p100 = por %p98, %p99
    %p101 = scmp.ne.s32.totalorder %s87, %s88
    %p102 = scmp.eq.s32.totalorder %s17, 1
    %p103 = por %p101, %p102
    %p105 = scmp.ne.s32.totalorder %s88, %s104
    %p106 = scmp.eq.s32.totalorder %s17, 0
    %p107 = por %p105, %p106
    %s108 = ssub.s32 %s11, %s18
    %p109 = scmp.eq.s32.totalorder %s108, 0
    %s111 = sadd.s32 %s110, 1
    %s112 = scalar_select %p109, %s110, %s111
    %p115 = pneg %p109
    %p116 = scmp.eq.s32.totalorder %s11, 1
    %p117 = por %p115, %p116
    %p118 = scmp.ne.s32.totalorder %s110, %s113
    %p119 = scmp.eq.s32.totalorder %s11, 0
    %p120 = por %p118, %p119
    %p121 = scmp.ne.s32.totalorder %s110, %s113
    %p122 = scmp.eq.s32.totalorder %s16, 1
    %p123 = por %p121, %p122
    %p124 = scmp.ne.s32.totalorder %s113, %s114
    %p125 = scmp.eq.s32.totalorder %s16, 0
    %p126 = por %p124, %p125
    %p127 = scmp.ne.s32.totalorder %s113, %s114
    %p128 = scmp.eq.s32.totalorder %s17, 1
    %p129 = por %p127, %p128
    %p131 = scmp.ne.s32.totalorder %s114, %s130
    %p132 = scmp.eq.s32.totalorder %s17, 0
    %p133 = por %p131, %p132
    %s134 = ssub.s32 %s11, %s18
    %p135 = scmp.eq.s32.totalorder %s134, 0
    %s137 = sadd.s32 %s136, 1
    %s138 = scalar_select %p135, %s136, %s137
    %p141 = pneg %p135
    %p142 = scmp.eq.s32.totalorder %s11, 1
    %p143 = por %p141, %p142
    %p144 = scmp.ne.s32.totalorder %s136, %s139
    %p145 = scmp.eq.s32.totalorder %s11, 0
    %p146 = por %p144, %p145
    %p147 = scmp.ne.s32.totalorder %s136, %s139
    %p148 = scmp.eq.s32.totalorder %s16, 1
    %p149 = por %p147, %p148
    %p150 = scmp.ne.s32.totalorder %s139, %s140
    %p151 = scmp.eq.s32.totalorder %s16, 0
    %p152 = por %p150, %p151
    %p153 = scmp.ne.s32.totalorder %s139, %s140
    %p154 = scmp.eq.s32.totalorder %s17, 1
    %p155 = por %p153, %p154
    %p157 = scmp.ne.s32.totalorder %s140, %s156
    %p158 = scmp.eq.s32.totalorder %s17, 0
    %p159 = por %p157, %p158
    %p160 = scmp.le.s32.totalorder 1, %s11
    %p161 = scmp.lt.s32.totalorder %s11, 3
    %p162 = pnand %p160, %p161
    %p163 = pneg %p162
    // Predicated region
    $region9: #{acm_forward.1} parent=5 // pred_check
      _
    $region10: #{acm_forward.1} parent=5 // pred_check_branch
      %165 = sbr.rel (%p162) target = $region12
    $region11: #{acm_forward.1} parent=5 // pred_region
      %s166 = ssub.s32 %s11, 1
      // Predicated region
      $region13: #{acm_forward.1} parent=11 // pred_check
        %p167 = pneg %p32
      $region14: #{acm_forward.1} parent=11 // pred_check_branch
        %169 = sbr.rel (%p167) target = $region16
      $region15: #{acm_forward.1} parent=11 // pred_region
        _
      $region16: #{acm_forward.1} parent=11 // pred_fallthru
        _
      // Predicated region
      $region17: #{acm_forward.1} parent=11 // pred_check
        %p170 = pneg %p53
      $region18: #{acm_forward.1} parent=11 // pred_check_branch
        %172 = sbr.rel (%p170) target = $region20
      $region19: #{acm_forward.1} parent=11 // pred_region
        _
      $region20: #{acm_forward.1} parent=11 // pred_fallthru
        _
      // Predicated region
      $region21: #{acm_forward.1} parent=11 // pred_check
        %p173 = pneg %p74
      $region22: #{acm_forward.1} parent=11 // pred_check_branch
        %175 = sbr.rel (%p173) target = $region24
      $region23: #{acm_forward.1} parent=11 // pred_region
        _
      $region24: #{acm_forward.1} parent=11 // pred_fallthru
        _
    $region12: #{acm_forward.1} parent=5 // pred_fallthru
      _
    %p176 = scmp.lt.s32.totalorder %s11, 2
    // Predicated region
    $region25: #{acm_forward.1} parent=5 // pred_check
      %p177 = pneg %p176
    $region26: #{acm_forward.1} parent=5 // pred_check_branch
      %179 = sbr.rel (%p177) target = $region28
    $region27: #{acm_forward.1} parent=5 // pred_region
      // Predicated region
      $region29: #{acm_forward.1} parent=27 // pred_check
        %p180 = pneg %p94
      $region30: #{acm_forward.1} parent=27 // pred_check_branch
        %182 = sbr.rel (%p180) target = $region32
      $region31: #{acm_forward.1} parent=27 // pred_region
        %p183 = scmp.lt.s32.totalorder %s11, 1
        %s184 = scalar_select %p183, %s11, 1
        %s185 = smul.addr %s184, 3
        %s186 = smul.addr %s185, 8
        %s187 = scalar_lea.vmem %s3, %s186
      $region32: #{acm_forward.1} parent=27 // pred_fallthru
        _
      // Predicated region
      $region33: #{acm_forward.1} parent=27 // pred_check
        %p188 = pneg %p120
      $region34: #{acm_forward.1} parent=27 // pred_check_branch
        %190 = sbr.rel (%p188) target = $region36
      $region35: #{acm_forward.1} parent=27 // pred_region
        %p191 = scmp.lt.s32.totalorder %s11, 1
        %s192 = scalar_select %p191, %s11, 1
        %s193 = smul.addr %s192, 3
        %s194 = smul.addr %s193, 8
        %s195 = scalar_lea.vmem %s4, %s194
      $region36: #{acm_forward.1} parent=27 // pred_fallthru
        _
    $region28: #{acm_forward.1} parent=5 // pred_fallthru
      _
    %p196 = scmp.le.s32.totalorder 1, %s11
    %p197 = scmp.lt.s32.totalorder %s11, 3
    %p198 = pnand %p196, %p197
    %p199 = pneg %p198
    // Predicated region
    $region37: #{acm_forward.1} parent=5 // pred_check
      _
    $region38: #{acm_forward.1} parent=5 // pred_check_branch
      %201 = sbr.rel (%p198) target = $region40
    $region39: #{acm_forward.1} parent=5 // pred_region
      %s202 = ssub.s32 %s11, 1
      %p203 = pneg %p32
      %p204 = pneg %p29
      %p205 = pneg %p53
      %p206 = pneg %p50
      %p207 = pneg %p74
      %p208 = pneg %p71
      %p209 = scmp.lt.s32.totalorder %s16, 1
      %s210 = scalar_select %p209, %s16, 1
      %s211 = smul.addr %s210, 3
      %s212 = smul.addr %s211, 8
      %s213 = scalar_lea.vmem %s3, %s212
      %p214 = pneg %p100
      %p215 = pneg %p97
      %p216 = scmp.lt.s32.totalorder %s16, 1
      %s217 = scalar_select %p216, %s16, 1
      %s218 = smul.addr %s217, 3
      %s219 = smul.addr %s218, 8
      %s220 = scalar_lea.vmem %s4, %s219
      %p221 = pneg %p126
      %p222 = pneg %p123
      %p223 = pneg %p152
      %p224 = pneg %p149
      %p225 = scmp.lt.s32.totalorder %s16, 1
      %s226 = scalar_select %p225, %s16, 1
      %s227 = smul.addr %s226, 3
      %s228 = smul.addr %s227, 8
      %s229 = scalar_lea.vmem %s5, %s228
      %p230 = scmp.lt.s32.totalorder %s16, 1
      %s231 = scalar_select %p230, %s16, 1
      %s232 = smul.addr %s231, 3
      %s233 = smul.addr %s232, 8
      %s234 = scalar_lea.vmem %s3, %s233
      %p235 = scmp.lt.s32.totalorder %s16, 1
      %s236 = scalar_select %p235, %s16, 1
      %s237 = smul.addr %s236, 3
      %s238 = smul.addr %s237, 8
      %s239 = scalar_lea.vmem %s4, %s238
      %p240 = scmp.lt.s32.totalorder %s16, 1
      %s241 = scalar_select %p240, %s16, 1
      %s242 = smul.addr %s241, 3
      %s243 = smul.addr %s242, 8
      %s244 = scalar_lea.vmem %s5, %s243
      %v246 = vld [vmem:[%s234] sm:$0xff]
      %v247 = vld [vmem:[%s234 + $0x8] sm:$0xff]
      %v248 = vld [vmem:[%s234 + $0x10] sm:$0xff]
      %249 = vrot.lane.b32.xlu0 %v246, 19
      %v250 = vpop.permute.xlu0 %249
      %251 = vrot.lane.b32.xlu0 %v247, 19
      %v252 = vpop.permute.xlu0 %251
      %253 = vrot.lane.b32.xlu0 %v248, 19
      %v254 = vpop.permute.xlu0 %253
      %v255 = vlaneseq
      %v256 = vand.u32 %v255, 127
      %vm257 = vcmp.lt.s32.totalorder %v256, 19
      %v258 = vsel %vm257, %v252, %v254
      %v259 = vsel %vm257, %v250, %v252
      %v260 = vsel %vm257, %v254, %v250
      %v261 = vld [vmem:[%s0] sm:$0xf]
      %v262 = vld [vmem:[%s0 + $0x4] sm:$0xf]
      %v263 = vld [vmem:[%s0 + $0x8] sm:$0xf]
      %v264 = vld [vmem:[%s0 + $0xc] sm:$0xf]
      %v265 = vld [vmem:[%s0 + $0x10] sm:$0xf]
      %v266 = vld [vmem:[%s0 + $0x14] sm:$0xf]
      %v267 = vld [vmem:[%s0 + $0x18] sm:$0xf]
      %v268 = vld [vmem:[%s0 + $0x1c] sm:$0xf]
      %v269 = vld [vmem:[%s0 + $0x20] sm:$0xf]
      %v270 = vld [vmem:[%s0 + $0x24] sm:$0xf]
      %v271 = vld [vmem:[%s0 + $0x28] sm:$0xf]
      %v272 = vld [vmem:[%s0 + $0x2c] sm:$0xf]
      %v273 = vld [vmem:[%s0 + $0x30] sm:$0xf]
      %v274 = vld [vmem:[%s0 + $0x34] sm:$0xf]
      %v275 = vld [vmem:[%s0 + $0x38] sm:$0xf]
      %v276 = vld [vmem:[%s0 + $0x3c] sm:$0xf]
      %v277 = vpack.c.bf16 %v260, %v260
      %v278 = vpack.c.bf16 %v259, %v259
      %v279 = vpack.c.bf16 %v258, %v258
      %280 = vrot.lane.b32.xlu0 %v246, 18
      %v281 = vpop.permute.xlu0 %280
      %282 = vrot.lane.b32.xlu0 %v247, 18
      %v283 = vpop.permute.xlu0 %282
      %284 = vrot.lane.b32.xlu0 %v248, 18
      %v285 = vpop.permute.xlu0 %284
      %vm286 = vcmp.lt.s32.totalorder %v256, 18
      %v287 = vsel %vm286, %v283, %v285
      %v288 = vsel %vm286, %v281, %v283
      %v289 = vsel %vm286, %v285, %v281
      %s290 = scalar_lea.vmem %s0, 64
      %v291 = vld [vmem:[%s290] sm:$0xf]
      %v292 = vld [vmem:[%s290 + $0x4] sm:$0xf]
      %v293 = vld [vmem:[%s290 + $0x8] sm:$0xf]
      %v294 = vld [vmem:[%s290 + $0xc] sm:$0xf]
      %v295 = vld [vmem:[%s290 + $0x10] sm:$0xf]
      %v296 = vld [vmem:[%s290 + $0x14] sm:$0xf]
      %v297 = vld [vmem:[%s290 + $0x18] sm:$0xf]
      %v298 = vld [vmem:[%s290 + $0x1c] sm:$0xf]
      %v299 = vld [vmem:[%s290 + $0x20] sm:$0xf]
      %v300 = vld [vmem:[%s290 + $0x24] sm:$0xf]
      %v301 = vld [vmem:[%s290 + $0x28] sm:$0xf]
      %v302 = vld [vmem:[%s290 + $0x2c] sm:$0xf]
      %v303 = vld [vmem:[%s290 + $0x30] sm:$0xf]
      %v304 = vld [vmem:[%s290 + $0x34] sm:$0xf]
      %v305 = vld [vmem:[%s290 + $0x38] sm:$0xf]
      %v306 = vld [vmem:[%s290 + $0x3c] sm:$0xf]
      %v307 = vpack.c.bf16 %v289, %v289
      %v308 = vpack.c.bf16 %v288, %v288
      %v309 = vpack.c.bf16 %v287, %v287
      %v326 = vunpack.c.l.b16 %v291
      %v327 = vunpack.c.l.b16 %v292
      %v328 = vunpack.c.l.b16 %v293
      %v329 = vunpack.c.l.b16 %v294
      %v330 = vunpack.c.l.b16 %v295
      %v331 = vunpack.c.l.b16 %v296
      %v332 = vunpack.c.l.b16 %v297
      %v333 = vunpack.c.l.b16 %v298
      %v334 = vunpack.c.l.b16 %v299
      %v335 = vunpack.c.l.b16 %v300
      %v336 = vunpack.c.l.b16 %v301
      %v337 = vunpack.c.l.b16 %v302
      %v338 = vunpack.c.l.b16 %v303
      %v339 = vunpack.c.l.b16 %v304
      %v340 = vunpack.c.l.b16 %v305
      %v341 = vunpack.c.l.b16 %v306
      %v342 = vpack.c.b16 %v327, %v326
      %v343 = vpack.c.b16 %v329, %v328
      %v344 = vpack.c.b16 %v331, %v330
      %v345 = vpack.c.b16 %v333, %v332
      %v346 = vpack.c.b16 %v335, %v334
      %v347 = vpack.c.b16 %v337, %v336
      %v348 = vpack.c.b16 %v339, %v338
      %v349 = vpack.c.b16 %v341, %v340
      %vm350 = vcmask 64512
      %v352 = vsel %vm350, %v342, 0
      %v355 = vsel %vm350, %v343, 0
      %v358 = vsel %vm350, %v344, 0
      %v361 = vsel %vm350, %v345, 0
      %v364 = vsel %vm350, %v346, 0
      %v367 = vsel %vm350, %v347, 0
      %v370 = vsel %vm350, %v348, 0
      %v373 = vsel %vm350, %v349, 0
      %vm375 = vcmask 1043456
      %v377 = vsel %vm375, %v307, 0
      %v380 = vsel %vm375, %v308, 0
      %v383 = vsel %vm375, %v309, 0
      %385 = vmatprep.subr.bf16.mxu0 %v380
      %386 = vmatpush1.bf16.msra.mxu0 %v377
      %387 = vmatprep.subr.bf16.mxu0 0
      %388 = vmatpush1.bf16.msra.mxu0 0
      %389 = vmatprep.subr.bf16.mxu0 0
      %390 = vmatpush1.bf16.msra.mxu0 0
      %391 = vmatprep.subr.bf16.mxu0 0
      %392 = vmatpush1.bf16.msra.mxu0 0
      %393 = vmatprep.subr.bf16.mxu0 0
      %394 = vmatpush1.bf16.msra.mxu0 0
      %395 = vmatprep.subr.bf16.mxu0 0
      %396 = vmatpush1.bf16.msra.mxu0 0
      %397 = vmatprep.subr.bf16.mxu0 0
      %398 = vmatpush1.bf16.msra.mxu0 0
      %399 = vmatprep.subr.bf16.mxu0 0
      %400 = vmatpush1.bf16.msra.mxu0 0
      %401 = vmatprep.subr.bf16.mxu0 0
      %402 = vmatpush1.bf16.msra.mxu0 0
      %403 = vmatprep.subr.bf16.mxu0 0
      %404 = vmatpush1.bf16.msra.mxu0 0
      %405 = vmatprep.subr.bf16.mxu0 0
      %406 = vmatpush1.bf16.msra.mxu0 0
      %407 = vmatprep.subr.bf16.mxu0 0
      %408 = vmatpush1.bf16.msra.mxu0 0
      %409 = vmatprep.subr.bf16.mxu0 0
      %410 = vmatpush1.bf16.msra.mxu0 0
      %411 = vmatprep.subr.bf16.mxu0 0
      %412 = vmatpush1.bf16.msra.mxu0 0
      %413 = vmatprep.subr.bf16.mxu0 0
      %414 = vmatpush1.bf16.msra.mxu0 0
      %415 = vmatprep.subr.bf16.mxu0 0
      %416 = vmatpush1.bf16.msra.mxu0 0
      %417 = vmatprep.mubr.bf16.mxu0 0
      %418 = vmatmul.mubr.bf16.gmra.mrb[0].mxu0 %v352
      %v419 = vpop.f32.mrb[0].mxu0
      %v420 = vadd.f32 0.0, %v419
      %v421 = vpop.f32.mrb[0].mxu0
      %v422 = vadd.f32 0.0, %v421
      %v423 = vpop.f32.mrb[0].mxu0
      %v424 = vadd.f32 0.0, %v423
      %v425 = vpop.f32.mrb[0].mxu0
      %v426 = vadd.f32 0.0, %v425
      %427 = vmatprep.mubr.bf16.mxu0 0
      %428 = vmatmul.mubr.bf16.gmra.mrb[0].mxu0 %v355
      %v429 = vpop.f32.mrb[0].mxu0
      %v430 = vadd.f32 0.0, %v429
      %v431 = vpop.f32.mrb[0].mxu0
      %v432 = vadd.f32 0.0, %v431
      %v433 = vpop.f32.mrb[0].mxu0
      %v434 = vadd.f32 0.0, %v433
      %v435 = vpop.f32.mrb[0].mxu0
      %v436 = vadd.f32 0.0, %v435
      %437 = vmatprep.mubr.bf16.mxu0 0
      %438 = vmatmul.mubr.bf16.gmra.mrb[0].mxu0 %v358
      %v439 = vpop.f32.mrb[0].mxu0
      %v440 = vadd.f32 0.0, %v439
      %v441 = vpop.f32.mrb[0].mxu0
      %v442 = vadd.f32 0.0, %v441
      %v443 = vpop.f32.mrb[0].mxu0
      %v444 = vadd.f32 0.0, %v443
      %v445 = vpop.f32.mrb[0].mxu0
      %v446 = vadd.f32 0.0, %v445
      %447 = vmatprep.mubr.bf16.mxu0 0
      %448 = vmatmul.mubr.bf16.gmra.mrb[0].mxu0 %v361
      %v449 = vpop.f32.mrb[0].mxu0
      %v450 = vadd.f32 0.0, %v449
      %v451 = vpop.f32.mrb[0].mxu0
      %v452 = vadd.f32 0.0, %v451
      %v453 = vpop.f32.mrb[0].mxu0
      %v454 = vadd.f32 0.0, %v453
      %v455 = vpop.f32.mrb[0].mxu0
      %v456 = vadd.f32 0.0, %v455
      %457 = vmatprep.mubr.bf16.mxu0 0
      %458 = vmatmul.mubr.bf16.gmra.mrb[0].mxu0 %v364
      %v459 = vpop.f32.mrb[0].mxu0
      %v460 = vadd.f32 0.0, %v459
      %v461 = vpop.f32.mrb[0].mxu0
      %v462 = vadd.f32 0.0, %v461
      %v463 = vpop.f32.mrb[0].mxu0
      %v464 = vadd.f32 0.0, %v463
      %v465 = vpop.f32.mrb[0].mxu0
      %v466 = vadd.f32 0.0, %v465
      %467 = vmatprep.mubr.bf16.mxu0 0
      %468 = vmatmul.mubr.bf16.gmra.mrb[0].mxu0 %v367
      %v469 = vpop.f32.mrb[0].mxu0
      %v470 = vadd.f32 0.0, %v469
      %v471 = vpop.f32.mrb[0].mxu0
      %v472 = vadd.f32 0.0, %v471
      %v473 = vpop.f32.mrb[0].mxu0
      %v474 = vadd.f32 0.0, %v473
      %v475 = vpop.f32.mrb[0].mxu0
      %v476 = vadd.f32 0.0, %v475
      %477 = vmatprep.mubr.bf16.mxu0 0
      %478 = vmatmul.mubr.bf16.gmra.mrb[0].mxu0 %v370
      %v479 = vpop.f32.mrb[0].mxu0
      %v480 = vadd.f32 0.0, %v479
      %v481 = vpop.f32.mrb[0].mxu0
      %v482 = vadd.f32 0.0, %v481
      %v483 = vpop.f32.mrb[0].mxu0
      %v484 = vadd.f32 0.0, %v483
      %v485 = vpop.f32.mrb[0].mxu0
      %v486 = vadd.f32 0.0, %v485
      %487 = vmatprep.mubr.bf16.mxu0 0
      %488 = vmatmul.mubr.bf16.gmra.mrb[0].mxu0 %v373
      %v489 = vpop.f32.mrb[0].mxu0
      %v490 = vadd.f32 0.0, %v489
      %v491 = vpop.f32.mrb[0].mxu0
      %v492 = vadd.f32 0.0, %v491
      %v493 = vpop.f32.mrb[0].mxu0
      %v494 = vadd.f32 0.0, %v493
      %v495 = vpop.f32.mrb[0].mxu0
      %v496 = vadd.f32 0.0, %v495
      %497 = vdwg.mxu0
      %498 = vmatprep.subr.bf16.mxu0 0
      %499 = vmatpush1.bf16.msra.mxu0 %v383
      %500 = vmatprep.subr.bf16.mxu0 0
      %501 = vmatpush1.bf16.msra.mxu0 0
      %502 = vmatprep.subr.bf16.mxu0 0
      %503 = vmatpush1.bf16.msra.mxu0 0
      %504 = vmatprep.subr.bf16.mxu0 0
      %505 = vmatpush1.bf16.msra.mxu0 0
      %506 = vmatprep.subr.bf16.mxu0 0
      %507 = vmatpush1.bf16.msra.mxu0 0
      %508 = vmatprep.subr.bf16.mxu0 0
      %509 = vmatpush1.bf16.msra.mxu0 0
      %510 = vmatprep.subr.bf16.mxu0 0
      %511 = vmatpush1.bf16.msra.mxu0 0
      %512 = vmatprep.subr.bf16.mxu0 0
      %513 = vmatpush1.bf16.msra.mxu0 0
      %514 = vmatprep.subr.bf16.mxu0 0
      %515 = vmatpush1.bf16.msra.mxu0 0
      %516 = vmatprep.subr.bf16.mxu0 0
      %517 = vmatpush1.bf16.msra.mxu0 0
      %518 = vmatprep.subr.bf16.mxu0 0
      %519 = vmatpush1.bf16.msra.mxu0 0
      %520 = vmatprep.subr.bf16.mxu0 0
      %521 = vmatpush1.bf16.msra.mxu0 0
      %522 = vmatprep.subr.bf16.mxu0 0
      %523 = vmatpush1.bf16.msra.mxu0 0
      %524 = vmatprep.subr.bf16.mxu0 0
      %525 = vmatpush1.bf16.msra.mxu0 0
      %526 = vmatprep.subr.bf16.mxu0 0
      %527 = vmatpush1.bf16.msra.mxu0 0
      %528 = vmatprep.subr.bf16.mxu0 0
      %529 = vmatpush1.bf16.msra.mxu0 0
      %530 = vmatprep.mubr.bf16.mxu0 0
      %531 = vmatmul.mubr.bf16.gmra.mrb[0].mxu0 %v352
      %v532 = vpop.f32.mrb[0].mxu0
      %v533 = vadd.f32 0.0, %v532
      %v534 = vpop.f32.mrb[0].mxu0
      %v535 = vpop.f32.mrb[0].mxu0
      %v536 = vadd.f32 0.0, %v535
      %v537 = vpop.f32.mrb[0].mxu0
      %538 = vmatprep.mubr.bf16.mxu0 0
      %539 = vmatmul.mubr.bf16.gmra.mrb[0].mxu0 %v355
      %v540 = vpop.f32.mrb[0].mxu0
      %v541 = vadd.f32 0.0, %v540
      %v542 = vpop.f32.mrb[0].mxu0
      %v543 = vpop.f32.mrb[0].mxu0
      %v544 = vadd.f32 0.0, %v543
      %v545 = vpop.f32.mrb[0].mxu0
      %546 = vmatprep.mubr.bf16.mxu0 0
      %547 = vmatmul.mubr.bf16.gmra.mrb[0].mxu0 %v358
      %v548 = vpop.f32.mrb[0].mxu0
      %v549 = vadd.f32 0.0, %v548
      %v550 = vpop.f32.mrb[0].mxu0
      %v551 = vpop.f32.mrb[0].mxu0
      %v552 = vadd.f32 0.0, %v551
      %v553 = vpop.f32.mrb[0].mxu0
      %554 = vmatprep.mubr.bf16.mxu0 0
      %555 = vmatmul.mubr.bf16.gmra.mrb[0].mxu0 %v361
      %v556 = vpop.f32.mrb[0].mxu0
      %v557 = vadd.f32 0.0, %v556
      %v558 = vpop.f32.mrb[0].mxu0
      %v559 = vpop.f32.mrb[0].mxu0
      %v560 = vadd.f32 0.0, %v559
      %v561 = vpop.f32.mrb[0].mxu0
      %562 = vmatprep.mubr.bf16.mxu0 0
      %563 = vmatmul.mubr.bf16.gmra.mrb[0].mxu0 %v364
      %v564 = vpop.f32.mrb[0].mxu0
      %v565 = vadd.f32 0.0, %v564
      %v566 = vpop.f32.mrb[0].mxu0
      %v567 = vpop.f32.mrb[0].mxu0
      %v568 = vadd.f32 0.0, %v567
      %v569 = vpop.f32.mrb[0].mxu0
      %570 = vmatprep.mubr.bf16.mxu0 0
      %571 = vmatmul.mubr.bf16.gmra.mrb[0].mxu0 %v367
      %v572 = vpop.f32.mrb[0].mxu0
      %v573 = vadd.f32 0.0, %v572
      %v574 = vpop.f32.mrb[0].mxu0
      %v575 = vpop.f32.mrb[0].mxu0
      %v576 = vadd.f32 0.0, %v575
      %v577 = vpop.f32.mrb[0].mxu0
      %578 = vmatprep.mubr.bf16.mxu0 0
      %579 = vmatmul.mubr.bf16.gmra.mrb[0].mxu0 %v370
      %v580 = vpop.f32.mrb[0].mxu0
      %v581 = vadd.f32 0.0, %v580
      %v582 = vpop.f32.mrb[0].mxu0
      %v583 = vpop.f32.mrb[0].mxu0
      %v584 = vadd.f32 0.0, %v583
      %v585 = vpop.f32.mrb[0].mxu0
      %586 = vmatprep.mubr.bf16.mxu0 0
      %587 = vmatmul.mubr.bf16.gmra.mrb[0].mxu0 %v373
      %v588 = vpop.f32.mrb[0].mxu0
      %v589 = vadd.f32 0.0, %v588
      %v590 = vpop.f32.mrb[0].mxu0
      %v591 = vpop.f32.mrb[0].mxu0
      %v592 = vadd.f32 0.0, %v591
      %v593 = vpop.f32.mrb[0].mxu0
      %594 = vdwg.mxu0
      %v611 = vunpack.c.l.b16 %v261
      %v612 = vunpack.c.l.b16 %v262
      %v613 = vunpack.c.l.b16 %v263
      %v614 = vunpack.c.l.b16 %v264
      %v615 = vunpack.c.l.b16 %v265
      %v616 = vunpack.c.l.b16 %v266
      %v617 = vunpack.c.l.b16 %v267
      %v618 = vunpack.c.l.b16 %v268
      %v619 = vunpack.c.l.b16 %v269
      %v620 = vunpack.c.l.b16 %v270
      %v621 = vunpack.c.l.b16 %v271
      %v622 = vunpack.c.l.b16 %v272
      %v623 = vunpack.c.l.b16 %v273
      %v624 = vunpack.c.l.b16 %v274
      %v625 = vunpack.c.l.b16 %v275
      %v626 = vunpack.c.l.b16 %v276
      %v627 = vpack.c.b16 %v612, %v611
      %v628 = vpack.c.b16 %v614, %v613
      %v629 = vpack.c.b16 %v616, %v615
      %v630 = vpack.c.b16 %v618, %v617
      %v631 = vpack.c.b16 %v620, %v619
      %v632 = vpack.c.b16 %v622, %v621
      %v633 = vpack.c.b16 %v624, %v623
      %v634 = vpack.c.b16 %v626, %v625
      %v636 = vsel %vm350, %v627, 0
      %v639 = vsel %vm350, %v628, 0
      %v642 = vsel %vm350, %v629, 0
      %v645 = vsel %vm350, %v630, 0
      %v648 = vsel %vm350, %v631, 0
      %v651 = vsel %vm350, %v632, 0
      %v654 = vsel %vm350, %v633, 0
      %v657 = vsel %vm350, %v634, 0
      %v660 = vsel %vm375, %v277, 0
      %v663 = vsel %vm375, %v278, 0
      %v666 = vsel %vm375, %v279, 0
      %668 = vmatprep.subr.bf16.mxu0 %v663
      %669 = vmatpush1.bf16.msra.mxu0 %v660
      %670 = vmatprep.subr.bf16.mxu0 0
      %671 = vmatpush1.bf16.msra.mxu0 0
      %672 = vmatprep.subr.bf16.mxu0 0
      %673 = vmatpush1.bf16.msra.mxu0 0
      %674 = vmatprep.subr.bf16.mxu0 0
      %675 = vmatpush1.bf16.msra.mxu0 0
      %676 = vmatprep.subr.bf16.mxu0 0
      %677 = vmatpush1.bf16.msra.mxu0 0
      %678 = vmatprep.subr.bf16.mxu0 0
      %679 = vmatpush1.bf16.msra.mxu0 0
      %680 = vmatprep.subr.bf16.mxu0 0
      %681 = vmatpush1.bf16.msra.mxu0 0
      %682 = vmatprep.subr.bf16.mxu0 0
      %683 = vmatpush1.bf16.msra.mxu0 0
      %684 = vmatprep.subr.bf16.mxu0 0
      %685 = vmatpush1.bf16.msra.mxu0 0
      %686 = vmatprep.subr.bf16.mxu0 0
      %687 = vmatpush1.bf16.msra.mxu0 0
      %688 = vmatprep.subr.bf16.mxu0 0
      %689 = vmatpush1.bf16.msra.mxu0 0
      %690 = vmatprep.subr.bf16.mxu0 0
      %691 = vmatpush1.bf16.msra.mxu0 0
      %692 = vmatprep.subr.bf16.mxu0 0
      %693 = vmatpush1.bf16.msra.mxu0 0
      %694 = vmatprep.subr.bf16.mxu0 0
      %695 = vmatpush1.bf16.msra.mxu0 0
      %696 = vmatprep.subr.bf16.mxu0 0
      %697 = vmatpush1.bf16.msra.mxu0 0
      %698 = vmatprep.subr.bf16.mxu0 0
      %699 = vmatpush1.bf16.msra.mxu0 0
      %700 = vmatprep.mubr.bf16.mxu0 0
      %701 = vmatmul.mubr.bf16.gmra.mrb[0].mxu0 %v636
      %v702 = vpop.f32.mrb[0].mxu0
      %v703 = vadd.f32 %v420, %v702
      %v704 = vpop.f32.mrb[0].mxu0
      %v705 = vadd.f32 %v422, %v704
      %v706 = vpop.f32.mrb[0].mxu0
      %v707 = vadd.f32 %v424, %v706
      %v708 = vpop.f32.mrb[0].mxu0
      %v709 = vadd.f32 %v426, %v708
      %710 = vmatprep.mubr.bf16.mxu0 0
      %711 = vmatmul.mubr.bf16.gmra.mrb[0].mxu0 %v639
      %v712 = vpop.f32.mrb[0].mxu0
      %v713 = vadd.f32 %v430, %v712
      %v714 = vpop.f32.mrb[0].mxu0
      %v715 = vadd.f32 %v432, %v714
      %v716 = vpop.f32.mrb[0].mxu0
      %v717 = vadd.f32 %v434, %v716
      %v718 = vpop.f32.mrb[0].mxu0
      %v719 = vadd.f32 %v436, %v718
      %720 = vmatprep.mubr.bf16.mxu0 0
      %721 = vmatmul.mubr.bf16.gmra.mrb[0].mxu0 %v642
      %v722 = vpop.f32.mrb[0].mxu0
      %v723 = vadd.f32 %v440, %v722
      %v724 = vpop.f32.mrb[0].mxu0
      %v725 = vadd.f32 %v442, %v724
      %v726 = vpop.f32.mrb[0].mxu0
      %v727 = vadd.f32 %v444, %v726
      %v728 = vpop.f32.mrb[0].mxu0
      %v729 = vadd.f32 %v446, %v728
      %730 = vmatprep.mubr.bf16.mxu0 0
      %731 = vmatmul.mubr.bf16.gmra.mrb[0].mxu0 %v645
      %v732 = vpop.f32.mrb[0].mxu0
      %v733 = vadd.f32 %v450, %v732
      %v734 = vpop.f32.mrb[0].mxu0
      %v735 = vadd.f32 %v452, %v734
      %v736 = vpop.f32.mrb[0].mxu0
      %v737 = vadd.f32 %v454, %v736
      %v738 = vpop.f32.mrb[0].mxu0
      %v739 = vadd.f32 %v456, %v738
      %740 = vmatprep.mubr.bf16.mxu0 0
      %741 = vmatmul.mubr.bf16.gmra.mrb[0].mxu0 %v648
      %v742 = vpop.f32.mrb[0].mxu0
      %v743 = vadd.f32 %v460, %v742
      %v744 = vpop.f32.mrb[0].mxu0
      %v745 = vadd.f32 %v462, %v744
      %v746 = vpop.f32.mrb[0].mxu0
      %v747 = vadd.f32 %v464, %v746
      %v748 = vpop.f32.mrb[0].mxu0
      %v749 = vadd.f32 %v466, %v748
      %750 = vmatprep.mubr.bf16.mxu0 0
      %751 = vmatmul.mubr.bf16.gmra.mrb[0].mxu0 %v651
      %v752 = vpop.f32.mrb[0].mxu0
      %v753 = vadd.f32 %v470, %v752
      %v754 = vpop.f32.mrb[0].mxu0
      %v755 = vadd.f32 %v472, %v754
      %v756 = vpop.f32.mrb[0].mxu0
      %v757 = vadd.f32 %v474, %v756
      %v758 = vpop.f32.mrb[0].mxu0
      %v759 = vadd.f32 %v476, %v758
      %760 = vmatprep.mubr.bf16.mxu0 0
      %761 = vmatmul.mubr.bf16.gmra.mrb[0].mxu0 %v654
      %v762 = vpop.f32.mrb[0].mxu0
      %v763 = vadd.f32 %v480, %v762
      %v764 = vpop.f32.mrb[0].mxu0
      %v765 = vadd.f32 %v482, %v764
      %v766 = vpop.f32.mrb[0].mxu0
      %v767 = vadd.f32 %v484, %v766
      %v768 = vpop.f32.mrb[0].mxu0
      %v769 = vadd.f32 %v486, %v768
      %770 = vmatprep.mubr.bf16.mxu0 0
      %771 = vmatmul.mubr.bf16.gmra.mrb[0].mxu0 %v657
      %v772 = vpop.f32.mrb[0].mxu0
      %v773 = vadd.f32 %v490, %v772
      %v774 = vpop.f32.mrb[0].mxu0
      %v775 = vadd.f32 %v492, %v774
      %v776 = vpop.f32.mrb[0].mxu0
      %v777 = vadd.f32 %v494, %v776
      %v778 = vpop.f32.mrb[0].mxu0
      %v779 = vadd.f32 %v496, %v778
      %780 = vdwg.mxu0
      %781 = vmatprep.subr.bf16.mxu0 0
      %782 = vmatpush1.bf16.msra.mxu0 %v666
      %783 = vmatprep.subr.bf16.mxu0 0
      %784 = vmatpush1.bf16.msra.mxu0 0
      %785 = vmatprep.subr.bf16.mxu0 0
      %786 = vmatpush1.bf16.msra.mxu0 0
      %787 = vmatprep.subr.bf16.mxu0 0
      %788 = vmatpush1.bf16.msra.mxu0 0
      %789 = vmatprep.subr.bf16.mxu0 0
      %790 = vmatpush1.bf16.msra.mxu0 0
      %791 = vmatprep.subr.bf16.mxu0 0
      %792 = vmatpush1.bf16.msra.mxu0 0
      %793 = vmatprep.subr.bf16.mxu0 0
      %794 = vmatpush1.bf16.msra.mxu0 0
      %795 = vmatprep.subr.bf16.mxu0 0
      %796 = vmatpush1.bf16.msra.mxu0 0
      %797 = vmatprep.subr.bf16.mxu0 0
      %798 = vmatpush1.bf16.msra.mxu0 0
      %799 = vmatprep.subr.bf16.mxu0 0
      %800 = vmatpush1.bf16.msra.mxu0 0
      %801 = vmatprep.subr.bf16.mxu0 0
      %802 = vmatpush1.bf16.msra.mxu0 0
      %803 = vmatprep.subr.bf16.mxu0 0
      %804 = vmatpush1.bf16.msra.mxu0 0
      %805 = vmatprep.subr.bf16.mxu0 0
      %806 = vmatpush1.bf16.msra.mxu0 0
      %807 = vmatprep.subr.bf16.mxu0 0
      %808 = vmatpush1.bf16.msra.mxu0 0
      %809 = vmatprep.subr.bf16.mxu0 0
      %810 = vmatpush1.bf16.msra.mxu0 0
      %811 = vmatprep.subr.bf16.mxu0 0
      %812 = vmatpush1.bf16.msra.mxu0 0
      %813 = vmatprep.mubr.bf16.mxu0 0
      %814 = vmatmul.mubr.bf16.gmra.mrb[0].mxu0 %v636
      %v815 = vpop.f32.mrb[0].mxu0
      %v816 = vadd.f32 %v533, %v815
      %v817 = vpop.f32.mrb[0].mxu0
      %v818 = vpop.f32.mrb[0].mxu0
      %v819 = vadd.f32 %v536, %v818
      %v820 = vpop.f32.mrb[0].mxu0
      %821 = vmatprep.mubr.bf16.mxu0 0
      %822 = vmatmul.mubr.bf16.gmra.mrb[0].mxu0 %v639
      %v823 = vpop.f32.mrb[0].mxu0
      %v824 = vadd.f32 %v541, %v823
      %v825 = vpop.f32.mrb[0].mxu0
      %v826 = vpop.f32.mrb[0].mxu0
      %v827 = vadd.f32 %v544, %v826
      %v828 = vpop.f32.mrb[0].mxu0
      %829 = vmatprep.mubr.bf16.mxu0 0
      %830 = vmatmul.mubr.bf16.gmra.mrb[0].mxu0 %v642
      %v831 = vpop.f32.mrb[0].mxu0
      %v832 = vadd.f32 %v549, %v831
      %v833 = vpop.f32.mrb[0].mxu0
      %v834 = vpop.f32.mrb[0].mxu0
      %v835 = vadd.f32 %v552, %v834
      %v836 = vpop.f32.mrb[0].mxu0
      %837 = vmatprep.mubr.bf16.mxu0 0
      %838 = vmatmul.mubr.bf16.gmra.mrb[0].mxu0 %v645
      %v839 = vpop.f32.mrb[0].mxu0
      %v840 = vadd.f32 %v557, %v839
      %v841 = vpop.f32.mrb[0].mxu0
      %v842 = vpop.f32.mrb[0].mxu0
      %v843 = vadd.f32 %v560, %v842
      %v844 = vpop.f32.mrb[0].mxu0
      %845 = vmatprep.mubr.bf16.mxu0 0
      %846 = vmatmul.mubr.bf16.gmra.mrb[0].mxu0 %v648
      %v847 = vpop.f32.mrb[0].mxu0
      %v848 = vadd.f32 %v565, %v847
      %v849 = vpop.f32.mrb[0].mxu0
      %v850 = vpop.f32.mrb[0].mxu0
      %v851 = vadd.f32 %v568, %v850
      %v852 = vpop.f32.mrb[0].mxu0
      %853 = vmatprep.mubr.bf16.mxu0 0
      %854 = vmatmul.mubr.bf16.gmra.mrb[0].mxu0 %v651
      %v855 = vpop.f32.mrb[0].mxu0
      %v856 = vadd.f32 %v573, %v855
      %v857 = vpop.f32.mrb[0].mxu0
      %v858 = vpop.f32.mrb[0].mxu0
      %v859 = vadd.f32 %v576, %v858
      %v860 = vpop.f32.mrb[0].mxu0
      %861 = vmatprep.mubr.bf16.mxu0 0
      %862 = vmatmul.mubr.bf16.gmra.mrb[0].mxu0 %v654
      %v863 = vpop.f32.mrb[0].mxu0
      %v864 = vadd.f32 %v581, %v863
      %v865 = vpop.f32.mrb[0].mxu0
      %v866 = vpop.f32.mrb[0].mxu0
      %v867 = vadd.f32 %v584, %v866
      %v868 = vpop.f32.mrb[0].mxu0
      %869 = vmatprep.mubr.bf16.mxu0 0
      %870 = vmatmul.mubr.bf16.gmra.mrb[0].mxu0 %v657
      %v871 = vpop.f32.mrb[0].mxu0
      %v872 = vadd.f32 %v589, %v871
      %v873 = vpop.f32.mrb[0].mxu0
      %v874 = vpop.f32.mrb[0].mxu0
      %v875 = vadd.f32 %v592, %v874
      %v876 = vpop.f32.mrb[0].mxu0
      %877 = vdwg.mxu0
      %878 = vrot.lane.b32.xlu0 %v246, 17
      %v879 = vpop.permute.xlu0 %878
      %880 = vrot.lane.b32.xlu0 %v247, 17
      %v881 = vpop.permute.xlu0 %880
      %882 = vrot.lane.b32.xlu0 %v248, 17
      %v883 = vpop.permute.xlu0 %882
      %vm884 = vcmp.lt.s32.totalorder %v256, 17
      %v885 = vsel %vm884, %v881, %v883
      %v886 = vsel %vm884, %v879, %v881
      %v887 = vsel %vm884, %v883, %v879
      %s888 = scalar_lea.vmem %s0, 128
      %v889 = vld [vmem:[%s888] sm:$0xf]
      %v890 = vld [vmem:[%s888 + $0x4] sm:$0xf]
      %v891 = vld [vmem:[%s888 + $0x8] sm:$0xf]
      %v892 = vld [vmem:[%s888 + $0xc] sm:$0xf]
      %v893 = vld [vmem:[%s888 + $0x10] sm:$0xf]
      %v894 = vld [vmem:[%s888 + $0x14] sm:$0xf]
      %v895 = vld [vmem:[%s888 + $0x18] sm:$0xf]
      %v896 = vld [vmem:[%s888 + $0x1c] sm:$0xf]
      %v897 = vld [vmem:[%s888 + $0x20] sm:$0xf]
      %v898 = vld [vmem:[%s888 + $0x24] sm:$0xf]
      %v899 = vld [vmem:[%s888 + $0x28] sm:$0xf]
      %v900 = vld [vmem:[%s888 + $0x2c] sm:$0xf]
      %v901 = vld [vmem:[%s888 + $0x30] sm:$0xf]
      %v902 = vld [vmem:[%s888 + $0x34] sm:$0xf]
      %v903 = vld [vmem:[%s888 + $0x38] sm:$0xf]
      %v904 = vld [vmem:[%s888 + $0x3c] sm:$0xf]
      %v905 = vpack.c.bf16 %v887, %v887
      %v906 = vpack.c.bf16 %v886, %v886
      %v907 = vpack.c.bf16 %v885, %v885
      %v924 = vunpack.c.l.b16 %v889
      %v925 = vunpack.c.l.b16 %v890
      %v926 = vunpack.c.l.b16 %v891
      %v927 = vunpack.c.l.b16 %v892
      %v928 = vunpack.c.l.b16 %v893
      %v929 = vunpack.c.l.b16 %v894
      %v930 = vunpack.c.l.b16 %v895
      %v931 = vunpack.c.l.b16 %v896
      %v932 = vunpack.c.l.b16 %v897
      %v933 = vunpack.c.l.b16 %v898
      %v934 = vunpack.c.l.b16 %v899
      %v935 = vunpack.c.l.b16 %v900
      %v936 = vunpack.c.l.b16 %v901
      %v937 = vunpack.c.l.b16 %v902
      %v938 = vunpack.c.l.b16 %v903
      %v939 = vunpack.c.l.b16 %v904
      %v940 = vpack.c.b16 %v925, %v924
      %v941 = vpack.c.b16 %v927, %v926
      %v942 = vpack.c.b16 %v929, %v928
      %v943 = vpack.c.b16 %v931, %v930
      %v944 = vpack.c.b16 %v933, %v932
      %v945 = vpack.c.b16 %v935, %v934
      %v946 = vpack.c.b16 %v937, %v936
      %v947 = vpack.c.b16 %v939, %v938
      %v949 = vsel %vm350, %v940, 0
      %v952 = vsel %vm350, %v941, 0
      %v955 = vsel %vm350, %v942, 0
      %v958 = vsel %vm350, %v943, 0
      %v961 = vsel %vm350, %v944, 0
      %v964 = vsel %vm350, %v945, 0
      %v967 = vsel %vm350, %v946, 0
      %v970 = vsel %vm350, %v947, 0
      %v973 = vsel %vm375, %v905, 0
      %v976 = vsel %vm375, %v906, 0
      %v979 = vsel %vm375, %v907, 0
      %981 = vmatprep.subr.bf16.mxu0 %v976
      %982 = vmatpush1.bf16.msra.mxu0 %v973
      %983 = vmatprep.subr.bf16.mxu0 0
      %984 = vmatpush1.bf16.msra.mxu0 0
      %985 = vmatprep.subr.bf16.mxu0 0
      %986 = vmatpush1.bf16.msra.mxu0 0
      %987 = vmatprep.subr.bf16.mxu0 0
      %988 = vmatpush1.bf16.msra.mxu0 0
      %989 = vmatprep.subr.bf16.mxu0 0
      %990 = vmatpush1.bf16.msra.mxu0 0
      %991 = vmatprep.subr.bf16.mxu0 0
      %992 = vmatpush1.bf16.msra.mxu0 0
      %993 = vmatprep.subr.bf16.mxu0 0
      %994 = vmatpush1.bf16.msra.mxu0 0
      %995 = vmatprep.subr.bf16.mxu0 0
      %996 = vmatpush1.bf16.msra.mxu0 0
      %997 = vmatprep.subr.bf16.mxu0 0
      %998 = vmatpush1.bf16.msra.mxu0 0
      %999 = vmatprep.subr.bf16.mxu0 0
      %1000 = vmatpush1.bf16.msra.mxu0 0
      %1001 = vmatprep.subr.bf16.mxu0 0
      %1002 = vmatpush1.bf16.msra.mxu0 0
      %1003 = vmatprep.subr.bf16.mxu0 0
      %1004 = vmatpush1.bf16.msra.mxu0 0
      %1005 = vmatprep.subr.bf16.mxu0 0
      %1006 = vmatpush1.bf16.msra.mxu0 0
      %1007 = vmatprep.subr.bf16.mxu0 0
      %1008 = vmatpush1.bf16.msra.mxu0 0
      %1009 = vmatprep.subr.bf16.mxu0 0
      %1010 = vmatpush1.bf16.msra.mxu0 0
      %1011 = vmatprep.subr.bf16.mxu0 0
      %1012 = vmatpush1.bf16.msra.mxu0 0
      %1013 = vmatprep.mubr.bf16.mxu0 0
      %1014 = vmatmul.mubr.bf16.gmra.mrb[0].mxu0 %v949
      %v1015 = vpop.f32.mrb[0].mxu0
      %v1016 = vadd.f32 0.0, %v1015
      %v1017 = vpop.f32.mrb[0].mxu0
      %v1018 = vadd.f32 0.0, %v1017
      %v1019 = vpop.f32.mrb[0].mxu0
      %v1020 = vadd.f32 0.0, %v1019
      %v1021 = vpop.f32.mrb[0].mxu0
      %v1022 = vadd.f32 0.0, %v1021
      %1023 = vmatprep.mubr.bf16.mxu0 0
      %1024 = vmatmul.mubr.bf16.gmra.mrb[0].mxu0 %v952
      %v1025 = vpop.f32.mrb[0].mxu0
      %v1026 = vadd.f32 0.0, %v1025
      %v1027 = vpop.f32.mrb[0].mxu0
      %v1028 = vadd.f32 0.0, %v1027
      %v1029 = vpop.f32.mrb[0].mxu0
      %v1030 = vadd.f32 0.0, %v1029
      %v1031 = vpop.f32.mrb[0].mxu0
      %v1032 = vadd.f32 0.0, %v1031
      %1033 = vmatprep.mubr.bf16.mxu0 0
      %1034 = vmatmul.mubr.bf16.gmra.mrb[0].mxu0 %v955
      %v1035 = vpop.f32.mrb[0].mxu0
      %v1036 = vadd.f32 0.0, %v1035
      %v1037 = vpop.f32.mrb[0].mxu0
      %v1038 = vadd.f32 0.0, %v1037
      %v1039 = vpop.f32.mrb[0].mxu0
      %v1040 = vadd.f32 0.0, %v1039
      %v1041 = vpop.f32.mrb[0].mxu0
      %v1042 = vadd.f32 0.0, %v1041
      %1043 = vmatprep.mubr.bf16.mxu0 0
      %1044 = vmatmul.mubr.bf16.gmra.mrb[0].mxu0 %v958
      %v1045 = vpop.f32.mrb[0].mxu0
      %v1046 = vadd.f32 0.0, %v1045
      %v1047 = vpop.f32.mrb[0].mxu0
      %v1048 = vadd.f32 0.0, %v1047
      %v1049 = vpop.f32.mrb[0].mxu0
      %v1050 = vadd.f32 0.0, %v1049
      %v1051 = vpop.f32.mrb[0].mxu0
      %v1052 = vadd.f32 0.0, %v1051
      %1053 = vmatprep.mubr.bf16.mxu0 0
      %1054 = vmatmul.mubr.bf16.gmra.mrb[0].mxu0 %v961
      %v1055 = vpop.f32.mrb[0].mxu0
      %v1056 = vadd.f32 0.0, %v1055
      %v1057 = vpop.f32.mrb[0].mxu0
      %v1058 = vadd.f32 0.0, %v1057
      %v1059 = vpop.f32.mrb[0].mxu0
      %v1060 = vadd.f32 0.0, %v1059
      %v1061 = vpop.f32.mrb[0].mxu0
      %v1062 = vadd.f32 0.0, %v1061
      %1063 = vmatprep.mubr.bf16.mxu0 0
      %1064 = vmatmul.mubr.bf16.gmra.mrb[0].mxu0 %v964
      %v1065 = vpop.f32.mrb[0].mxu0
      %v1066 = vadd.f32 0.0, %v1065
      %v1067 = vpop.f32.mrb[0].mxu0
      %v1068 = vadd.f32 0.0, %v1067
      %v1069 = vpop.f32.mrb[0].mxu0
      %v1070 = vadd.f32 0.0, %v1069
      %v1071 = vpop.f32.mrb[0].mxu0
      %v1072 = vadd.f32 0.0, %v1071
      %1073 = vmatprep.mubr.bf16.mxu0 0
      %1074 = vmatmul.mubr.bf16.gmra.mrb[0].mxu0 %v967
      %v1075 = vpop.f32.mrb[0].mxu0
      %v1076 = vadd.f32 0.0, %v1075
      %v1077 = vpop.f32.mrb[0].mxu0
      %v1078 = vadd.f32 0.0, %v1077
      %v1079 = vpop.f32.mrb[0].mxu0
      %v1080 = vadd.f32 0.0, %v1079
      %v1081 = vpop.f32.mrb[0].mxu0
      %v1082 = vadd.f32 0.0, %v1081
      %1083 = vmatprep.mubr.bf16.mxu0 0
      %1084 = vmatmul.mubr.bf16.gmra.mrb[0].mxu0 %v970
      %v1085 = vpop.f32.mrb[0].mxu0
      %v1086 = vadd.f32 0.0, %v1085
      %v1087 = vpop.f32.mrb[0].mxu0
      %v1088 = vadd.f32 0.0, %v1087
      %v1089 = vpop.f32.mrb[0].mxu0
      %v1090 = vadd.f32 0.0, %v1089
      %v1091 = vpop.f32.mrb[0].mxu0
      %v1092 = vadd.f32 0.0, %v1091
      %1093 = vdwg.mxu0
      %1094 = vmatprep.subr.bf16.mxu0 0
      %1095 = vmatpush1.bf16.msra.mxu0 %v979
      %1096 = vmatprep.subr.bf16.mxu0 0
      %1097 = vmatpush1.bf16.msra.mxu0 0
      %1098 = vmatprep.subr.bf16.mxu0 0
      %1099 = vmatpush1.bf16.msra.mxu0 0
      %1100 = vmatprep.subr.bf16.mxu0 0
      %1101 = vmatpush1.bf16.msra.mxu0 0
      %1102 = vmatprep.subr.bf16.mxu0 0
      %1103 = vmatpush1.bf16.msra.mxu0 0
      %1104 = vmatprep.subr.bf16.mxu0 0
      %1105 = vmatpush1.bf16.msra.mxu0 0
      %1106 = vmatprep.subr.bf16.mxu0 0
      %1107 = vmatpush1.bf16.msra.mxu0 0
      %1108 = vmatprep.subr.bf16.mxu0 0
      %1109 = vmatpush1.bf16.msra.mxu0 0
      %1110 = vmatprep.subr.bf16.mxu0 0
      %1111 = vmatpush1.bf16.msra.mxu0 0
      %1112 = vmatprep.subr.bf16.mxu0 0
      %1113 = vmatpush1.bf16.msra.mxu0 0
      %1114 = vmatprep.subr.bf16.mxu0 0
      %1115 = vmatpush1.bf16.msra.mxu0 0
      %1116 = vmatprep.subr.bf16.mxu0 0
      %1117 = vmatpush1.bf16.msra.mxu0 0
      %1118 = vmatprep.subr.bf16.mxu0 0
      %1119 = vmatpush1.bf16.msra.mxu0 0
      %1120 = vmatprep.subr.bf16.mxu0 0
      %1121 = vmatpush1.bf16.msra.mxu0 0
      %1122 = vmatprep.subr.bf16.mxu0 0
      %1123 = vmatpush1.bf16.msra.mxu0 0
      %1124 = vmatprep.subr.bf16.mxu0 0
      %1125 = vmatpush1.bf16.msra.mxu0 0
      %1126 = vmatprep.mubr.bf16.mxu0 0
      %1127 = vmatmul.mubr.bf16.gmra.mrb[0].mxu0 %v949
      %v1128 = vpop.f32.mrb[0].mxu0
      %v1129 = vadd.f32 0.0, %v1128
      %v1130 = vpop.f32.mrb[0].mxu0
      %v1131 = vpop.f32.mrb[0].mxu0
      %v1132 = vadd.f32 0.0, %v1131
      %v1133 = vpop.f32.mrb[0].mxu0
      %1134 = vmatprep.mubr.bf16.mxu0 0
      %1135 = vmatmul.mubr.bf16.gmra.mrb[0].mxu0 %v952
      %v1136 = vpop.f32.mrb[0].mxu0
      %v1137 = vadd.f32 0.0, %v1136
      %v1138 = vpop.f32.mrb[0].mxu0
      %v1139 = vpop.f32.mrb[0].mxu0
      %v1140 = vadd.f32 0.0, %v1139
      %v1141 = vpop.f32.mrb[0].mxu0
      %1142 = vmatprep.mubr.bf16.mxu0 0
      %1143 = vmatmul.mubr.bf16.gmra.mrb[0].mxu0 %v955
      %v1144 = vpop.f32.mrb[0].mxu0
      %v1145 = vadd.f32 0.0, %v1144
      %v1146 = vpop.f32.mrb[0].mxu0
      %v1147 = vpop.f32.mrb[0].mxu0
      %v1148 = vadd.f32 0.0, %v1147
      %v1149 = vpop.f32.mrb[0].mxu0
      %1150 = vmatprep.mubr.bf16.mxu0 0
      %1151 = vmatmul.mubr.bf16.gmra.mrb[0].mxu0 %v958
      %v1152 = vpop.f32.mrb[0].mxu0
      %v1153 = vadd.f32 0.0, %v1152
      %v1154 = vpop.f32.mrb[0].mxu0
      %v1155 = vpop.f32.mrb[0].mxu0
      %v1156 = vadd.f32 0.0, %v1155
      %v1157 = vpop.f32.mrb[0].mxu0
      %1158 = vmatprep.mubr.bf16.mxu0 0
      %1159 = vmatmul.mubr.bf16.gmra.mrb[0].mxu0 %v961
      %v1160 = vpop.f32.mrb[0].mxu0
      %v1161 = vadd.f32 0.0, %v1160
      %v1162 = vpop.f32.mrb[0].mxu0
      %v1163 = vpop.f32.mrb[0].mxu0
      %v1164 = vadd.f32 0.0, %v1163
      %v1165 = vpop.f32.mrb[0].mxu0
      %1166 = vmatprep.mubr.bf16.mxu0 0
      %1167 = vmatmul.mubr.bf16.gmra.mrb[0].mxu0 %v964
      %v1168 = vpop.f32.mrb[0].mxu0
      %v1169 = vadd.f32 0.0, %v1168
      %v1170 = vpop.f32.mrb[0].mxu0
      %v1171 = vpop.f32.mrb[0].mxu0
      %v1172 = vadd.f32 0.0, %v1171
      %v1173 = vpop.f32.mrb[0].mxu0
      %1174 = vmatprep.mubr.bf16.mxu0 0
      %1175 = vmatmul.mubr.bf16.gmra.mrb[0].mxu0 %v967
      %v1176 = vpop.f32.mrb[0].mxu0
      %v1177 = vadd.f32 0.0, %v1176
      %v1178 = vpop.f32.mrb[0].mxu0
      %v1179 = vpop.f32.mrb[0].mxu0
      %v1180 = vadd.f32 0.0, %v1179
      %v1181 = vpop.f32.mrb[0].mxu0
      %1182 = vmatprep.mubr.bf16.mxu0 0
      %1183 = vmatmul.mubr.bf16.gmra.mrb[0].mxu0 %v970
      %v1184 = vpop.f32.mrb[0].mxu0
      %v1185 = vadd.f32 0.0, %v1184
      %v1186 = vpop.f32.mrb[0].mxu0
      %v1187 = vpop.f32.mrb[0].mxu0
      %v1188 = vadd.f32 0.0, %v1187
      %v1189 = vpop.f32.mrb[0].mxu0
      %1190 = vdwg.mxu0
      %v1191 = vadd.f32 %v703, %v1016
      %v1192 = vadd.f32 %v705, %v1018
      %v1193 = vadd.f32 %v816, %v1129
      %v1194 = vadd.f32 %v707, %v1020
      %v1195 = vadd.f32 %v709, %v1022
      %v1196 = vadd.f32 %v819, %v1132
      %v1197 = vadd.f32 %v713, %v1026
      %v1198 = vadd.f32 %v715, %v1028
      %v1199 = vadd.f32 %v824, %v1137
      %v1200 = vadd.f32 %v717, %v1030
      %v1201 = vadd.f32 %v719, %v1032
      %v1202 = vadd.f32 %v827, %v1140
      %v1203 = vadd.f32 %v723, %v1036
      %v1204 = vadd.f32 %v725, %v1038
      %v1205 = vadd.f32 %v832, %v1145
      %v1206 = vadd.f32 %v727, %v1040
      %v1207 = vadd.f32 %v729, %v1042
      %v1208 = vadd.f32 %v835, %v1148
      %v1209 = vadd.f32 %v733, %v1046
      %v1210 = vadd.f32 %v735, %v1048
      %v1211 = vadd.f32 %v840, %v1153
      %v1212 = vadd.f32 %v737, %v1050
      %v1213 = vadd.f32 %v739, %v1052
      %v1214 = vadd.f32 %v843, %v1156
      %v1215 = vadd.f32 %v743, %v1056
      %v1216 = vadd.f32 %v745, %v1058
      %v1217 = vadd.f32 %v848, %v1161
      %v1218 = vadd.f32 %v747, %v1060
      %v1219 = vadd.f32 %v749, %v1062
      %v1220 = vadd.f32 %v851, %v1164
      %v1221 = vadd.f32 %v753, %v1066
      %v1222 = vadd.f32 %v755, %v1068
      %v1223 = vadd.f32 %v856, %v1169
      %v1224 = vadd.f32 %v757, %v1070
      %v1225 = vadd.f32 %v759, %v1072
      %v1226 = vadd.f32 %v859, %v1172
      %v1227 = vadd.f32 %v763, %v1076
      %v1228 = vadd.f32 %v765, %v1078
      %v1229 = vadd.f32 %v864, %v1177
      %v1230 = vadd.f32 %v767, %v1080
      %v1231 = vadd.f32 %v769, %v1082
      %v1232 = vadd.f32 %v867, %v1180
      %v1233 = vadd.f32 %v773, %v1086
      %v1234 = vadd.f32 %v775, %v1088
      %v1235 = vadd.f32 %v872, %v1185
      %v1236 = vadd.f32 %v777, %v1090
      %v1237 = vadd.f32 %v779, %v1092
      %v1238 = vadd.f32 %v875, %v1188
      %1239 = vrot.lane.b32.xlu0 %v246, 1
      %v1240 = vpop.permute.xlu0 %1239
      %1241 = vrot.lane.b32.xlu0 %v247, 1
      %v1242 = vpop.permute.xlu0 %1241
      %1243 = vrot.lane.b32.xlu0 %v248, 1
      %v1244 = vpop.permute.xlu0 %1243
      %vm1245 = vcmp.lt.s32.totalorder %v256, 1
      %v1246 = vsel %vm1245, %v1242, %v1244
      %v1247 = vsel %vm1245, %v1240, %v1242
      %v1248 = vsel %vm1245, %v1244, %v1240
      %s1249 = scalar_lea.vmem %s0, 192
      %v1250 = vld [vmem:[%s1249] sm:$0xf]
      %v1251 = vld [vmem:[%s1249 + $0x4] sm:$0xf]
      %v1252 = vld [vmem:[%s1249 + $0x8] sm:$0xf]
      %v1253 = vld [vmem:[%s1249 + $0xc] sm:$0xf]
      %v1254 = vld [vmem:[%s1249 + $0x10] sm:$0xf]
      %v1255 = vld [vmem:[%s1249 + $0x14] sm:$0xf]
      %v1256 = vld [vmem:[%s1249 + $0x18] sm:$0xf]
      %v1257 = vld [vmem:[%s1249 + $0x1c] sm:$0xf]
      %v1258 = vld [vmem:[%s1249 + $0x20] sm:$0xf]
      %v1259 = vld [vmem:[%s1249 + $0x24] sm:$0xf]
      %v1260 = vld [vmem:[%s1249 + $0x28] sm:$0xf]
      %v1261 = vld [vmem:[%s1249 + $0x2c] sm:$0xf]
      %v1262 = vld [vmem:[%s1249 + $0x30] sm:$0xf]
      %v1263 = vld [vmem:[%s1249 + $0x34] sm:$0xf]
      %v1264 = vld [vmem:[%s1249 + $0x38] sm:$0xf]
      %v1265 = vld [vmem:[%s1249 + $0x3c] sm:$0xf]
      %v1266 = vpack.c.bf16 %v1248, %v1248
      %v1267 = vpack.c.bf16 %v1247, %v1247
      %v1268 = vpack.c.bf16 %v1246, %v1246
      %v1285 = vunpack.c.l.b16 %v1250
      %v1286 = vunpack.c.l.b16 %v1251
      %v1287 = vunpack.c.l.b16 %v1252
      %v1288 = vunpack.c.l.b16 %v1253
      %v1289 = vunpack.c.l.b16 %v1254
      %v1290 = vunpack.c.l.b16 %v1255
      %v1291 = vunpack.c.l.b16 %v1256
      %v1292 = vunpack.c.l.b16 %v1257
      %v1293 = vunpack.c.l.b16 %v1258
      %v1294 = vunpack.c.l.b16 %v1259
      %v1295 = vunpack.c.l.b16 %v1260
      %v1296 = vunpack.c.l.b16 %v1261
      %v1297 = vunpack.c.l.b16 %v1262
      %v1298 = vunpack.c.l.b16 %v1263
      %v1299 = vunpack.c.l.b16 %v1264
      %v1300 = vunpack.c.l.b16 %v1265
      %v1301 = vpack.c.b16 %v1286, %v1285
      %v1302 = vpack.c.b16 %v1288, %v1287
      %v1303 = vpack.c.b16 %v1290, %v1289
      %v1304 = vpack.c.b16 %v1292, %v1291
      %v1305 = vpack.c.b16 %v1294, %v1293
      %v1306 = vpack.c.b16 %v1296, %v1295
      %v1307 = vpack.c.b16 %v1298, %v1297
      %v1308 = vpack.c.b16 %v1300, %v1299
      %v1310 = vsel %vm350, %v1301, 0
      %v1313 = vsel %vm350, %v1302, 0
      %v1316 = vsel %vm350, %v1303, 0
      %v1319 = vsel %vm350, %v1304, 0
      %v1322 = vsel %vm350, %v1305, 0
      %v1325 = vsel %vm350, %v1306, 0
      %v1328 = vsel %vm350, %v1307, 0
      %v1331 = vsel %vm350, %v1308, 0
      %v1334 = vsel %vm375, %v1266, 0
      %v1337 = vsel %vm375, %v1267, 0
      %v1340 = vsel %vm375, %v1268, 0
      %1342 = vmatprep.subr.bf16.mxu0 %v1337
      %1343 = vmatpush1.bf16.msra.mxu0 %v1334
      %1344 = vmatprep.subr.bf16.mxu0 0
      %1345 = vmatpush1.bf16.msra.mxu0 0
      %1346 = vmatprep.subr.bf16.mxu0 0
      %1347 = vmatpush1.bf16.msra.mxu0 0
      %1348 = vmatprep.subr.bf16.mxu0 0
      %1349 = vmatpush1.bf16.msra.mxu0 0
      %1350 = vmatprep.subr.bf16.mxu0 0
      %1351 = vmatpush1.bf16.msra.mxu0 0
      %1352 = vmatprep.subr.bf16.mxu0 0
      %1353 = vmatpush1.bf16.msra.mxu0 0
      %1354 = vmatprep.subr.bf16.mxu0 0
      %1355 = vmatpush1.bf16.msra.mxu0 0
      %1356 = vmatprep.subr.bf16.mxu0 0
      %1357 = vmatpush1.bf16.msra.mxu0 0
      %1358 = vmatprep.subr.bf16.mxu0 0
      %1359 = vmatpush1.bf16.msra.mxu0 0
      %1360 = vmatprep.subr.bf16.mxu0 0
      %1361 = vmatpush1.bf16.msra.mxu0 0
      %1362 = vmatprep.subr.bf16.mxu0 0
      %1363 = vmatpush1.bf16.msra.mxu0 0
      %1364 = vmatprep.subr.bf16.mxu0 0
      %1365 = vmatpush1.bf16.msra.mxu0 0
      %1366 = vmatprep.subr.bf16.mxu0 0
      %1367 = vmatpush1.bf16.msra.mxu0 0
      %1368 = vmatprep.subr.bf16.mxu0 0
      %1369 = vmatpush1.bf16.msra.mxu0 0
      %1370 = vmatprep.subr.bf16.mxu0 0
      %1371 = vmatpush1.bf16.msra.mxu0 0
      %1372 = vmatprep.subr.bf16.mxu0 0
      %1373 = vmatpush1.bf16.msra.mxu0 0
      %1374 = vmatprep.mubr.bf16.mxu0 0
      %1375 = vmatmul.mubr.bf16.gmra.mrb[0].mxu0 %v1310
      %v1376 = vpop.f32.mrb[0].mxu0
      %v1377 = vadd.f32 0.0, %v1376
      %v1378 = vpop.f32.mrb[0].mxu0
      %v1379 = vadd.f32 0.0, %v1378
      %v1380 = vpop.f32.mrb[0].mxu0
      %v1381 = vadd.f32 0.0, %v1380
      %v1382 = vpop.f32.mrb[0].mxu0
      %v1383 = vadd.f32 0.0, %v1382
      %1384 = vmatprep.mubr.bf16.mxu0 0
      %1385 = vmatmul.mubr.bf16.gmra.mrb[0].mxu0 %v1313
      %v1386 = vpop.f32.mrb[0].mxu0
      %v1387 = vadd.f32 0.0, %v1386
      %v1388 = vpop.f32.mrb[0].mxu0
      %v1389 = vadd.f32 0.0, %v1388
      %v1390 = vpop.f32.mrb[0].mxu0
      %v1391 = vadd.f32 0.0, %v1390
      %v1392 = vpop.f32.mrb[0].mxu0
      %v1393 = vadd.f32 0.0, %v1392
      %1394 = vmatprep.mubr.bf16.mxu0 0
      %1395 = vmatmul.mubr.bf16.gmra.mrb[0].mxu0 %v1316
      %v1396 = vpop.f32.mrb[0].mxu0
      %v1397 = vadd.f32 0.0, %v1396
      %v1398 = vpop.f32.mrb[0].mxu0
      %v1399 = vadd.f32 0.0, %v1398
      %v1400 = vpop.f32.mrb[0].mxu0
      %v1401 = vadd.f32 0.0, %v1400
      %v1402 = vpop.f32.mrb[0].mxu0
      %v1403 = vadd.f32 0.0, %v1402
      %1404 = vmatprep.mubr.bf16.mxu0 0
      %1405 = vmatmul.mubr.bf16.gmra.mrb[0].mxu0 %v1319
      %v1406 = vpop.f32.mrb[0].mxu0
      %v1407 = vadd.f32 0.0, %v1406
      %v1408 = vpop.f32.mrb[0].mxu0
      %v1409 = vadd.f32 0.0, %v1408
      %v1410 = vpop.f32.mrb[0].mxu0
      %v1411 = vadd.f32 0.0, %v1410
      %v1412 = vpop.f32.mrb[0].mxu0
      %v1413 = vadd.f32 0.0, %v1412
      %1414 = vmatprep.mubr.bf16.mxu0 0
      %1415 = vmatmul.mubr.bf16.gmra.mrb[0].mxu0 %v1322
      %v1416 = vpop.f32.mrb[0].mxu0
      %v1417 = vadd.f32 0.0, %v1416
      %v1418 = vpop.f32.mrb[0].mxu0
      %v1419 = vadd.f32 0.0, %v1418
      %v1420 = vpop.f32.mrb[0].mxu0
      %v1421 = vadd.f32 0.0, %v1420
      %v1422 = vpop.f32.mrb[0].mxu0
      %v1423 = vadd.f32 0.0, %v1422
      %1424 = vmatprep.mubr.bf16.mxu0 0
      %1425 = vmatmul.mubr.bf16.gmra.mrb[0].mxu0 %v1325
      %v1426 = vpop.f32.mrb[0].mxu0
      %v1427 = vadd.f32 0.0, %v1426
      %v1428 = vpop.f32.mrb[0].mxu0
      %v1429 = vadd.f32 0.0, %v1428
      %v1430 = vpop.f32.mrb[0].mxu0
      %v1431 = vadd.f32 0.0, %v1430
      %v1432 = vpop.f32.mrb[0].mxu0
      %v1433 = vadd.f32 0.0, %v1432
      %1434 = vmatprep.mubr.bf16.mxu0 0
      %1435 = vmatmul.mubr.bf16.gmra.mrb[0].mxu0 %v1328
      %v1436 = vpop.f32.mrb[0].mxu0
      %v1437 = vadd.f32 0.0, %v1436
      %v1438 = vpop.f32.mrb[0].mxu0
      %v1439 = vadd.f32 0.0, %v1438
      %v1440 = vpop.f32.mrb[0].mxu0
      %v1441 = vadd.f32 0.0, %v1440
      %v1442 = vpop.f32.mrb[0].mxu0
      %v1443 = vadd.f32 0.0, %v1442
      %1444 = vmatprep.mubr.bf16.mxu0 0
      %1445 = vmatmul.mubr.bf16.gmra.mrb[0].mxu0 %v1331
      %v1446 = vpop.f32.mrb[0].mxu0
      %v1447 = vadd.f32 0.0, %v1446
      %v1448 = vpop.f32.mrb[0].mxu0
      %v1449 = vadd.f32 0.0, %v1448
      %v1450 = vpop.f32.mrb[0].mxu0
      %v1451 = vadd.f32 0.0, %v1450
      %v1452 = vpop.f32.mrb[0].mxu0
      %v1453 = vadd.f32 0.0, %v1452
      %1454 = vdwg.mxu0
      %1455 = vmatprep.subr.bf16.mxu0 0
      %1456 = vmatpush1.bf16.msra.mxu0 %v1340
      %1457 = vmatprep.subr.bf16.mxu0 0
      %1458 = vmatpush1.bf16.msra.mxu0 0
      %1459 = vmatprep.subr.bf16.mxu0 0
      %1460 = vmatpush1.bf16.msra.mxu0 0
      %1461 = vmatprep.subr.bf16.mxu0 0
      %1462 = vmatpush1.bf16.msra.mxu0 0
      %1463 = vmatprep.subr.bf16.mxu0 0
      %1464 = vmatpush1.bf16.msra.mxu0 0
      %1465 = vmatprep.subr.bf16.mxu0 0
      %1466 = vmatpush1.bf16.msra.mxu0 0
      %1467 = vmatprep.subr.bf16.mxu0 0
      %1468 = vmatpush1.bf16.msra.mxu0 0
      %1469 = vmatprep.subr.bf16.mxu0 0
      %1470 = vmatpush1.bf16.msra.mxu0 0
      %1471 = vmatprep.subr.bf16.mxu0 0
      %1472 = vmatpush1.bf16.msra.mxu0 0
      %1473 = vmatprep.subr.bf16.mxu0 0
      %1474 = vmatpush1.bf16.msra.mxu0 0
      %1475 = vmatprep.subr.bf16.mxu0 0
      %1476 = vmatpush1.bf16.msra.mxu0 0
      %1477 = vmatprep.subr.bf16.mxu0 0
      %1478 = vmatpush1.bf16.msra.mxu0 0
      %1479 = vmatprep.subr.bf16.mxu0 0
      %1480 = vmatpush1.bf16.msra.mxu0 0
      %1481 = vmatprep.subr.bf16.mxu0 0
      %1482 = vmatpush1.bf16.msra.mxu0 0
      %1483 = vmatprep.subr.bf16.mxu0 0
      %1484 = vmatpush1.bf16.msra.mxu0 0
      %1485 = vmatprep.subr.bf16.mxu0 0
      %1486 = vmatpush1.bf16.msra.mxu0 0
      %1487 = vmatprep.mubr.bf16.mxu0 0
      %1488 = vmatmul.mubr.bf16.gmra.mrb[0].mxu0 %v1310
      %v1489 = vpop.f32.mrb[0].mxu0
      %v1490 = vadd.f32 0.0, %v1489
      %v1491 = vpop.f32.mrb[0].mxu0
      %v1492 = vpop.f32.mrb[0].mxu0
      %v1493 = vadd.f32 0.0, %v1492
      %v1494 = vpop.f32.mrb[0].mxu0
      %1495 = vmatprep.mubr.bf16.mxu0 0
      %1496 = vmatmul.mubr.bf16.gmra.mrb[0].mxu0 %v1313
      %v1497 = vpop.f32.mrb[0].mxu0
      %v1498 = vadd.f32 0.0, %v1497
      %v1499 = vpop.f32.mrb[0].mxu0
      %v1500 = vpop.f32.mrb[0].mxu0
      %v1501 = vadd.f32 0.0, %v1500
      %v1502 = vpop.f32.mrb[0].mxu0
      %1503 = vmatprep.mubr.bf16.mxu0 0
      %1504 = vmatmul.mubr.bf16.gmra.mrb[0].mxu0 %v1316
      %v1505 = vpop.f32.mrb[0].mxu0
      %v1506 = vadd.f32 0.0, %v1505
      %v1507 = vpop.f32.mrb[0].mxu0
      %v1508 = vpop.f32.mrb[0].mxu0
      %v1509 = vadd.f32 0.0, %v1508
      %v1510 = vpop.f32.mrb[0].mxu0
      %1511 = vmatprep.mubr.bf16.mxu0 0
      %1512 = vmatmul.mubr.bf16.gmra.mrb[0].mxu0 %v1319
      %v1513 = vpop.f32.mrb[0].mxu0
      %v1514 = vadd.f32 0.0, %v1513
      %v1515 = vpop.f32.mrb[0].mxu0
      %v1516 = vpop.f32.mrb[0].mxu0
      %v1517 = vadd.f32 0.0, %v1516
      %v1518 = vpop.f32.mrb[0].mxu0
      %1519 = vmatprep.mubr.bf16.mxu0 0
      %1520 = vmatmul.mubr.bf16.gmra.mrb[0].mxu0 %v1322
      %v1521 = vpop.f32.mrb[0].mxu0
      %v1522 = vadd.f32 0.0, %v1521
      %v1523 = vpop.f32.mrb[0].mxu0
      %v1524 = vpop.f32.mrb[0].mxu0
      %v1525 = vadd.f32 0.0, %v1524
      %v1526 = vpop.f32.mrb[0].mxu0
      %1527 = vmatprep.mubr.bf16.mxu0 0
      %1528 = vmatmul.mubr.bf16.gmra.mrb[0].mxu0 %v1325
      %v1529 = vpop.f32.mrb[0].mxu0
      %v1530 = vadd.f32 0.0, %v1529
      %v1531 = vpop.f32.mrb[0].mxu0
      %v1532 = vpop.f32.mrb[0].mxu0
      %v1533 = vadd.f32 0.0, %v1532
      %v1534 = vpop.f32.mrb[0].mxu0
      %1535 = vmatprep.mubr.bf16.mxu0 0
      %1536 = vmatmul.mubr.bf16.gmra.mrb[0].mxu0 %v1328
      %v1537 = vpop.f32.mrb[0].mxu0
      %v1538 = vadd.f32 0.0, %v1537
      %v1539 = vpop.f32.mrb[0].mxu0
      %v1540 = vpop.f32.mrb[0].mxu0
      %v1541 = vadd.f32 0.0, %v1540
      %v1542 = vpop.f32.mrb[0].mxu0
      %1543 = vmatprep.mubr.bf16.mxu0 0
      %1544 = vmatmul.mubr.bf16.gmra.mrb[0].mxu0 %v1331
      %v1545 = vpop.f32.mrb[0].mxu0
      %v1546 = vadd.f32 0.0, %v1545
      %v1547 = vpop.f32.mrb[0].mxu0
      %v1548 = vpop.f32.mrb[0].mxu0
      %v1549 = vadd.f32 0.0, %v1548
      %v1550 = vpop.f32.mrb[0].mxu0
      %1551 = vdwg.mxu0
      %v1552 = vadd.f32 %v1191, %v1377
      %v1553 = vadd.f32 %v1192, %v1379
      %v1554 = vadd.f32 %v1193, %v1490
      %v1555 = vadd.f32 %v1194, %v1381
      %v1556 = vadd.f32 %v1195, %v1383
      %v1557 = vadd.f32 %v1196, %v1493
      %v1558 = vadd.f32 %v1197, %v1387
      %v1559 = vadd.f32 %v1198, %v1389
      %v1560 = vadd.f32 %v1199, %v1498
      %v1561 = vadd.f32 %v1200, %v1391
      %v1562 = vadd.f32 %v1201, %v1393
      %v1563 = vadd.f32 %v1202, %v1501
      %v1564 = vadd.f32 %v1203, %v1397
      %v1565 = vadd.f32 %v1204, %v1399
      %v1566 = vadd.f32 %v1205, %v1506
      %v1567 = vadd.f32 %v1206, %v1401
      %v1568 = vadd.f32 %v1207, %v1403
      %v1569 = vadd.f32 %v1208, %v1509
      %v1570 = vadd.f32 %v1209, %v1407
      %v1571 = vadd.f32 %v1210, %v1409
      %v1572 = vadd.f32 %v1211, %v1514
      %v1573 = vadd.f32 %v1212, %v1411
      %v1574 = vadd.f32 %v1213, %v1413
      %v1575 = vadd.f32 %v1214, %v1517
      %v1576 = vadd.f32 %v1215, %v1417
      %v1577 = vadd.f32 %v1216, %v1419
      %v1578 = vadd.f32 %v1217, %v1522
      %v1579 = vadd.f32 %v1218, %v1421
      %v1580 = vadd.f32 %v1219, %v1423
      %v1581 = vadd.f32 %v1220, %v1525
      %v1582 = vadd.f32 %v1221, %v1427
      %v1583 = vadd.f32 %v1222, %v1429
      %v1584 = vadd.f32 %v1223, %v1530
      %v1585 = vadd.f32 %v1224, %v1431
      %v1586 = vadd.f32 %v1225, %v1433
      %v1587 = vadd.f32 %v1226, %v1533
      %v1588 = vadd.f32 %v1227, %v1437
      %v1589 = vadd.f32 %v1228, %v1439
      %v1590 = vadd.f32 %v1229, %v1538
      %v1591 = vadd.f32 %v1230, %v1441
      %v1592 = vadd.f32 %v1231, %v1443
      %v1593 = vadd.f32 %v1232, %v1541
      %v1594 = vadd.f32 %v1233, %v1447
      %v1595 = vadd.f32 %v1234, %v1449
      %v1596 = vadd.f32 %v1235, %v1546
      %v1597 = vadd.f32 %v1236, %v1451
      %v1598 = vadd.f32 %v1237, %v1453
      %v1599 = vadd.f32 %v1238, %v1549
      %s1600 = scalar_lea.vmem %s0, 256
      %v1601 = vld [vmem:[%s1600] sm:$0xf]
      %v1602 = vld [vmem:[%s1600 + $0x4] sm:$0xf]
      %v1603 = vld [vmem:[%s1600 + $0x8] sm:$0xf]
      %v1604 = vld [vmem:[%s1600 + $0xc] sm:$0xf]
      %v1605 = vld [vmem:[%s1600 + $0x10] sm:$0xf]
      %v1606 = vld [vmem:[%s1600 + $0x14] sm:$0xf]
      %v1607 = vld [vmem:[%s1600 + $0x18] sm:$0xf]
      %v1608 = vld [vmem:[%s1600 + $0x1c] sm:$0xf]
      %v1609 = vld [vmem:[%s1600 + $0x20] sm:$0xf]
      %v1610 = vld [vmem:[%s1600 + $0x24] sm:$0xf]
      %v1611 = vld [vmem:[%s1600 + $0x28] sm:$0xf]
      %v1612 = vld [vmem:[%s1600 + $0x2c] sm:$0xf]
      %v1613 = vld [vmem:[%s1600 + $0x30] sm:$0xf]
      %v1614 = vld [vmem:[%s1600 + $0x34] sm:$0xf]
      %v1615 = vld [vmem:[%s1600 + $0x38] sm:$0xf]
      %v1616 = vld [vmem:[%s1600 + $0x3c] sm:$0xf]
      %v1617 = vpack.c.bf16 %v246, %v246
      %v1618 = vpack.c.bf16 %v247, %v247
      %v1619 = vpack.c.bf16 %v248, %v248
      %v1636 = vunpack.c.l.b16 %v1601
      %v1637 = vunpack.c.l.b16 %v1602
      %v1638 = vunpack.c.l.b16 %v1603
      %v1639 = vunpack.c.l.b16 %v1604
      %v1640 = vunpack.c.l.b16 %v1605
      %v1641 = vunpack.c.l.b16 %v1606
      %v1642 = vunpack.c.l.b16 %v1607
      %v1643 = vunpack.c.l.b16 %v1608
      %v1644 = vunpack.c.l.b16 %v1609
      %v1645 = vunpack.c.l.b16 %v1610
      %v1646 = vunpack.c.l.b16 %v1611
      %v1647 = vunpack.c.l.b16 %v1612
      %v1648 = vunpack.c.l.b16 %v1613
      %v1649 = vunpack.c.l.b16 %v1614
      %v1650 = vunpack.c.l.b16 %v1615
      %v1651 = vunpack.c.l.b16 %v1616
      %v1652 = vpack.c.b16 %v1637, %v1636
      %v1653 = vpack.c.b16 %v1639, %v1638
      %v1654 = vpack.c.b16 %v1641, %v1640
      %v1655 = vpack.c.b16 %v1643, %v1642
      %v1656 = vpack.c.b16 %v1645, %v1644
      %v1657 = vpack.c.b16 %v1647, %v1646
      %v1658 = vpack.c.b16 %v1649, %v1648
      %v1659 = vpack.c.b16 %v1651, %v1650
      %v1661 = vsel %vm350, %v1652, 0
      %v1664 = vsel %vm350, %v1653, 0
      %v1667 = vsel %vm350, %v1654, 0
      %v1670 = vsel %vm350, %v1655, 0
      %v1673 = vsel %vm350, %v1656, 0
      %v1676 = vsel %vm350, %v1657, 0
      %v1679 = vsel %vm350, %v1658, 0
      %v1682 = vsel %vm350, %v1659, 0
      %v1685 = vsel %vm375, %v1617, 0
      %v1688 = vsel %vm375, %v1618, 0
      %v1691 = vsel %vm375, %v1619, 0
      %1693 = vmatprep.subr.bf16.mxu0 %v1688
      %1694 = vmatpush1.bf16.msra.mxu0 %v1685
      %1695 = vmatprep.subr.bf16.mxu0 0
      %1696 = vmatpush1.bf16.msra.mxu0 0
      %1697 = vmatprep.subr.bf16.mxu0 0
      %1698 = vmatpush1.bf16.msra.mxu0 0
      %1699 = vmatprep.subr.bf16.mxu0 0
      %1700 = vmatpush1.bf16.msra.mxu0 0
      %1701 = vmatprep.subr.bf16.mxu0 0
      %1702 = vmatpush1.bf16.msra.mxu0 0
      %1703 = vmatprep.subr.bf16.mxu0 0
      %1704 = vmatpush1.bf16.msra.mxu0 0
      %1705 = vmatprep.subr.bf16.mxu0 0
      %1706 = vmatpush1.bf16.msra.mxu0 0
      %1707 = vmatprep.subr.bf16.mxu0 0
      %1708 = vmatpush1.bf16.msra.mxu0 0
      %1709 = vmatprep.subr.bf16.mxu0 0
      %1710 = vmatpush1.bf16.msra.mxu0 0
      %1711 = vmatprep.subr.bf16.mxu0 0
      %1712 = vmatpush1.bf16.msra.mxu0 0
      %1713 = vmatprep.subr.bf16.mxu0 0
      %1714 = vmatpush1.bf16.msra.mxu0 0
      %1715 = vmatprep.subr.bf16.mxu0 0
      %1716 = vmatpush1.bf16.msra.mxu0 0
      %1717 = vmatprep.subr.bf16.mxu0 0
      %1718 = vmatpush1.bf16.msra.mxu0 0
      %1719 = vmatprep.subr.bf16.mxu0 0
      %1720 = vmatpush1.bf16.msra.mxu0 0
      %1721 = vmatprep.subr.bf16.mxu0 0
      %1722 = vmatpush1.bf16.msra.mxu0 0
      %1723 = vmatprep.subr.bf16.mxu0 0
      %1724 = vmatpush1.bf16.msra.mxu0 0
      %1725 = vmatprep.mubr.bf16.mxu0 0
      %1726 = vmatmul.mubr.bf16.gmra.mrb[0].mxu0 %v1661
      %v1727 = vpop.f32.mrb[0].mxu0
      %v1728 = vadd.f32 0.0, %v1727
      %v1729 = vpop.f32.mrb[0].mxu0
      %v1730 = vadd.f32 0.0, %v1729
      %v1731 = vpop.f32.mrb[0].mxu0
      %v1732 = vadd.f32 0.0, %v1731
      %v1733 = vpop.f32.mrb[0].mxu0
      %v1734 = vadd.f32 0.0, %v1733
      %1735 = vmatprep.mubr.bf16.mxu0 0
      %1736 = vmatmul.mubr.bf16.gmra.mrb[0].mxu0 %v1664
      %v1737 = vpop.f32.mrb[0].mxu0
      %v1738 = vadd.f32 0.0, %v1737
      %v1739 = vpop.f32.mrb[0].mxu0
      %v1740 = vadd.f32 0.0, %v1739
      %v1741 = vpop.f32.mrb[0].mxu0
      %v1742 = vadd.f32 0.0, %v1741
      %v1743 = vpop.f32.mrb[0].mxu0
      %v1744 = vadd.f32 0.0, %v1743
      %1745 = vmatprep.mubr.bf16.mxu0 0
      %1746 = vmatmul.mubr.bf16.gmra.mrb[0].mxu0 %v1667
      %v1747 = vpop.f32.mrb[0].mxu0
      %v1748 = vadd.f32 0.0, %v1747
      %v1749 = vpop.f32.mrb[0].mxu0
      %v1750 = vadd.f32 0.0, %v1749
      %v1751 = vpop.f32.mrb[0].mxu0
      %v1752 = vadd.f32 0.0, %v1751
      %v1753 = vpop.f32.mrb[0].mxu0
      %v1754 = vadd.f32 0.0, %v1753
      %1755 = vmatprep.mubr.bf16.mxu0 0
      %1756 = vmatmul.mubr.bf16.gmra.mrb[0].mxu0 %v1670
      %v1757 = vpop.f32.mrb[0].mxu0
      %v1758 = vadd.f32 0.0, %v1757
      %v1759 = vpop.f32.mrb[0].mxu0
      %v1760 = vadd.f32 0.0, %v1759
      %v1761 = vpop.f32.mrb[0].mxu0
      %v1762 = vadd.f32 0.0, %v1761
      %v1763 = vpop.f32.mrb[0].mxu0
      %v1764 = vadd.f32 0.0, %v1763
      %1765 = vmatprep.mubr.bf16.mxu0 0
      %1766 = vmatmul.mubr.bf16.gmra.mrb[0].mxu0 %v1673
      %v1767 = vpop.f32.mrb[0].mxu0
      %v1768 = vadd.f32 0.0, %v1767
      %v1769 = vpop.f32.mrb[0].mxu0
      %v1770 = vadd.f32 0.0, %v1769
      %v1771 = vpop.f32.mrb[0].mxu0
      %v1772 = vadd.f32 0.0, %v1771
      %v1773 = vpop.f32.mrb[0].mxu0
      %v1774 = vadd.f32 0.0, %v1773
      %1775 = vmatprep.mubr.bf16.mxu0 0
      %1776 = vmatmul.mubr.bf16.gmra.mrb[0].mxu0 %v1676
      %v1777 = vpop.f32.mrb[0].mxu0
      %v1778 = vadd.f32 0.0, %v1777
      %v1779 = vpop.f32.mrb[0].mxu0
      %v1780 = vadd.f32 0.0, %v1779
      %v1781 = vpop.f32.mrb[0].mxu0
      %v1782 = vadd.f32 0.0, %v1781
      %v1783 = vpop.f32.mrb[0].mxu0
      %v1784 = vadd.f32 0.0, %v1783
      %1785 = vmatprep.mubr.bf16.mxu0 0
      %1786 = vmatmul.mubr.bf16.gmra.mrb[0].mxu0 %v1679
      %v1787 = vpop.f32.mrb[0].mxu0
      %v1788 = vadd.f32 0.0, %v1787
      %v1789 = vpop.f32.mrb[0].mxu0
      %v1790 = vadd.f32 0.0, %v1789
      %v1791 = vpop.f32.mrb[0].mxu0
      %v1792 = vadd.f32 0.0, %v1791
      %v1793 = vpop.f32.mrb[0].mxu0
      %v1794 = vadd.f32 0.0, %v1793
      %1795 = vmatprep.mubr.bf16.mxu0 0
      %1796 = vmatmul.mubr.bf16.gmra.mrb[0].mxu0 %v1682
      %v1797 = vpop.f32.mrb[0].mxu0
      %v1798 = vadd.f32 0.0, %v1797
      %v1799 = vpop.f32.mrb[0].mxu0
      %v1800 = vadd.f32 0.0, %v1799
      %v1801 = vpop.f32.mrb[0].mxu0
      %v1802 = vadd.f32 0.0, %v1801
      %v1803 = vpop.f32.mrb[0].mxu0
      %v1804 = vadd.f32 0.0, %v1803
      %1805 = vdwg.mxu0
      %1806 = vmatprep.subr.bf16.mxu0 0
      %1807 = vmatpush1.bf16.msra.mxu0 %v1691
      %1808 = vmatprep.subr.bf16.mxu0 0
      %1809 = vmatpush1.bf16.msra.mxu0 0
      %1810 = vmatprep.subr.bf16.mxu0 0
      %1811 = vmatpush1.bf16.msra.mxu0 0
      %1812 = vmatprep.subr.bf16.mxu0 0
      %1813 = vmatpush1.bf16.msra.mxu0 0
      %1814 = vmatprep.subr.bf16.mxu0 0
      %1815 = vmatpush1.bf16.msra.mxu0 0
      %1816 = vmatprep.subr.bf16.mxu0 0
      %1817 = vmatpush1.bf16.msra.mxu0 0
      %1818 = vmatprep.subr.bf16.mxu0 0
      %1819 = vmatpush1.bf16.msra.mxu0 0
      %1820 = vmatprep.subr.bf16.mxu0 0
      %1821 = vmatpush1.bf16.msra.mxu0 0
      %1822 = vmatprep.subr.bf16.mxu0 0
      %1823 = vmatpush1.bf16.msra.mxu0 0
      %1824 = vmatprep.subr.bf16.mxu0 0
      %1825 = vmatpush1.bf16.msra.mxu0 0
      %1826 = vmatprep.subr.bf16.mxu0 0
      %1827 = vmatpush1.bf16.msra.mxu0 0
      %1828 = vmatprep.subr.bf16.mxu0 0
      %1829 = vmatpush1.bf16.msra.mxu0 0
      %1830 = vmatprep.subr.bf16.mxu0 0
      %1831 = vmatpush1.bf16.msra.mxu0 0
      %1832 = vmatprep.subr.bf16.mxu0 0
      %1833 = vmatpush1.bf16.msra.mxu0 0
      %1834 = vmatprep.subr.bf16.mxu0 0
      %1835 = vmatpush1.bf16.msra.mxu0 0
      %1836 = vmatprep.subr.bf16.mxu0 0
      %1837 = vmatpush1.bf16.msra.mxu0 0
      %1838 = vmatprep.mubr.bf16.mxu0 0
      %1839 = vmatmul.mubr.bf16.gmra.mrb[0].mxu0 %v1661
      %v1840 = vpop.f32.mrb[0].mxu0
      %v1841 = vadd.f32 0.0, %v1840
      %v1842 = vpop.f32.mrb[0].mxu0
      %v1843 = vpop.f32.mrb[0].mxu0
      %v1844 = vadd.f32 0.0, %v1843
      %v1845 = vpop.f32.mrb[0].mxu0
      %1846 = vmatprep.mubr.bf16.mxu0 0
      %1847 = vmatmul.mubr.bf16.gmra.mrb[0].mxu0 %v1664
      %v1848 = vpop.f32.mrb[0].mxu0
      %v1849 = vadd.f32 0.0, %v1848
      %v1850 = vpop.f32.mrb[0].mxu0
      %v1851 = vpop.f32.mrb[0].mxu0
      %v1852 = vadd.f32 0.0, %v1851
      %v1853 = vpop.f32.mrb[0].mxu0
      %1854 = vmatprep.mubr.bf16.mxu0 0
      %1855 = vmatmul.mubr.bf16.gmra.mrb[0].mxu0 %v1667
      %v1856 = vpop.f32.mrb[0].mxu0
      %v1857 = vadd.f32 0.0, %v1856
      %v1858 = vpop.f32.mrb[0].mxu0
      %v1859 = vpop.f32.mrb[0].mxu0
      %v1860 = vadd.f32 0.0, %v1859
      %v1861 = vpop.f32.mrb[0].mxu0
      %1862 = vmatprep.mubr.bf16.mxu0 0
      %1863 = vmatmul.mubr.bf16.gmra.mrb[0].mxu0 %v1670
      %v1864 = vpop.f32.mrb[0].mxu0
      %v1865 = vadd.f32 0.0, %v1864
      %v1866 = vpop.f32.mrb[0].mxu0
      %v1867 = vpop.f32.mrb[0].mxu0
      %v1868 = vadd.f32 0.0, %v1867
      %v1869 = vpop.f32.mrb[0].mxu0
      %1870 = vmatprep.mubr.bf16.mxu0 0
      %1871 = vmatmul.mubr.bf16.gmra.mrb[0].mxu0 %v1673
      %v1872 = vpop.f32.mrb[0].mxu0
      %v1873 = vadd.f32 0.0, %v1872
      %v1874 = vpop.f32.mrb[0].mxu0
      %v1875 = vpop.f32.mrb[0].mxu0
      %v1876 = vadd.f32 0.0, %v1875
      %v1877 = vpop.f32.mrb[0].mxu0
      %1878 = vmatprep.mubr.bf16.mxu0 0
      %1879 = vmatmul.mubr.bf16.gmra.mrb[0].mxu0 %v1676
      %v1880 = vpop.f32.mrb[0].mxu0
      %v1881 = vadd.f32 0.0, %v1880
      %v1882 = vpop.f32.mrb[0].mxu0
      %v1883 = vpop.f32.mrb[0].mxu0
      %v1884 = vadd.f32 0.0, %v1883
      %v1885 = vpop.f32.mrb[0].mxu0
      %1886 = vmatprep.mubr.bf16.mxu0 0
      %1887 = vmatmul.mubr.bf16.gmra.mrb[0].mxu0 %v1679
      %v1888 = vpop.f32.mrb[0].mxu0
      %v1889 = vadd.f32 0.0, %v1888
      %v1890 = vpop.f32.mrb[0].mxu0
      %v1891 = vpop.f32.mrb[0].mxu0
      %v1892 = vadd.f32 0.0, %v1891
      %v1893 = vpop.f32.mrb[0].mxu0
      %1894 = vmatprep.mubr.bf16.mxu0 0
      %1895 = vmatmul.mubr.bf16.gmra.mrb[0].mxu0 %v1682
      %v1896 = vpop.f32.mrb[0].mxu0
      %v1897 = vadd.f32 0.0, %v1896
      %v1898 = vpop.f32.mrb[0].mxu0
      %v1899 = vpop.f32.mrb[0].mxu0
      %v1900 = vadd.f32 0.0, %v1899
      %v1901 = vpop.f32.mrb[0].mxu0
      %1902 = vdwg.mxu0
      %v1903 = vadd.f32 %v1552, %v1728
      %v1904 = vadd.f32 %v1553, %v1730
      %v1905 = vadd.f32 %v1554, %v1841
      %v1906 = vadd.f32 %v1555, %v1732
      %v1907 = vadd.f32 %v1556, %v1734
      %v1908 = vadd.f32 %v1557, %v1844
      %v1909 = vadd.f32 %v1558, %v1738
      %v1910 = vadd.f32 %v1559, %v1740
      %v1911 = vadd.f32 %v1560, %v1849
      %v1912 = vadd.f32 %v1561, %v1742
      %v1913 = vadd.f32 %v1562, %v1744
      %v1914 = vadd.f32 %v1563, %v1852
      %v1915 = vadd.f32 %v1564, %v1748
      %v1916 = vadd.f32 %v1565, %v1750
      %v1917 = vadd.f32 %v1566, %v1857
      %v1918 = vadd.f32 %v1567, %v1752
      %v1919 = vadd.f32 %v1568, %v1754
      %v1920 = vadd.f32 %v1569, %v1860
      %v1921 = vadd.f32 %v1570, %v1758
      %v1922 = vadd.f32 %v1571, %v1760
      %v1923 = vadd.f32 %v1572, %v1865
      %v1924 = vadd.f32 %v1573, %v1762
      %v1925 = vadd.f32 %v1574, %v1764
      %v1926 = vadd.f32 %v1575, %v1868
      %v1927 = vadd.f32 %v1576, %v1768
      %v1928 = vadd.f32 %v1577, %v1770
      %v1929 = vadd.f32 %v1578, %v1873
      %v1930 = vadd.f32 %v1579, %v1772
      %v1931 = vadd.f32 %v1580, %v1774
      %v1932 = vadd.f32 %v1581, %v1876
      %v1933 = vadd.f32 %v1582, %v1778
      %v1934 = vadd.f32 %v1583, %v1780
      %v1935 = vadd.f32 %v1584, %v1881
      %v1936 = vadd.f32 %v1585, %v1782
      %v1937 = vadd.f32 %v1586, %v1784
      %v1938 = vadd.f32 %v1587, %v1884
      %v1939 = vadd.f32 %v1588, %v1788
      %v1940 = vadd.f32 %v1589, %v1790
      %v1941 = vadd.f32 %v1590, %v1889
      %v1942 = vadd.f32 %v1591, %v1792
      %v1943 = vadd.f32 %v1592, %v1794
      %v1944 = vadd.f32 %v1593, %v1892
      %v1945 = vadd.f32 %v1594, %v1798
      %v1946 = vadd.f32 %v1595, %v1800
      %v1947 = vadd.f32 %v1596, %v1897
      %v1948 = vadd.f32 %v1597, %v1802
      %v1949 = vadd.f32 %v1598, %v1804
      %v1950 = vadd.f32 %v1599, %v1900
      %1951 = vrot.lane.b32.xlu0 %v246, 127
      %v1952 = vpop.permute.xlu0 %1951
      %1953 = vrot.lane.b32.xlu0 %v247, 127
      %v1954 = vpop.permute.xlu0 %1953
      %1955 = vrot.lane.b32.xlu0 %v248, 127
      %v1956 = vpop.permute.xlu0 %1955
      %vm1957 = vcmp.lt.s32.totalorder %v256, 127
      %v1958 = vsel %vm1957, %v1954, %v1956
      %v1959 = vsel %vm1957, %v1952, %v1954
      %v1960 = vsel %vm1957, %v1956, %v1952
      %s1961 = scalar_lea.vmem %s0, 320
      %v1962 = vld [vmem:[%s1961] sm:$0xf]
      %v1963 = vld [vmem:[%s1961 + $0x4] sm:$0xf]
      %v1964 = vld [vmem:[%s1961 + $0x8] sm:$0xf]
      %v1965 = vld [vmem:[%s1961 + $0xc] sm:$0xf]
      %v1966 = vld [vmem:[%s1961 + $0x10] sm:$0xf]
      %v1967 = vld [vmem:[%s1961 + $0x14] sm:$0xf]
      %v1968 = vld [vmem:[%s1961 + $0x18] sm:$0xf]
      %v1969 = vld [vmem:[%s1961 + $0x1c] sm:$0xf]
      %v1970 = vld [vmem:[%s1961 + $0x20] sm:$0xf]
      %v1971 = vld [vmem:[%s1961 + $0x24] sm:$0xf]
      %v1972 = vld [vmem:[%s1961 + $0x28] sm:$0xf]
      %v1973 = vld [vmem:[%s1961 + $0x2c] sm:$0xf]
      %v1974 = vld [vmem:[%s1961 + $0x30] sm:$0xf]
      %v1975 = vld [vmem:[%s1961 + $0x34] sm:$0xf]
      %v1976 = vld [vmem:[%s1961 + $0x38] sm:$0xf]
      %v1977 = vld [vmem:[%s1961 + $0x3c] sm:$0xf]
      %v1978 = vpack.c.bf16 %v1959, %v1959
      %v1979 = vpack.c.bf16 %v1958, %v1958
      %v1980 = vpack.c.bf16 %v1960, %v1960
      %v1997 = vunpack.c.l.b16 %v1962
      %v1998 = vunpack.c.l.b16 %v1963
      %v1999 = vunpack.c.l.b16 %v1964
      %v2000 = vunpack.c.l.b16 %v1965
      %v2001 = vunpack.c.l.b16 %v1966
      %v2002 = vunpack.c.l.b16 %v1967
      %v2003 = vunpack.c.l.b16 %v1968
      %v2004 = vunpack.c.l.b16 %v1969
      %v2005 = vunpack.c.l.b16 %v1970
      %v2006 = vunpack.c.l.b16 %v1971
      %v2007 = vunpack.c.l.b16 %v1972
      %v2008 = vunpack.c.l.b16 %v1973
      %v2009 = vunpack.c.l.b16 %v1974
      %v2010 = vunpack.c.l.b16 %v1975
      %v2011 = vunpack.c.l.b16 %v1976
      %v2012 = vunpack.c.l.b16 %v1977
      %v2013 = vpack.c.b16 %v1998, %v1997
      %v2014 = vpack.c.b16 %v2000, %v1999
      %v2015 = vpack.c.b16 %v2002, %v2001
      %v2016 = vpack.c.b16 %v2004, %v2003
      %v2017 = vpack.c.b16 %v2006, %v2005
      %v2018 = vpack.c.b16 %v2008, %v2007
      %v2019 = vpack.c.b16 %v2010, %v2009
      %v2020 = vpack.c.b16 %v2012, %v2011
      %v2022 = vsel %vm350, %v2013, 0
      %v2025 = vsel %vm350, %v2014, 0
      %v2028 = vsel %vm350, %v2015, 0
      %v2031 = vsel %vm350, %v2016, 0
      %v2034 = vsel %vm350, %v2017, 0
      %v2037 = vsel %vm350, %v2018, 0
      %v2040 = vsel %vm350, %v2019, 0
      %v2043 = vsel %vm350, %v2020, 0
      %v2046 = vsel %vm375, %v1978, 0
      %v2049 = vsel %vm375, %v1979, 0
      %v2052 = vsel %vm375, %v1980, 0
      %2054 = vmatprep.subr.bf16.mxu0 %v2049
      %2055 = vmatpush1.bf16.msra.mxu0 %v2046
      %2056 = vmatprep.subr.bf16.mxu0 0
      %2057 = vmatpush1.bf16.msra.mxu0 0
      %2058 = vmatprep.subr.bf16.mxu0 0
      %2059 = vmatpush1.bf16.msra.mxu0 0
      %2060 = vmatprep.subr.bf16.mxu0 0
      %2061 = vmatpush1.bf16.msra.mxu0 0
      %2062 = vmatprep.subr.bf16.mxu0 0
      %2063 = vmatpush1.bf16.msra.mxu0 0
      %2064 = vmatprep.subr.bf16.mxu0 0
      %2065 = vmatpush1.bf16.msra.mxu0 0
      %2066 = vmatprep.subr.bf16.mxu0 0
      %2067 = vmatpush1.bf16.msra.mxu0 0
      %2068 = vmatprep.subr.bf16.mxu0 0
      %2069 = vmatpush1.bf16.msra.mxu0 0
      %2070 = vmatprep.subr.bf16.mxu0 0
      %2071 = vmatpush1.bf16.msra.mxu0 0
      %2072 = vmatprep.subr.bf16.mxu0 0
      %2073 = vmatpush1.bf16.msra.mxu0 0
      %2074 = vmatprep.subr.bf16.mxu0 0
      %2075 = vmatpush1.bf16.msra.mxu0 0
      %2076 = vmatprep.subr.bf16.mxu0 0
      %2077 = vmatpush1.bf16.msra.mxu0 0
      %2078 = vmatprep.subr.bf16.mxu0 0
      %2079 = vmatpush1.bf16.msra.mxu0 0
      %2080 = vmatprep.subr.bf16.mxu0 0
      %2081 = vmatpush1.bf16.msra.mxu0 0
      %2082 = vmatprep.subr.bf16.mxu0 0
      %2083 = vmatpush1.bf16.msra.mxu0 0
      %2084 = vmatprep.subr.bf16.mxu0 0
      %2085 = vmatpush1.bf16.msra.mxu0 0
      %2086 = vmatprep.mubr.bf16.mxu0 0
      %2087 = vmatmul.mubr.bf16.gmra.mrb[0].mxu0 %v2022
      %v2088 = vpop.f32.mrb[0].mxu0
      %v2089 = vadd.f32 0.0, %v2088
      %v2090 = vpop.f32.mrb[0].mxu0
      %v2091 = vadd.f32 0.0, %v2090
      %v2092 = vpop.f32.mrb[0].mxu0
      %v2093 = vadd.f32 0.0, %v2092
      %v2094 = vpop.f32.mrb[0].mxu0
      %v2095 = vadd.f32 0.0, %v2094
      %2096 = vmatprep.mubr.bf16.mxu0 0
      %2097 = vmatmul.mubr.bf16.gmra.mrb[0].mxu0 %v2025
      %v2098 = vpop.f32.mrb[0].mxu0
      %v2099 = vadd.f32 0.0, %v2098
      %v2100 = vpop.f32.mrb[0].mxu0
      %v2101 = vadd.f32 0.0, %v2100
      %v2102 = vpop.f32.mrb[0].mxu0
      %v2103 = vadd.f32 0.0, %v2102
      %v2104 = vpop.f32.mrb[0].mxu0
      %v2105 = vadd.f32 0.0, %v2104
      %2106 = vmatprep.mubr.bf16.mxu0 0
      %2107 = vmatmul.mubr.bf16.gmra.mrb[0].mxu0 %v2028
      %v2108 = vpop.f32.mrb[0].mxu0
      %v2109 = vadd.f32 0.0, %v2108
      %v2110 = vpop.f32.mrb[0].mxu0
      %v2111 = vadd.f32 0.0, %v2110
      %v2112 = vpop.f32.mrb[0].mxu0
      %v2113 = vadd.f32 0.0, %v2112
      %v2114 = vpop.f32.mrb[0].mxu0
      %v2115 = vadd.f32 0.0, %v2114
      %2116 = vmatprep.mubr.bf16.mxu0 0
      %2117 = vmatmul.mubr.bf16.gmra.mrb[0].mxu0 %v2031
      %v2118 = vpop.f32.mrb[0].mxu0
      %v2119 = vadd.f32 0.0, %v2118
      %v2120 = vpop.f32.mrb[0].mxu0
      %v2121 = vadd.f32 0.0, %v2120
      %v2122 = vpop.f32.mrb[0].mxu0
      %v2123 = vadd.f32 0.0, %v2122
      %v2124 = vpop.f32.mrb[0].mxu0
      %v2125 = vadd.f32 0.0, %v2124
      %2126 = vmatprep.mubr.bf16.mxu0 0
      %2127 = vmatmul.mubr.bf16.gmra.mrb[0].mxu0 %v2034
      %v2128 = vpop.f32.mrb[0].mxu0
      %v2129 = vadd.f32 0.0, %v2128
      %v2130 = vpop.f32.mrb[0].mxu0
      %v2131 = vadd.f32 0.0, %v2130
      %v2132 = vpop.f32.mrb[0].mxu0
      %v2133 = vadd.f32 0.0, %v2132
      %v2134 = vpop.f32.mrb[0].mxu0
      %v2135 = vadd.f32 0.0, %v2134
      %2136 = vmatprep.mubr.bf16.mxu0 0
      %2137 = vmatmul.mubr.bf16.gmra.mrb[0].mxu0 %v2037
      %v2138 = vpop.f32.mrb[0].mxu0
      %v2139 = vadd.f32 0.0, %v2138
      %v2140 = vpop.f32.mrb[0].mxu0
      %v2141 = vadd.f32 0.0, %v2140
      %v2142 = vpop.f32.mrb[0].mxu0
      %v2143 = vadd.f32 0.0, %v2142
      %v2144 = vpop.f32.mrb[0].mxu0
      %v2145 = vadd.f32 0.0, %v2144
      %2146 = vmatprep.mubr.bf16.mxu0 0
      %2147 = vmatmul.mubr.bf16.gmra.mrb[0].mxu0 %v2040
      %v2148 = vpop.f32.mrb[0].mxu0
      %v2149 = vadd.f32 0.0, %v2148
      %v2150 = vpop.f32.mrb[0].mxu0
      %v2151 = vadd.f32 0.0, %v2150
      %v2152 = vpop.f32.mrb[0].mxu0
      %v2153 = vadd.f32 0.0, %v2152
      %v2154 = vpop.f32.mrb[0].mxu0
      %v2155 = vadd.f32 0.0, %v2154
      %2156 = vmatprep.mubr.bf16.mxu0 0
      %2157 = vmatmul.mubr.bf16.gmra.mrb[0].mxu0 %v2043
      %v2158 = vpop.f32.mrb[0].mxu0
      %v2159 = vadd.f32 0.0, %v2158
      %v2160 = vpop.f32.mrb[0].mxu0
      %v2161 = vadd.f32 0.0, %v2160
      %v2162 = vpop.f32.mrb[0].mxu0
      %v2163 = vadd.f32 0.0, %v2162
      %v2164 = vpop.f32.mrb[0].mxu0
      %v2165 = vadd.f32 0.0, %v2164
      %2166 = vdwg.mxu0
      %2167 = vmatprep.subr.bf16.mxu0 0
      %2168 = vmatpush1.bf16.msra.mxu0 %v2052
      %2169 = vmatprep.subr.bf16.mxu0 0
      %2170 = vmatpush1.bf16.msra.mxu0 0
      %2171 = vmatprep.subr.bf16.mxu0 0
      %2172 = vmatpush1.bf16.msra.mxu0 0
      %2173 = vmatprep.subr.bf16.mxu0 0
      %2174 = vmatpush1.bf16.msra.mxu0 0
      %2175 = vmatprep.subr.bf16.mxu0 0
      %2176 = vmatpush1.bf16.msra.mxu0 0
      %2177 = vmatprep.subr.bf16.mxu0 0
      %2178 = vmatpush1.bf16.msra.mxu0 0
      %2179 = vmatprep.subr.bf16.mxu0 0
      %2180 = vmatpush1.bf16.msra.mxu0 0
      %2181 = vmatprep.subr.bf16.mxu0 0
      %2182 = vmatpush1.bf16.msra.mxu0 0
      %2183 = vmatprep.subr.bf16.mxu0 0
      %2184 = vmatpush1.bf16.msra.mxu0 0
      %2185 = vmatprep.subr.bf16.mxu0 0
      %2186 = vmatpush1.bf16.msra.mxu0 0
      %2187 = vmatprep.subr.bf16.mxu0 0
      %2188 = vmatpush1.bf16.msra.mxu0 0
      %2189 = vmatprep.subr.bf16.mxu0 0
      %2190 = vmatpush1.bf16.msra.mxu0 0
      %2191 = vmatprep.subr.bf16.mxu0 0
      %2192 = vmatpush1.bf16.msra.mxu0 0
      %2193 = vmatprep.subr.bf16.mxu0 0
      %2194 = vmatpush1.bf16.msra.mxu0 0
      %2195 = vmatprep.subr.bf16.mxu0 0
      %2196 = vmatpush1.bf16.msra.mxu0 0
      %2197 = vmatprep.subr.bf16.mxu0 0
      %2198 = vmatpush1.bf16.msra.mxu0 0
      %2199 = vmatprep.mubr.bf16.mxu0 0
      %2200 = vmatmul.mubr.bf16.gmra.mrb[0].mxu0 %v2022
      %v2201 = vpop.f32.mrb[0].mxu0
      %v2202 = vadd.f32 0.0, %v2201
      %v2203 = vpop.f32.mrb[0].mxu0
      %v2204 = vpop.f32.mrb[0].mxu0
      %v2205 = vadd.f32 0.0, %v2204
      %v2206 = vpop.f32.mrb[0].mxu0
      %2207 = vmatprep.mubr.bf16.mxu0 0
      %2208 = vmatmul.mubr.bf16.gmra.mrb[0].mxu0 %v2025
      %v2209 = vpop.f32.mrb[0].mxu0
      %v2210 = vadd.f32 0.0, %v2209
      %v2211 = vpop.f32.mrb[0].mxu0
      %v2212 = vpop.f32.mrb[0].mxu0
      %v2213 = vadd.f32 0.0, %v2212
      %v2214 = vpop.f32.mrb[0].mxu0
      %2215 = vmatprep.mubr.bf16.mxu0 0
      %2216 = vmatmul.mubr.bf16.gmra.mrb[0].mxu0 %v2028
      %v2217 = vpop.f32.mrb[0].mxu0
      %v2218 = vadd.f32 0.0, %v2217
      %v2219 = vpop.f32.mrb[0].mxu0
      %v2220 = vpop.f32.mrb[0].mxu0
      %v2221 = vadd.f32 0.0, %v2220
      %v2222 = vpop.f32.mrb[0].mxu0
      %2223 = vmatprep.mubr.bf16.mxu0 0
      %2224 = vmatmul.mubr.bf16.gmra.mrb[0].mxu0 %v2031
      %v2225 = vpop.f32.mrb[0].mxu0
      %v2226 = vadd.f32 0.0, %v2225
      %v2227 = vpop.f32.mrb[0].mxu0
      %v2228 = vpop.f32.mrb[0].mxu0
      %v2229 = vadd.f32 0.0, %v2228
      %v2230 = vpop.f32.mrb[0].mxu0
      %2231 = vmatprep.mubr.bf16.mxu0 0
      %2232 = vmatmul.mubr.bf16.gmra.mrb[0].mxu0 %v2034
      %v2233 = vpop.f32.mrb[0].mxu0
      %v2234 = vadd.f32 0.0, %v2233
      %v2235 = vpop.f32.mrb[0].mxu0
      %v2236 = vpop.f32.mrb[0].mxu0
      %v2237 = vadd.f32 0.0, %v2236
      %v2238 = vpop.f32.mrb[0].mxu0
      %2239 = vmatprep.mubr.bf16.mxu0 0
      %2240 = vmatmul.mubr.bf16.gmra.mrb[0].mxu0 %v2037
      %v2241 = vpop.f32.mrb[0].mxu0
      %v2242 = vadd.f32 0.0, %v2241
      %v2243 = vpop.f32.mrb[0].mxu0
      %v2244 = vpop.f32.mrb[0].mxu0
      %v2245 = vadd.f32 0.0, %v2244
      %v2246 = vpop.f32.mrb[0].mxu0
      %2247 = vmatprep.mubr.bf16.mxu0 0
      %2248 = vmatmul.mubr.bf16.gmra.mrb[0].mxu0 %v2040
      %v2249 = vpop.f32.mrb[0].mxu0
      %v2250 = vadd.f32 0.0, %v2249
      %v2251 = vpop.f32.mrb[0].mxu0
      %v2252 = vpop.f32.mrb[0].mxu0
      %v2253 = vadd.f32 0.0, %v2252
      %v2254 = vpop.f32.mrb[0].mxu0
      %2255 = vmatprep.mubr.bf16.mxu0 0
      %2256 = vmatmul.mubr.bf16.gmra.mrb[0].mxu0 %v2043
      %v2257 = vpop.f32.mrb[0].mxu0
      %v2258 = vadd.f32 0.0, %v2257
      %v2259 = vpop.f32.mrb[0].mxu0
      %v2260 = vpop.f32.mrb[0].mxu0
      %v2261 = vadd.f32 0.0, %v2260
      %v2262 = vpop.f32.mrb[0].mxu0
      %2263 = vdwg.mxu0
      %v2264 = vadd.f32 %v1903, %v2089
      %v2265 = vadd.f32 %v1904, %v2091
      %v2266 = vadd.f32 %v1905, %v2202
      %v2267 = vadd.f32 %v1906, %v2093
      %v2268 = vadd.f32 %v1907, %v2095
      %v2269 = vadd.f32 %v1908, %v2205
      %v2270 = vadd.f32 %v1909, %v2099
      %v2271 = vadd.f32 %v1910, %v2101
      %v2272 = vadd.f32 %v1911, %v2210
      %v2273 = vadd.f32 %v1912, %v2103
      %v2274 = vadd.f32 %v1913, %v2105
      %v2275 = vadd.f32 %v1914, %v2213
      %v2276 = vadd.f32 %v1915, %v2109
      %v2277 = vadd.f32 %v1916, %v2111
      %v2278 = vadd.f32 %v1917, %v2218
      %v2279 = vadd.f32 %v1918, %v2113
      %v2280 = vadd.f32 %v1919, %v2115
      %v2281 = vadd.f32 %v1920, %v2221
      %v2282 = vadd.f32 %v1921, %v2119
      %v2283 = vadd.f32 %v1922, %v2121
      %v2284 = vadd.f32 %v1923, %v2226
      %v2285 = vadd.f32 %v1924, %v2123
      %v2286 = vadd.f32 %v1925, %v2125
      %v2287 = vadd.f32 %v1926, %v2229
      %v2288 = vadd.f32 %v1927, %v2129
      %v2289 = vadd.f32 %v1928, %v2131
      %v2290 = vadd.f32 %v1929, %v2234
      %v2291 = vadd.f32 %v1930, %v2133
      %v2292 = vadd.f32 %v1931, %v2135
      %v2293 = vadd.f32 %v1932, %v2237
      %v2294 = vadd.f32 %v1933, %v2139
      %v2295 = vadd.f32 %v1934, %v2141
      %v2296 = vadd.f32 %v1935, %v2242
      %v2297 = vadd.f32 %v1936, %v2143
      %v2298 = vadd.f32 %v1937, %v2145
      %v2299 = vadd.f32 %v1938, %v2245
      %v2300 = vadd.f32 %v1939, %v2149
      %v2301 = vadd.f32 %v1940, %v2151
      %v2302 = vadd.f32 %v1941, %v2250
      %v2303 = vadd.f32 %v1942, %v2153
      %v2304 = vadd.f32 %v1943, %v2155
      %v2305 = vadd.f32 %v1944, %v2253
      %v2306 = vadd.f32 %v1945, %v2159
      %v2307 = vadd.f32 %v1946, %v2161
      %v2308 = vadd.f32 %v1947, %v2258
      %v2309 = vadd.f32 %v1948, %v2163
      %v2310 = vadd.f32 %v1949, %v2165
      %v2311 = vadd.f32 %v1950, %v2261
      %2312 = vrot.lane.b32.xlu0 %v246, 111
      %v2313 = vpop.permute.xlu0 %2312
      %2314 = vrot.lane.b32.xlu0 %v247, 111
      %v2315 = vpop.permute.xlu0 %2314
      %2316 = vrot.lane.b32.xlu0 %v248, 111
      %v2317 = vpop.permute.xlu0 %2316
      %vm2318 = vcmp.lt.s32.totalorder %v256, 111
      %v2319 = vsel %vm2318, %v2315, %v2317
      %v2320 = vsel %vm2318, %v2313, %v2315
      %v2321 = vsel %vm2318, %v2317, %v2313
      %s2322 = scalar_lea.vmem %s0, 384
      %v2323 = vld [vmem:[%s2322] sm:$0xf]
      %v2324 = vld [vmem:[%s2322 + $0x4] sm:$0xf]
      %v2325 = vld [vmem:[%s2322 + $0x8] sm:$0xf]
      %v2326 = vld [vmem:[%s2322 + $0xc] sm:$0xf]
      %v2327 = vld [vmem:[%s2322 + $0x10] sm:$0xf]
      %v2328 = vld [vmem:[%s2322 + $0x14] sm:$0xf]
      %v2329 = vld [vmem:[%s2322 + $0x18] sm:$0xf]
      %v2330 = vld [vmem:[%s2322 + $0x1c] sm:$0xf]
      %v2331 = vld [vmem:[%s2322 + $0x20] sm:$0xf]
      %v2332 = vld [vmem:[%s2322 + $0x24] sm:$0xf]
      %v2333 = vld [vmem:[%s2322 + $0x28] sm:$0xf]
      %v2334 = vld [vmem:[%s2322 + $0x2c] sm:$0xf]
      %v2335 = vld [vmem:[%s2322 + $0x30] sm:$0xf]
      %v2336 = vld [vmem:[%s2322 + $0x34] sm:$0xf]
      %v2337 = vld [vmem:[%s2322 + $0x38] sm:$0xf]
      %v2338 = vld [vmem:[%s2322 + $0x3c] sm:$0xf]
      %v2339 = vpack.c.bf16 %v2320, %v2320
      %v2340 = vpack.c.bf16 %v2319, %v2319
      %v2341 = vpack.c.bf16 %v2321, %v2321
      %v2358 = vunpack.c.l.b16 %v2323
      %v2359 = vunpack.c.l.b16 %v2324
      %v2360 = vunpack.c.l.b16 %v2325
      %v2361 = vunpack.c.l.b16 %v2326
      %v2362 = vunpack.c.l.b16 %v2327
      %v2363 = vunpack.c.l.b16 %v2328
      %v2364 = vunpack.c.l.b16 %v2329
      %v2365 = vunpack.c.l.b16 %v2330
      %v2366 = vunpack.c.l.b16 %v2331
      %v2367 = vunpack.c.l.b16 %v2332
      %v2368 = vunpack.c.l.b16 %v2333
      %v2369 = vunpack.c.l.b16 %v2334
      %v2370 = vunpack.c.l.b16 %v2335
      %v2371 = vunpack.c.l.b16 %v2336
      %v2372 = vunpack.c.l.b16 %v2337
      %v2373 = vunpack.c.l.b16 %v2338
      %v2374 = vpack.c.b16 %v2359, %v2358
      %v2375 = vpack.c.b16 %v2361, %v2360
      %v2376 = vpack.c.b16 %v2363, %v2362
      %v2377 = vpack.c.b16 %v2365, %v2364
      %v2378 = vpack.c.b16 %v2367, %v2366
      %v2379 = vpack.c.b16 %v2369, %v2368
      %v2380 = vpack.c.b16 %v2371, %v2370
      %v2381 = vpack.c.b16 %v2373, %v2372
      %v2383 = vsel %vm350, %v2374, 0
      %v2386 = vsel %vm350, %v2375, 0
      %v2389 = vsel %vm350, %v2376, 0
      %v2392 = vsel %vm350, %v2377, 0
      %v2395 = vsel %vm350, %v2378, 0
      %v2398 = vsel %vm350, %v2379, 0
      %v2401 = vsel %vm350, %v2380, 0
      %v2404 = vsel %vm350, %v2381, 0
      %v2407 = vsel %vm375, %v2339, 0
      %v2410 = vsel %vm375, %v2340, 0
      %v2413 = vsel %vm375, %v2341, 0
      %2415 = vmatprep.subr.bf16.mxu0 %v2410
      %2416 = vmatpush1.bf16.msra.mxu0 %v2407
      %2417 = vmatprep.subr.bf16.mxu0 0
      %2418 = vmatpush1.bf16.msra.mxu0 0
      %2419 = vmatprep.subr.bf16.mxu0 0
      %2420 = vmatpush1.bf16.msra.mxu0 0
      %2421 = vmatprep.subr.bf16.mxu0 0
      %2422 = vmatpush1.bf16.msra.mxu0 0
      %2423 = vmatprep.subr.bf16.mxu0 0
      %2424 = vmatpush1.bf16.msra.mxu0 0
      %2425 = vmatprep.subr.bf16.mxu0 0
      %2426 = vmatpush1.bf16.msra.mxu0 0
      %2427 = vmatprep.subr.bf16.mxu0 0
      %2428 = vmatpush1.bf16.msra.mxu0 0
      %2429 = vmatprep.subr.bf16.mxu0 0
      %2430 = vmatpush1.bf16.msra.mxu0 0
      %2431 = vmatprep.subr.bf16.mxu0 0
      %2432 = vmatpush1.bf16.msra.mxu0 0
      %2433 = vmatprep.subr.bf16.mxu0 0
      %2434 = vmatpush1.bf16.msra.mxu0 0
      %2435 = vmatprep.subr.bf16.mxu0 0
      %2436 = vmatpush1.bf16.msra.mxu0 0
      %2437 = vmatprep.subr.bf16.mxu0 0
      %2438 = vmatpush1.bf16.msra.mxu0 0
      %2439 = vmatprep.subr.bf16.mxu0 0
      %2440 = vmatpush1.bf16.msra.mxu0 0
      %2441 = vmatprep.subr.bf16.mxu0 0
      %2442 = vmatpush1.bf16.msra.mxu0 0
      %2443 = vmatprep.subr.bf16.mxu0 0
      %2444 = vmatpush1.bf16.msra.mxu0 0
      %2445 = vmatprep.subr.bf16.mxu0 0
      %2446 = vmatpush1.bf16.msra.mxu0 0
      %2447 = vmatprep.mubr.bf16.mxu0 0
      %2448 = vmatmul.mubr.bf16.gmra.mrb[0].mxu0 %v2383
      %v2449 = vpop.f32.mrb[0].mxu0
      %v2450 = vadd.f32 0.0, %v2449
      %v2451 = vpop.f32.mrb[0].mxu0
      %v2452 = vadd.f32 0.0, %v2451
      %v2453 = vpop.f32.mrb[0].mxu0
      %v2454 = vadd.f32 0.0, %v2453
      %v2455 = vpop.f32.mrb[0].mxu0
      %v2456 = vadd.f32 0.0, %v2455
      %2457 = vmatprep.mubr.bf16.mxu0 0
      %2458 = vmatmul.mubr.bf16.gmra.mrb[0].mxu0 %v2386
      %v2459 = vpop.f32.mrb[0].mxu0
      %v2460 = vadd.f32 0.0, %v2459
      %v2461 = vpop.f32.mrb[0].mxu0
      %v2462 = vadd.f32 0.0, %v2461
      %v2463 = vpop.f32.mrb[0].mxu0
      %v2464 = vadd.f32 0.0, %v2463
      %v2465 = vpop.f32.mrb[0].mxu0
      %v2466 = vadd.f32 0.0, %v2465
      %2467 = vmatprep.mubr.bf16.mxu0 0
      %2468 = vmatmul.mubr.bf16.gmra.mrb[0].mxu0 %v2389
      %v2469 = vpop.f32.mrb[0].mxu0
      %v2470 = vadd.f32 0.0, %v2469
      %v2471 = vpop.f32.mrb[0].mxu0
      %v2472 = vadd.f32 0.0, %v2471
      %v2473 = vpop.f32.mrb[0].mxu0
      %v2474 = vadd.f32 0.0, %v2473
      %v2475 = vpop.f32.mrb[0].mxu0
      %v2476 = vadd.f32 0.0, %v2475
      %2477 = vmatprep.mubr.bf16.mxu0 0
      %2478 = vmatmul.mubr.bf16.gmra.mrb[0].mxu0 %v2392
      %v2479 = vpop.f32.mrb[0].mxu0
      %v2480 = vadd.f32 0.0, %v2479
      %v2481 = vpop.f32.mrb[0].mxu0
      %v2482 = vadd.f32 0.0, %v2481
      %v2483 = vpop.f32.mrb[0].mxu0
      %v2484 = vadd.f32 0.0, %v2483
      %v2485 = vpop.f32.mrb[0].mxu0
      %v2486 = vadd.f32 0.0, %v2485
      %2487 = vmatprep.mubr.bf16.mxu0 0
      %2488 = vmatmul.mubr.bf16.gmra.mrb[0].mxu0 %v2395
      %v2489 = vpop.f32.mrb[0].mxu0
      %v2490 = vadd.f32 0.0, %v2489
      %v2491 = vpop.f32.mrb[0].mxu0
      %v2492 = vadd.f32 0.0, %v2491
      %v2493 = vpop.f32.mrb[0].mxu0
      %v2494 = vadd.f32 0.0, %v2493
      %v2495 = vpop.f32.mrb[0].mxu0
      %v2496 = vadd.f32 0.0, %v2495
      %2497 = vmatprep.mubr.bf16.mxu0 0
      %2498 = vmatmul.mubr.bf16.gmra.mrb[0].mxu0 %v2398
      %v2499 = vpop.f32.mrb[0].mxu0
      %v2500 = vadd.f32 0.0, %v2499
      %v2501 = vpop.f32.mrb[0].mxu0
      %v2502 = vadd.f32 0.0, %v2501
      %v2503 = vpop.f32.mrb[0].mxu0
      %v2504 = vadd.f32 0.0, %v2503
      %v2505 = vpop.f32.mrb[0].mxu0
      %v2506 = vadd.f32 0.0, %v2505
      %2507 = vmatprep.mubr.bf16.mxu0 0
      %2508 = vmatmul.mubr.bf16.gmra.mrb[0].mxu0 %v2401
      %v2509 = vpop.f32.mrb[0].mxu0
      %v2510 = vadd.f32 0.0, %v2509
      %v2511 = vpop.f32.mrb[0].mxu0
      %v2512 = vadd.f32 0.0, %v2511
      %v2513 = vpop.f32.mrb[0].mxu0
      %v2514 = vadd.f32 0.0, %v2513
      %v2515 = vpop.f32.mrb[0].mxu0
      %v2516 = vadd.f32 0.0, %v2515
      %2517 = vmatprep.mubr.bf16.mxu0 0
      %2518 = vmatmul.mubr.bf16.gmra.mrb[0].mxu0 %v2404
      %v2519 = vpop.f32.mrb[0].mxu0
      %v2520 = vadd.f32 0.0, %v2519
      %v2521 = vpop.f32.mrb[0].mxu0
      %v2522 = vadd.f32 0.0, %v2521
      %v2523 = vpop.f32.mrb[0].mxu0
      %v2524 = vadd.f32 0.0, %v2523
      %v2525 = vpop.f32.mrb[0].mxu0
      %v2526 = vadd.f32 0.0, %v2525
      %2527 = vdwg.mxu0
      %2528 = vmatprep.subr.bf16.mxu0 0
      %2529 = vmatpush1.bf16.msra.mxu0 %v2413
      %2530 = vmatprep.subr.bf16.mxu0 0
      %2531 = vmatpush1.bf16.msra.mxu0 0
      %2532 = vmatprep.subr.bf16.mxu0 0
      %2533 = vmatpush1.bf16.msra.mxu0 0
      %2534 = vmatprep.subr.bf16.mxu0 0
      %2535 = vmatpush1.bf16.msra.mxu0 0
      %2536 = vmatprep.subr.bf16.mxu0 0
      %2537 = vmatpush1.bf16.msra.mxu0 0
      %2538 = vmatprep.subr.bf16.mxu0 0
      %2539 = vmatpush1.bf16.msra.mxu0 0
      %2540 = vmatprep.subr.bf16.mxu0 0
      %2541 = vmatpush1.bf16.msra.mxu0 0
      %2542 = vmatprep.subr.bf16.mxu0 0
      %2543 = vmatpush1.bf16.msra.mxu0 0
      %2544 = vmatprep.subr.bf16.mxu0 0
      %2545 = vmatpush1.bf16.msra.mxu0 0
      %2546 = vmatprep.subr.bf16.mxu0 0
      %2547 = vmatpush1.bf16.msra.mxu0 0
      %2548 = vmatprep.subr.bf16.mxu0 0
      %2549 = vmatpush1.bf16.msra.mxu0 0
      %2550 = vmatprep.subr.bf16.mxu0 0
      %2551 = vmatpush1.bf16.msra.mxu0 0
      %2552 = vmatprep.subr.bf16.mxu0 0
      %2553 = vmatpush1.bf16.msra.mxu0 0
      %2554 = vmatprep.subr.bf16.mxu0 0
      %2555 = vmatpush1.bf16.msra.mxu0 0
      %2556 = vmatprep.subr.bf16.mxu0 0
      %2557 = vmatpush1.bf16.msra.mxu0 0
      %2558 = vmatprep.subr.bf16.mxu0 0
      %2559 = vmatpush1.bf16.msra.mxu0 0
      %2560 = vmatprep.mubr.bf16.mxu0 0
      %2561 = vmatmul.mubr.bf16.gmra.mrb[0].mxu0 %v2383
      %v2562 = vpop.f32.mrb[0].mxu0
      %v2563 = vadd.f32 0.0, %v2562
      %v2564 = vpop.f32.mrb[0].mxu0
      %v2565 = vpop.f32.mrb[0].mxu0
      %v2566 = vadd.f32 0.0, %v2565
      %v2567 = vpop.f32.mrb[0].mxu0
      %2568 = vmatprep.mubr.bf16.mxu0 0
      %2569 = vmatmul.mubr.bf16.gmra.mrb[0].mxu0 %v2386
      %v2570 = vpop.f32.mrb[0].mxu0
      %v2571 = vadd.f32 0.0, %v2570
      %v2572 = vpop.f32.mrb[0].mxu0
      %v2573 = vpop.f32.mrb[0].mxu0
      %v2574 = vadd.f32 0.0, %v2573
      %v2575 = vpop.f32.mrb[0].mxu0
      %2576 = vmatprep.mubr.bf16.mxu0 0
      %2577 = vmatmul.mubr.bf16.gmra.mrb[0].mxu0 %v2389
      %v2578 = vpop.f32.mrb[0].mxu0
      %v2579 = vadd.f32 0.0, %v2578
      %v2580 = vpop.f32.mrb[0].mxu0
      %v2581 = vpop.f32.mrb[0].mxu0
      %v2582 = vadd.f32 0.0, %v2581
      %v2583 = vpop.f32.mrb[0].mxu0
      %2584 = vmatprep.mubr.bf16.mxu0 0
      %2585 = vmatmul.mubr.bf16.gmra.mrb[0].mxu0 %v2392
      %v2586 = vpop.f32.mrb[0].mxu0
      %v2587 = vadd.f32 0.0, %v2586
      %v2588 = vpop.f32.mrb[0].mxu0
      %v2589 = vpop.f32.mrb[0].mxu0
      %v2590 = vadd.f32 0.0, %v2589
      %v2591 = vpop.f32.mrb[0].mxu0
      %2592 = vmatprep.mubr.bf16.mxu0 0
      %2593 = vmatmul.mubr.bf16.gmra.mrb[0].mxu0 %v2395
      %v2594 = vpop.f32.mrb[0].mxu0
      %v2595 = vadd.f32 0.0, %v2594
      %v2596 = vpop.f32.mrb[0].mxu0
      %v2597 = vpop.f32.mrb[0].mxu0
      %v2598 = vadd.f32 0.0, %v2597
      %v2599 = vpop.f32.mrb[0].mxu0
      %2600 = vmatprep.mubr.bf16.mxu0 0
      %2601 = vmatmul.mubr.bf16.gmra.mrb[0].mxu0 %v2398
      %v2602 = vpop.f32.mrb[0].mxu0
      %v2603 = vadd.f32 0.0, %v2602
      %v2604 = vpop.f32.mrb[0].mxu0
      %v2605 = vpop.f32.mrb[0].mxu0
      %v2606 = vadd.f32 0.0, %v2605
      %v2607 = vpop.f32.mrb[0].mxu0
      %2608 = vmatprep.mubr.bf16.mxu0 0
      %2609 = vmatmul.mubr.bf16.gmra.mrb[0].mxu0 %v2401
      %v2610 = vpop.f32.mrb[0].mxu0
      %v2611 = vadd.f32 0.0, %v2610
      %v2612 = vpop.f32.mrb[0].mxu0
      %v2613 = vpop.f32.mrb[0].mxu0
      %v2614 = vadd.f32 0.0, %v2613
      %v2615 = vpop.f32.mrb[0].mxu0
      %2616 = vmatprep.mubr.bf16.mxu0 0
      %2617 = vmatmul.mubr.bf16.gmra.mrb[0].mxu0 %v2404
      %v2618 = vpop.f32.mrb[0].mxu0
      %v2619 = vadd.f32 0.0, %v2618
      %v2620 = vpop.f32.mrb[0].mxu0
      %v2621 = vpop.f32.mrb[0].mxu0
      %v2622 = vadd.f32 0.0, %v2621
      %v2623 = vpop.f32.mrb[0].mxu0
      %2624 = vdwg.mxu0
      %v2625 = vadd.f32 %v2264, %v2450
      %v2626 = vadd.f32 %v2265, %v2452
      %v2627 = vadd.f32 %v2266, %v2563
      %v2628 = vadd.f32 %v2267, %v2454
      %v2629 = vadd.f32 %v2268, %v2456
      %v2630 = vadd.f32 %v2269, %v2566
      %v2631 = vadd.f32 %v2270, %v2460
      %v2632 = vadd.f32 %v2271, %v2462
      %v2633 = vadd.f32 %v2272, %v2571
      %v2634 = vadd.f32 %v2273, %v2464
      %v2635 = vadd.f32 %v2274, %v2466
      %v2636 = vadd.f32 %v2275, %v2574
      %v2637 = vadd.f32 %v2276, %v2470
      %v2638 = vadd.f32 %v2277, %v2472
      %v2639 = vadd.f32 %v2278, %v2579
      %v2640 = vadd.f32 %v2279, %v2474
      %v2641 = vadd.f32 %v2280, %v2476
      %v2642 = vadd.f32 %v2281, %v2582
      %v2643 = vadd.f32 %v2282, %v2480
      %v2644 = vadd.f32 %v2283, %v2482
      %v2645 = vadd.f32 %v2284, %v2587
      %v2646 = vadd.f32 %v2285, %v2484
      %v2647 = vadd.f32 %v2286, %v2486
      %v2648 = vadd.f32 %v2287, %v2590
      %v2649 = vadd.f32 %v2288, %v2490
      %v2650 = vadd.f32 %v2289, %v2492
      %v2651 = vadd.f32 %v2290, %v2595
      %v2652 = vadd.f32 %v2291, %v2494
      %v2653 = vadd.f32 %v2292, %v2496
      %v2654 = vadd.f32 %v2293, %v2598
      %v2655 = vadd.f32 %v2294, %v2500
      %v2656 = vadd.f32 %v2295, %v2502
      %v2657 = vadd.f32 %v2296, %v2603
      %v2658 = vadd.f32 %v2297, %v2504
      %v2659 = vadd.f32 %v2298, %v2506
      %v2660 = vadd.f32 %v2299, %v2606
      %v2661 = vadd.f32 %v2300, %v2510
      %v2662 = vadd.f32 %v2301, %v2512
      %v2663 = vadd.f32 %v2302, %v2611
      %v2664 = vadd.f32 %v2303, %v2514
      %v2665 = vadd.f32 %v2304, %v2516
      %v2666 = vadd.f32 %v2305, %v2614
      %v2667 = vadd.f32 %v2306, %v2520
      %v2668 = vadd.f32 %v2307, %v2522
      %v2669 = vadd.f32 %v2308, %v2619
      %v2670 = vadd.f32 %v2309, %v2524
      %v2671 = vadd.f32 %v2310, %v2526
      %v2672 = vadd.f32 %v2311, %v2622
      %2673 = vrot.lane.b32.xlu0 %v246, 110
      %v2674 = vpop.permute.xlu0 %2673
      %2675 = vrot.lane.b32.xlu0 %v247, 110
      %v2676 = vpop.permute.xlu0 %2675
      %2677 = vrot.lane.b32.xlu0 %v248, 110
      %v2678 = vpop.permute.xlu0 %2677
      %vm2679 = vcmp.lt.s32.totalorder %v256, 110
      %v2680 = vsel %vm2679, %v2676, %v2678
      %v2681 = vsel %vm2679, %v2674, %v2676
      %v2682 = vsel %vm2679, %v2678, %v2674
      %s2683 = scalar_lea.vmem %s0, 448
      %v2684 = vld [vmem:[%s2683] sm:$0xf]
      %v2685 = vld [vmem:[%s2683 + $0x4] sm:$0xf]
      %v2686 = vld [vmem:[%s2683 + $0x8] sm:$0xf]
      %v2687 = vld [vmem:[%s2683 + $0xc] sm:$0xf]
      %v2688 = vld [vmem:[%s2683 + $0x10] sm:$0xf]
      %v2689 = vld [vmem:[%s2683 + $0x14] sm:$0xf]
      %v2690 = vld [vmem:[%s2683 + $0x18] sm:$0xf]
      %v2691 = vld [vmem:[%s2683 + $0x1c] sm:$0xf]
      %v2692 = vld [vmem:[%s2683 + $0x20] sm:$0xf]
      %v2693 = vld [vmem:[%s2683 + $0x24] sm:$0xf]
      %v2694 = vld [vmem:[%s2683 + $0x28] sm:$0xf]
      %v2695 = vld [vmem:[%s2683 + $0x2c] sm:$0xf]
      %v2696 = vld [vmem:[%s2683 + $0x30] sm:$0xf]
      %v2697 = vld [vmem:[%s2683 + $0x34] sm:$0xf]
      %v2698 = vld [vmem:[%s2683 + $0x38] sm:$0xf]
      %v2699 = vld [vmem:[%s2683 + $0x3c] sm:$0xf]
      %v2700 = vpack.c.bf16 %v2681, %v2681
      %v2701 = vpack.c.bf16 %v2680, %v2680
      %v2702 = vpack.c.bf16 %v2682, %v2682
      %v2719 = vunpack.c.l.b16 %v2684
      %v2720 = vunpack.c.l.b16 %v2685
      %v2721 = vunpack.c.l.b16 %v2686
      %v2722 = vunpack.c.l.b16 %v2687
      %v2723 = vunpack.c.l.b16 %v2688
      %v2724 = vunpack.c.l.b16 %v2689
      %v2725 = vunpack.c.l.b16 %v2690
      %v2726 = vunpack.c.l.b16 %v2691
      %v2727 = vunpack.c.l.b16 %v2692
      %v2728 = vunpack.c.l.b16 %v2693
      %v2729 = vunpack.c.l.b16 %v2694
      %v2730 = vunpack.c.l.b16 %v2695
      %v2731 = vunpack.c.l.b16 %v2696
      %v2732 = vunpack.c.l.b16 %v2697
      %v2733 = vunpack.c.l.b16 %v2698
      %v2734 = vunpack.c.l.b16 %v2699
      %v2735 = vpack.c.b16 %v2720, %v2719
      %v2736 = vpack.c.b16 %v2722, %v2721
      %v2737 = vpack.c.b16 %v2724, %v2723
      %v2738 = vpack.c.b16 %v2726, %v2725
      %v2739 = vpack.c.b16 %v2728, %v2727
      %v2740 = vpack.c.b16 %v2730, %v2729
      %v2741 = vpack.c.b16 %v2732, %v2731
      %v2742 = vpack.c.b16 %v2734, %v2733
      %v2744 = vsel %vm350, %v2735, 0
      %v2747 = vsel %vm350, %v2736, 0
      %v2750 = vsel %vm350, %v2737, 0
      %v2753 = vsel %vm350, %v2738, 0
      %v2756 = vsel %vm350, %v2739, 0
      %v2759 = vsel %vm350, %v2740, 0
      %v2762 = vsel %vm350, %v2741, 0
      %v2765 = vsel %vm350, %v2742, 0
      %v2768 = vsel %vm375, %v2700, 0
      %v2771 = vsel %vm375, %v2701, 0
      %v2774 = vsel %vm375, %v2702, 0
      %2776 = vmatprep.subr.bf16.mxu0 %v2771
      %2777 = vmatpush1.bf16.msra.mxu0 %v2768
      %2778 = vmatprep.subr.bf16.mxu0 0
      %2779 = vmatpush1.bf16.msra.mxu0 0
      %2780 = vmatprep.subr.bf16.mxu0 0
      %2781 = vmatpush1.bf16.msra.mxu0 0
      %2782 = vmatprep.subr.bf16.mxu0 0
      %2783 = vmatpush1.bf16.msra.mxu0 0
      %2784 = vmatprep.subr.bf16.mxu0 0
      %2785 = vmatpush1.bf16.msra.mxu0 0
      %2786 = vmatprep.subr.bf16.mxu0 0
      %2787 = vmatpush1.bf16.msra.mxu0 0
      %2788 = vmatprep.subr.bf16.mxu0 0
      %2789 = vmatpush1.bf16.msra.mxu0 0
      %2790 = vmatprep.subr.bf16.mxu0 0
      %2791 = vmatpush1.bf16.msra.mxu0 0
      %2792 = vmatprep.subr.bf16.mxu0 0
      %2793 = vmatpush1.bf16.msra.mxu0 0
      %2794 = vmatprep.subr.bf16.mxu0 0
      %2795 = vmatpush1.bf16.msra.mxu0 0
      %2796 = vmatprep.subr.bf16.mxu0 0
      %2797 = vmatpush1.bf16.msra.mxu0 0
      %2798 = vmatprep.subr.bf16.mxu0 0
      %2799 = vmatpush1.bf16.msra.mxu0 0
      %2800 = vmatprep.subr.bf16.mxu0 0
      %2801 = vmatpush1.bf16.msra.mxu0 0
      %2802 = vmatprep.subr.bf16.mxu0 0
      %2803 = vmatpush1.bf16.msra.mxu0 0
      %2804 = vmatprep.subr.bf16.mxu0 0
      %2805 = vmatpush1.bf16.msra.mxu0 0
      %2806 = vmatprep.subr.bf16.mxu0 0
      %2807 = vmatpush1.bf16.msra.mxu0 0
      %2808 = vmatprep.mubr.bf16.mxu0 0
      %2809 = vmatmul.mubr.bf16.gmra.mrb[0].mxu0 %v2744
      %v2810 = vpop.f32.mrb[0].mxu0
      %v2811 = vadd.f32 0.0, %v2810
      %v2812 = vpop.f32.mrb[0].mxu0
      %v2813 = vadd.f32 0.0, %v2812
      %v2814 = vpop.f32.mrb[0].mxu0
      %v2815 = vadd.f32 0.0, %v2814
      %v2816 = vpop.f32.mrb[0].mxu0
      %v2817 = vadd.f32 0.0, %v2816
      %2818 = vmatprep.mubr.bf16.mxu0 0
      %2819 = vmatmul.mubr.bf16.gmra.mrb[0].mxu0 %v2747
      %v2820 = vpop.f32.mrb[0].mxu0
      %v2821 = vadd.f32 0.0, %v2820
      %v2822 = vpop.f32.mrb[0].mxu0
      %v2823 = vadd.f32 0.0, %v2822
      %v2824 = vpop.f32.mrb[0].mxu0
      %v2825 = vadd.f32 0.0, %v2824
      %v2826 = vpop.f32.mrb[0].mxu0
      %v2827 = vadd.f32 0.0, %v2826
      %2828 = vmatprep.mubr.bf16.mxu0 0
      %2829 = vmatmul.mubr.bf16.gmra.mrb[0].mxu0 %v2750
      %v2830 = vpop.f32.mrb[0].mxu0
      %v2831 = vadd.f32 0.0, %v2830
      %v2832 = vpop.f32.mrb[0].mxu0
      %v2833 = vadd.f32 0.0, %v2832
      %v2834 = vpop.f32.mrb[0].mxu0
      %v2835 = vadd.f32 0.0, %v2834
      %v2836 = vpop.f32.mrb[0].mxu0
      %v2837 = vadd.f32 0.0, %v2836
      %2838 = vmatprep.mubr.bf16.mxu0 0
      %2839 = vmatmul.mubr.bf16.gmra.mrb[0].mxu0 %v2753
      %v2840 = vpop.f32.mrb[0].mxu0
      %v2841 = vadd.f32 0.0, %v2840
      %v2842 = vpop.f32.mrb[0].mxu0
      %v2843 = vadd.f32 0.0, %v2842
      %v2844 = vpop.f32.mrb[0].mxu0
      %v2845 = vadd.f32 0.0, %v2844
      %v2846 = vpop.f32.mrb[0].mxu0
      %v2847 = vadd.f32 0.0, %v2846
      %2848 = vmatprep.mubr.bf16.mxu0 0
      %2849 = vmatmul.mubr.bf16.gmra.mrb[0].mxu0 %v2756
      %v2850 = vpop.f32.mrb[0].mxu0
      %v2851 = vadd.f32 0.0, %v2850
      %v2852 = vpop.f32.mrb[0].mxu0
      %v2853 = vadd.f32 0.0, %v2852
      %v2854 = vpop.f32.mrb[0].mxu0
      %v2855 = vadd.f32 0.0, %v2854
      %v2856 = vpop.f32.mrb[0].mxu0
      %v2857 = vadd.f32 0.0, %v2856
      %2858 = vmatprep.mubr.bf16.mxu0 0
      %2859 = vmatmul.mubr.bf16.gmra.mrb[0].mxu0 %v2759
      %v2860 = vpop.f32.mrb[0].mxu0
      %v2861 = vadd.f32 0.0, %v2860
      %v2862 = vpop.f32.mrb[0].mxu0
      %v2863 = vadd.f32 0.0, %v2862
      %v2864 = vpop.f32.mrb[0].mxu0
      %v2865 = vadd.f32 0.0, %v2864
      %v2866 = vpop.f32.mrb[0].mxu0
      %v2867 = vadd.f32 0.0, %v2866
      %2868 = vmatprep.mubr.bf16.mxu0 0
      %2869 = vmatmul.mubr.bf16.gmra.mrb[0].mxu0 %v2762
      %v2870 = vpop.f32.mrb[0].mxu0
      %v2871 = vadd.f32 0.0, %v2870
      %v2872 = vpop.f32.mrb[0].mxu0
      %v2873 = vadd.f32 0.0, %v2872
      %v2874 = vpop.f32.mrb[0].mxu0
      %v2875 = vadd.f32 0.0, %v2874
      %v2876 = vpop.f32.mrb[0].mxu0
      %v2877 = vadd.f32 0.0, %v2876
      %2878 = vmatprep.mubr.bf16.mxu0 0
      %2879 = vmatmul.mubr.bf16.gmra.mrb[0].mxu0 %v2765
      %v2880 = vpop.f32.mrb[0].mxu0
      %v2881 = vadd.f32 0.0, %v2880
      %v2882 = vpop.f32.mrb[0].mxu0
      %v2883 = vadd.f32 0.0, %v2882
      %v2884 = vpop.f32.mrb[0].mxu0
      %v2885 = vadd.f32 0.0, %v2884
      %v2886 = vpop.f32.mrb[0].mxu0
      %v2887 = vadd.f32 0.0, %v2886
      %2888 = vdwg.mxu0
      %2889 = vmatprep.subr.bf16.mxu0 0
      %2890 = vmatpush1.bf16.msra.mxu0 %v2774
      %2891 = vmatprep.subr.bf16.mxu0 0
      %2892 = vmatpush1.bf16.msra.mxu0 0
      %2893 = vmatprep.subr.bf16.mxu0 0
      %2894 = vmatpush1.bf16.msra.mxu0 0
      %2895 = vmatprep.subr.bf16.mxu0 0
      %2896 = vmatpush1.bf16.msra.mxu0 0
      %2897 = vmatprep.subr.bf16.mxu0 0
      %2898 = vmatpush1.bf16.msra.mxu0 0
      %2899 = vmatprep.subr.bf16.mxu0 0
      %2900 = vmatpush1.bf16.msra.mxu0 0
      %2901 = vmatprep.subr.bf16.mxu0 0
      %2902 = vmatpush1.bf16.msra.mxu0 0
      %2903 = vmatprep.subr.bf16.mxu0 0
      %2904 = vmatpush1.bf16.msra.mxu0 0
      %2905 = vmatprep.subr.bf16.mxu0 0
      %2906 = vmatpush1.bf16.msra.mxu0 0
      %2907 = vmatprep.subr.bf16.mxu0 0
      %2908 = vmatpush1.bf16.msra.mxu0 0
      %2909 = vmatprep.subr.bf16.mxu0 0
      %2910 = vmatpush1.bf16.msra.mxu0 0
      %2911 = vmatprep.subr.bf16.mxu0 0
      %2912 = vmatpush1.bf16.msra.mxu0 0
      %2913 = vmatprep.subr.bf16.mxu0 0
      %2914 = vmatpush1.bf16.msra.mxu0 0
      %2915 = vmatprep.subr.bf16.mxu0 0
      %2916 = vmatpush1.bf16.msra.mxu0 0
      %2917 = vmatprep.subr.bf16.mxu0 0
      %2918 = vmatpush1.bf16.msra.mxu0 0
      %2919 = vmatprep.subr.bf16.mxu0 0
      %2920 = vmatpush1.bf16.msra.mxu0 0
      %2921 = vmatprep.mubr.bf16.mxu0 0
      %2922 = vmatmul.mubr.bf16.gmra.mrb[0].mxu0 %v2744
      %v2923 = vpop.f32.mrb[0].mxu0
      %v2924 = vadd.f32 0.0, %v2923
      %v2925 = vpop.f32.mrb[0].mxu0
      %v2926 = vpop.f32.mrb[0].mxu0
      %v2927 = vadd.f32 0.0, %v2926
      %v2928 = vpop.f32.mrb[0].mxu0
      %2929 = vmatprep.mubr.bf16.mxu0 0
      %2930 = vmatmul.mubr.bf16.gmra.mrb[0].mxu0 %v2747
      %v2931 = vpop.f32.mrb[0].mxu0
      %v2932 = vadd.f32 0.0, %v2931
      %v2933 = vpop.f32.mrb[0].mxu0
      %v2934 = vpop.f32.mrb[0].mxu0
      %v2935 = vadd.f32 0.0, %v2934
      %v2936 = vpop.f32.mrb[0].mxu0
      %2937 = vmatprep.mubr.bf16.mxu0 0
      %2938 = vmatmul.mubr.bf16.gmra.mrb[0].mxu0 %v2750
      %v2939 = vpop.f32.mrb[0].mxu0
      %v2940 = vadd.f32 0.0, %v2939
      %v2941 = vpop.f32.mrb[0].mxu0
      %v2942 = vpop.f32.mrb[0].mxu0
      %v2943 = vadd.f32 0.0, %v2942
      %v2944 = vpop.f32.mrb[0].mxu0
      %2945 = vmatprep.mubr.bf16.mxu0 0
      %2946 = vmatmul.mubr.bf16.gmra.mrb[0].mxu0 %v2753
      %v2947 = vpop.f32.mrb[0].mxu0
      %v2948 = vadd.f32 0.0, %v2947
      %v2949 = vpop.f32.mrb[0].mxu0
      %v2950 = vpop.f32.mrb[0].mxu0
      %v2951 = vadd.f32 0.0, %v2950
      %v2952 = vpop.f32.mrb[0].mxu0
      %2953 = vmatprep.mubr.bf16.mxu0 0
      %2954 = vmatmul.mubr.bf16.gmra.mrb[0].mxu0 %v2756
      %v2955 = vpop.f32.mrb[0].mxu0
      %v2956 = vadd.f32 0.0, %v2955
      %v2957 = vpop.f32.mrb[0].mxu0
      %v2958 = vpop.f32.mrb[0].mxu0
      %v2959 = vadd.f32 0.0, %v2958
      %v2960 = vpop.f32.mrb[0].mxu0
      %2961 = vmatprep.mubr.bf16.mxu0 0
      %2962 = vmatmul.mubr.bf16.gmra.mrb[0].mxu0 %v2759
      %v2963 = vpop.f32.mrb[0].mxu0
      %v2964 = vadd.f32 0.0, %v2963
      %v2965 = vpop.f32.mrb[0].mxu0
      %v2966 = vpop.f32.mrb[0].mxu0
      %v2967 = vadd.f32 0.0, %v2966
      %v2968 = vpop.f32.mrb[0].mxu0
      %2969 = vmatprep.mubr.bf16.mxu0 0
      %2970 = vmatmul.mubr.bf16.gmra.mrb[0].mxu0 %v2762
      %v2971 = vpop.f32.mrb[0].mxu0
      %v2972 = vadd.f32 0.0, %v2971
      %v2973 = vpop.f32.mrb[0].mxu0
      %v2974 = vpop.f32.mrb[0].mxu0
      %v2975 = vadd.f32 0.0, %v2974
      %v2976 = vpop.f32.mrb[0].mxu0
      %2977 = vmatprep.mubr.bf16.mxu0 0
      %2978 = vmatmul.mubr.bf16.gmra.mrb[0].mxu0 %v2765
      %v2979 = vpop.f32.mrb[0].mxu0
      %v2980 = vadd.f32 0.0, %v2979
      %v2981 = vpop.f32.mrb[0].mxu0
      %v2982 = vpop.f32.mrb[0].mxu0
      %v2983 = vadd.f32 0.0, %v2982
      %v2984 = vpop.f32.mrb[0].mxu0
      %2985 = vdwg.mxu0
      %v2986 = vadd.f32 %v2625, %v2811
      %v2987 = vadd.f32 %v2626, %v2813
      %v2988 = vadd.f32 %v2627, %v2924
      %v2989 = vadd.f32 %v2628, %v2815
      %v2990 = vadd.f32 %v2629, %v2817
      %v2991 = vadd.f32 %v2630, %v2927
      %v2992 = vadd.f32 %v2631, %v2821
      %v2993 = vadd.f32 %v2632, %v2823
      %v2994 = vadd.f32 %v2633, %v2932
      %v2995 = vadd.f32 %v2634, %v2825
      %v2996 = vadd.f32 %v2635, %v2827
      %v2997 = vadd.f32 %v2636, %v2935
      %v2998 = vadd.f32 %v2637, %v2831
      %v2999 = vadd.f32 %v2638, %v2833
      %v3000 = vadd.f32 %v2639, %v2940
      %v3001 = vadd.f32 %v2640, %v2835
      %v3002 = vadd.f32 %v2641, %v2837
      %v3003 = vadd.f32 %v2642, %v2943
      %v3004 = vadd.f32 %v2643, %v2841
      %v3005 = vadd.f32 %v2644, %v2843
      %v3006 = vadd.f32 %v2645, %v2948
      %v3007 = vadd.f32 %v2646, %v2845
      %v3008 = vadd.f32 %v2647, %v2847
      %v3009 = vadd.f32 %v2648, %v2951
      %v3010 = vadd.f32 %v2649, %v2851
      %v3011 = vadd.f32 %v2650, %v2853
      %v3012 = vadd.f32 %v2651, %v2956
      %v3013 = vadd.f32 %v2652, %v2855
      %v3014 = vadd.f32 %v2653, %v2857
      %v3015 = vadd.f32 %v2654, %v2959
      %v3016 = vadd.f32 %v2655, %v2861
      %v3017 = vadd.f32 %v2656, %v2863
      %v3018 = vadd.f32 %v2657, %v2964
      %v3019 = vadd.f32 %v2658, %v2865
      %v3020 = vadd.f32 %v2659, %v2867
      %v3021 = vadd.f32 %v2660, %v2967
      %v3022 = vadd.f32 %v2661, %v2871
      %v3023 = vadd.f32 %v2662, %v2873
      %v3024 = vadd.f32 %v2663, %v2972
      %v3025 = vadd.f32 %v2664, %v2875
      %v3026 = vadd.f32 %v2665, %v2877
      %v3027 = vadd.f32 %v2666, %v2975
      %v3028 = vadd.f32 %v2667, %v2881
      %v3029 = vadd.f32 %v2668, %v2883
      %v3030 = vadd.f32 %v2669, %v2980
      %v3031 = vadd.f32 %v2670, %v2885
      %v3032 = vadd.f32 %v2671, %v2887
      %v3033 = vadd.f32 %v2672, %v2983
      %3034 = vrot.lane.b32.xlu0 %v246, 109
      %v3035 = vpop.permute.xlu0 %3034
      %3036 = vrot.lane.b32.xlu0 %v247, 109
      %v3037 = vpop.permute.xlu0 %3036
      %3038 = vrot.lane.b32.xlu0 %v248, 109
      %v3039 = vpop.permute.xlu0 %3038
      %vm3040 = vcmp.lt.s32.totalorder %v256, 109
      %v3041 = vsel %vm3040, %v3037, %v3039
      %v3042 = vsel %vm3040, %v3035, %v3037
      %v3043 = vsel %vm3040, %v3039, %v3035
      %s3044 = scalar_lea.vmem %s0, 512
      %v3045 = vld [vmem:[%s3044] sm:$0xf]
      %v3046 = vld [vmem:[%s3044 + $0x4] sm:$0xf]
      %v3047 = vld [vmem:[%s3044 + $0x8] sm:$0xf]
      %v3048 = vld [vmem:[%s3044 + $0xc] sm:$0xf]
      %v3049 = vld [vmem:[%s3044 + $0x10] sm:$0xf]
      %v3050 = vld [vmem:[%s3044 + $0x14] sm:$0xf]
      %v3051 = vld [vmem:[%s3044 + $0x18] sm:$0xf]
      %v3052 = vld [vmem:[%s3044 + $0x1c] sm:$0xf]
      %v3053 = vld [vmem:[%s3044 + $0x20] sm:$0xf]
      %v3054 = vld [vmem:[%s3044 + $0x24] sm:$0xf]
      %v3055 = vld [vmem:[%s3044 + $0x28] sm:$0xf]
      %v3056 = vld [vmem:[%s3044 + $0x2c] sm:$0xf]
      %v3057 = vld [vmem:[%s3044 + $0x30] sm:$0xf]
      %v3058 = vld [vmem:[%s3044 + $0x34] sm:$0xf]
      %v3059 = vld [vmem:[%s3044 + $0x38] sm:$0xf]
      %v3060 = vld [vmem:[%s3044 + $0x3c] sm:$0xf]
      %v3061 = vpack.c.bf16 %v3042, %v3042
      %v3062 = vpack.c.bf16 %v3041, %v3041
      %v3063 = vpack.c.bf16 %v3043, %v3043
      %v3080 = vunpack.c.l.b16 %v3045
      %v3081 = vunpack.c.l.b16 %v3046
      %v3082 = vunpack.c.l.b16 %v3047
      %v3083 = vunpack.c.l.b16 %v3048
      %v3084 = vunpack.c.l.b16 %v3049
      %v3085 = vunpack.c.l.b16 %v3050
      %v3086 = vunpack.c.l.b16 %v3051
      %v3087 = vunpack.c.l.b16 %v3052
      %v3088 = vunpack.c.l.b16 %v3053
      %v3089 = vunpack.c.l.b16 %v3054
      %v3090 = vunpack.c.l.b16 %v3055
      %v3091 = vunpack.c.l.b16 %v3056
      %v3092 = vunpack.c.l.b16 %v3057
      %v3093 = vunpack.c.l.b16 %v3058
      %v3094 = vunpack.c.l.b16 %v3059
      %v3095 = vunpack.c.l.b16 %v3060
      %v3096 = vpack.c.b16 %v3081, %v3080
      %v3097 = vpack.c.b16 %v3083, %v3082
      %v3098 = vpack.c.b16 %v3085, %v3084
      %v3099 = vpack.c.b16 %v3087, %v3086
      %v3100 = vpack.c.b16 %v3089, %v3088
      %v3101 = vpack.c.b16 %v3091, %v3090
      %v3102 = vpack.c.b16 %v3093, %v3092
      %v3103 = vpack.c.b16 %v3095, %v3094
      %v3105 = vsel %vm350, %v3096, 0
      %v3108 = vsel %vm350, %v3097, 0
      %v3111 = vsel %vm350, %v3098, 0
      %v3114 = vsel %vm350, %v3099, 0
      %v3117 = vsel %vm350, %v3100, 0
      %v3120 = vsel %vm350, %v3101, 0
      %v3123 = vsel %vm350, %v3102, 0
      %v3126 = vsel %vm350, %v3103, 0
      %v3129 = vsel %vm375, %v3061, 0
      %v3132 = vsel %vm375, %v3062, 0
      %v3135 = vsel %vm375, %v3063, 0
      %3137 = vmatprep.subr.bf16.mxu0 %v3132
      %3138 = vmatpush1.bf16.msra.mxu0 %v3129
      %3139 = vmatprep.subr.bf16.mxu0 0
      %3140 = vmatpush1.bf16.msra.mxu0 0
      %3141 = vmatprep.subr.bf16.mxu0 0
      %3142 = vmatpush1.bf16.msra.mxu0 0
      %3143 = vmatprep.subr.bf16.mxu0 0
      %3144 = vmatpush1.bf16.msra.mxu0 0
      %3145 = vmatprep.subr.bf16.mxu0 0
      %3146 = vmatpush1.bf16.msra.mxu0 0
      %3147 = vmatprep.subr.bf16.mxu0 0
      %3148 = vmatpush1.bf16.msra.mxu0 0
      %3149 = vmatprep.subr.bf16.mxu0 0
      %3150 = vmatpush1.bf16.msra.mxu0 0
      %3151 = vmatprep.subr.bf16.mxu0 0
      %3152 = vmatpush1.bf16.msra.mxu0 0
      %3153 = vmatprep.subr.bf16.mxu0 0
      %3154 = vmatpush1.bf16.msra.mxu0 0
      %3155 = vmatprep.subr.bf16.mxu0 0
      %3156 = vmatpush1.bf16.msra.mxu0 0
      %3157 = vmatprep.subr.bf16.mxu0 0
      %3158 = vmatpush1.bf16.msra.mxu0 0
      %3159 = vmatprep.subr.bf16.mxu0 0
      %3160 = vmatpush1.bf16.msra.mxu0 0
      %3161 = vmatprep.subr.bf16.mxu0 0
      %3162 = vmatpush1.bf16.msra.mxu0 0
      %3163 = vmatprep.subr.bf16.mxu0 0
      %3164 = vmatpush1.bf16.msra.mxu0 0
      %3165 = vmatprep.subr.bf16.mxu0 0
      %3166 = vmatpush1.bf16.msra.mxu0 0
      %3167 = vmatprep.subr.bf16.mxu0 0
      %3168 = vmatpush1.bf16.msra.mxu0 0
      %3169 = vmatprep.mubr.bf16.mxu0 0
      %3170 = vmatmul.mubr.bf16.gmra.mrb[0].mxu0 %v3105
      %v3171 = vpop.f32.mrb[0].mxu0
      %v3172 = vadd.f32 0.0, %v3171
      %v3173 = vpop.f32.mrb[0].mxu0
      %v3174 = vadd.f32 0.0, %v3173
      %v3175 = vpop.f32.mrb[0].mxu0
      %v3176 = vadd.f32 0.0, %v3175
      %v3177 = vpop.f32.mrb[0].mxu0
      %v3178 = vadd.f32 0.0, %v3177
      %3179 = vmatprep.mubr.bf16.mxu0 0
      %3180 = vmatmul.mubr.bf16.gmra.mrb[0].mxu0 %v3108
      %v3181 = vpop.f32.mrb[0].mxu0
      %v3182 = vadd.f32 0.0, %v3181
      %v3183 = vpop.f32.mrb[0].mxu0
      %v3184 = vadd.f32 0.0, %v3183
      %v3185 = vpop.f32.mrb[0].mxu0
      %v3186 = vadd.f32 0.0, %v3185
      %v3187 = vpop.f32.mrb[0].mxu0
      %v3188 = vadd.f32 0.0, %v3187
      %3189 = vmatprep.mubr.bf16.mxu0 0
      %3190 = vmatmul.mubr.bf16.gmra.mrb[0].mxu0 %v3111
      %v3191 = vpop.f32.mrb[0].mxu0
      %v3192 = vadd.f32 0.0, %v3191
      %v3193 = vpop.f32.mrb[0].mxu0
      %v3194 = vadd.f32 0.0, %v3193
      %v3195 = vpop.f32.mrb[0].mxu0
      %v3196 = vadd.f32 0.0, %v3195
      %v3197 = vpop.f32.mrb[0].mxu0
      %v3198 = vadd.f32 0.0, %v3197
      %3199 = vmatprep.mubr.bf16.mxu0 0
      %3200 = vmatmul.mubr.bf16.gmra.mrb[0].mxu0 %v3114
      %v3201 = vpop.f32.mrb[0].mxu0
      %v3202 = vadd.f32 0.0, %v3201
      %v3203 = vpop.f32.mrb[0].mxu0
      %v3204 = vadd.f32 0.0, %v3203
      %v3205 = vpop.f32.mrb[0].mxu0
      %v3206 = vadd.f32 0.0, %v3205
      %v3207 = vpop.f32.mrb[0].mxu0
      %v3208 = vadd.f32 0.0, %v3207
      %3209 = vmatprep.mubr.bf16.mxu0 0
      %3210 = vmatmul.mubr.bf16.gmra.mrb[0].mxu0 %v3117
      %v3211 = vpop.f32.mrb[0].mxu0
      %v3212 = vadd.f32 0.0, %v3211
      %v3213 = vpop.f32.mrb[0].mxu0
      %v3214 = vadd.f32 0.0, %v3213
      %v3215 = vpop.f32.mrb[0].mxu0
      %v3216 = vadd.f32 0.0, %v3215
      %v3217 = vpop.f32.mrb[0].mxu0
      %v3218 = vadd.f32 0.0, %v3217
      %3219 = vmatprep.mubr.bf16.mxu0 0
      %3220 = vmatmul.mubr.bf16.gmra.mrb[0].mxu0 %v3120
      %v3221 = vpop.f32.mrb[0].mxu0
      %v3222 = vadd.f32 0.0, %v3221
      %v3223 = vpop.f32.mrb[0].mxu0
      %v3224 = vadd.f32 0.0, %v3223
      %v3225 = vpop.f32.mrb[0].mxu0
      %v3226 = vadd.f32 0.0, %v3225
      %v3227 = vpop.f32.mrb[0].mxu0
      %v3228 = vadd.f32 0.0, %v3227
      %3229 = vmatprep.mubr.bf16.mxu0 0
      %3230 = vmatmul.mubr.bf16.gmra.mrb[0].mxu0 %v3123
      %v3231 = vpop.f32.mrb[0].mxu0
      %v3232 = vadd.f32 0.0, %v3231
      %v3233 = vpop.f32.mrb[0].mxu0
      %v3234 = vadd.f32 0.0, %v3233
      %v3235 = vpop.f32.mrb[0].mxu0
      %v3236 = vadd.f32 0.0, %v3235
      %v3237 = vpop.f32.mrb[0].mxu0
      %v3238 = vadd.f32 0.0, %v3237
      %3239 = vmatprep.mubr.bf16.mxu0 0
      %3240 = vmatmul.mubr.bf16.gmra.mrb[0].mxu0 %v3126
      %v3241 = vpop.f32.mrb[0].mxu0
      %v3242 = vadd.f32 0.0, %v3241
      %v3243 = vpop.f32.mrb[0].mxu0
      %v3244 = vadd.f32 0.0, %v3243
      %v3245 = vpop.f32.mrb[0].mxu0
      %v3246 = vadd.f32 0.0, %v3245
      %v3247 = vpop.f32.mrb[0].mxu0
      %v3248 = vadd.f32 0.0, %v3247
      %3249 = vdwg.mxu0
      %3250 = vmatprep.subr.bf16.mxu0 0
      %3251 = vmatpush1.bf16.msra.mxu0 %v3135
      %3252 = vmatprep.subr.bf16.mxu0 0
      %3253 = vmatpush1.bf16.msra.mxu0 0
      %3254 = vmatprep.subr.bf16.mxu0 0
      %3255 = vmatpush1.bf16.msra.mxu0 0
      %3256 = vmatprep.subr.bf16.mxu0 0
      %3257 = vmatpush1.bf16.msra.mxu0 0
      %3258 = vmatprep.subr.bf16.mxu0 0
      %3259 = vmatpush1.bf16.msra.mxu0 0
      %3260 = vmatprep.subr.bf16.mxu0 0
      %3261 = vmatpush1.bf16.msra.mxu0 0
      %3262 = vmatprep.subr.bf16.mxu0 0
      %3263 = vmatpush1.bf16.msra.mxu0 0
      %3264 = vmatprep.subr.bf16.mxu0 0
      %3265 = vmatpush1.bf16.msra.mxu0 0
      %3266 = vmatprep.subr.bf16.mxu0 0
      %3267 = vmatpush1.bf16.msra.mxu0 0
      %3268 = vmatprep.subr.bf16.mxu0 0
      %3269 = vmatpush1.bf16.msra.mxu0 0
      %3270 = vmatprep.subr.bf16.mxu0 0
      %3271 = vmatpush1.bf16.msra.mxu0 0
      %3272 = vmatprep.subr.bf16.mxu0 0
      %3273 = vmatpush1.bf16.msra.mxu0 0
      %3274 = vmatprep.subr.bf16.mxu0 0
      %3275 = vmatpush1.bf16.msra.mxu0 0
      %3276 = vmatprep.subr.bf16.mxu0 0
      %3277 = vmatpush1.bf16.msra.mxu0 0
      %3278 = vmatprep.subr.bf16.mxu0 0
      %3279 = vmatpush1.bf16.msra.mxu0 0
      %3280 = vmatprep.subr.bf16.mxu0 0
      %3281 = vmatpush1.bf16.msra.mxu0 0
      %3282 = vmatprep.mubr.bf16.mxu0 0
      %3283 = vmatmul.mubr.bf16.gmra.mrb[0].mxu0 %v3105
      %v3284 = vpop.f32.mrb[0].mxu0
      %v3285 = vadd.f32 0.0, %v3284
      %v3286 = vpop.f32.mrb[0].mxu0
      %v3287 = vpop.f32.mrb[0].mxu0
      %v3288 = vadd.f32 0.0, %v3287
      %v3289 = vpop.f32.mrb[0].mxu0
      %3290 = vmatprep.mubr.bf16.mxu0 0
      %3291 = vmatmul.mubr.bf16.gmra.mrb[0].mxu0 %v3108
      %v3292 = vpop.f32.mrb[0].mxu0
      %v3293 = vadd.f32 0.0, %v3292
      %v3294 = vpop.f32.mrb[0].mxu0
      %v3295 = vpop.f32.mrb[0].mxu0
      %v3296 = vadd.f32 0.0, %v3295
      %v3297 = vpop.f32.mrb[0].mxu0
      %3298 = vmatprep.mubr.bf16.mxu0 0
      %3299 = vmatmul.mubr.bf16.gmra.mrb[0].mxu0 %v3111
      %v3300 = vpop.f32.mrb[0].mxu0
      %v3301 = vadd.f32 0.0, %v3300
      %v3302 = vpop.f32.mrb[0].mxu0
      %v3303 = vpop.f32.mrb[0].mxu0
      %v3304 = vadd.f32 0.0, %v3303
      %v3305 = vpop.f32.mrb[0].mxu0
      %3306 = vmatprep.mubr.bf16.mxu0 0
      %3307 = vmatmul.mubr.bf16.gmra.mrb[0].mxu0 %v3114
      %v3308 = vpop.f32.mrb[0].mxu0
      %v3309 = vadd.f32 0.0, %v3308
      %v3310 = vpop.f32.mrb[0].mxu0
      %v3311 = vpop.f32.mrb[0].mxu0
      %v3312 = vadd.f32 0.0, %v3311
      %v3313 = vpop.f32.mrb[0].mxu0
      %3314 = vmatprep.mubr.bf16.mxu0 0
      %3315 = vmatmul.mubr.bf16.gmra.mrb[0].mxu0 %v3117
      %v3316 = vpop.f32.mrb[0].mxu0
      %v3317 = vadd.f32 0.0, %v3316
      %v3318 = vpop.f32.mrb[0].mxu0
      %v3319 = vpop.f32.mrb[0].mxu0
      %v3320 = vadd.f32 0.0, %v3319
      %v3321 = vpop.f32.mrb[0].mxu0
      %3322 = vmatprep.mubr.bf16.mxu0 0
      %3323 = vmatmul.mubr.bf16.gmra.mrb[0].mxu0 %v3120
      %v3324 = vpop.f32.mrb[0].mxu0
      %v3325 = vadd.f32 0.0, %v3324
      %v3326 = vpop.f32.mrb[0].mxu0
      %v3327 = vpop.f32.mrb[0].mxu0
      %v3328 = vadd.f32 0.0, %v3327
      %v3329 = vpop.f32.mrb[0].mxu0
      %3330 = vmatprep.mubr.bf16.mxu0 0
      %3331 = vmatmul.mubr.bf16.gmra.mrb[0].mxu0 %v3123
      %v3332 = vpop.f32.mrb[0].mxu0
      %v3333 = vadd.f32 0.0, %v3332
      %v3334 = vpop.f32.mrb[0].mxu0
      %v3335 = vpop.f32.mrb[0].mxu0
      %v3336 = vadd.f32 0.0, %v3335
      %v3337 = vpop.f32.mrb[0].mxu0
      %3338 = vmatprep.mubr.bf16.mxu0 0
      %3339 = vmatmul.mubr.bf16.gmra.mrb[0].mxu0 %v3126
      %v3340 = vpop.f32.mrb[0].mxu0
      %v3341 = vadd.f32 0.0, %v3340
      %v3342 = vpop.f32.mrb[0].mxu0
      %v3343 = vpop.f32.mrb[0].mxu0
      %v3344 = vadd.f32 0.0, %v3343
      %v3345 = vpop.f32.mrb[0].mxu0
      %3346 = vdwg.mxu0
      %v3347 = vadd.f32 %v2986, %v3172
      %v3348 = vadd.f32 %v2987, %v3174
      %v3349 = vadd.f32 %v2988, %v3285
      %v3350 = vadd.f32 %v2989, %v3176
      %v3351 = vadd.f32 %v2990, %v3178
      %v3352 = vadd.f32 %v2991, %v3288
      %v3353 = vadd.f32 %v2992, %v3182
      %v3354 = vadd.f32 %v2993, %v3184
      %v3355 = vadd.f32 %v2994, %v3293
      %v3356 = vadd.f32 %v2995, %v3186
      %v3357 = vadd.f32 %v2996, %v3188
      %v3358 = vadd.f32 %v2997, %v3296
      %v3359 = vadd.f32 %v2998, %v3192
      %v3360 = vadd.f32 %v2999, %v3194
      %v3361 = vadd.f32 %v3000, %v3301
      %v3362 = vadd.f32 %v3001, %v3196
      %v3363 = vadd.f32 %v3002, %v3198
      %v3364 = vadd.f32 %v3003, %v3304
      %v3365 = vadd.f32 %v3004, %v3202
      %v3366 = vadd.f32 %v3005, %v3204
      %v3367 = vadd.f32 %v3006, %v3309
      %v3368 = vadd.f32 %v3007, %v3206
      %v3369 = vadd.f32 %v3008, %v3208
      %v3370 = vadd.f32 %v3009, %v3312
      %v3371 = vadd.f32 %v3010, %v3212
      %v3372 = vadd.f32 %v3011, %v3214
      %v3373 = vadd.f32 %v3012, %v3317
      %v3374 = vadd.f32 %v3013, %v3216
      %v3375 = vadd.f32 %v3014, %v3218
      %v3376 = vadd.f32 %v3015, %v3320
      %v3377 = vadd.f32 %v3016, %v3222
      %v3378 = vadd.f32 %v3017, %v3224
      %v3379 = vadd.f32 %v3018, %v3325
      %v3380 = vadd.f32 %v3019, %v3226
      %v3381 = vadd.f32 %v3020, %v3228
      %v3382 = vadd.f32 %v3021, %v3328
      %v3383 = vadd.f32 %v3022, %v3232
      %v3384 = vadd.f32 %v3023, %v3234
      %v3385 = vadd.f32 %v3024, %v3333
      %v3386 = vadd.f32 %v3025, %v3236
      %v3387 = vadd.f32 %v3026, %v3238
      %v3388 = vadd.f32 %v3027, %v3336
      %v3389 = vadd.f32 %v3028, %v3242
      %v3390 = vadd.f32 %v3029, %v3244
      %v3391 = vadd.f32 %v3030, %v3341
      %v3392 = vadd.f32 %v3031, %v3246
      %v3393 = vadd.f32 %v3032, %v3248
      %v3394 = vadd.f32 %v3033, %v3344
      %v3395 = vld [vmem:[%s2] sm:$0x7]
      %v3397 = vlaneseq
      %v3398 = vshrl.u32 %v3397, 7
      %v3399 = vsub.s32 0, %v3398
      %v3400 = vrot.slane %v3395, %v3399
      %v3401 = vlaneseq
      %v3402 = vshrl.u32 %v3401, 7
      %v3403 = vsub.s32 1, %v3402
      %v3404 = vrot.slane %v3395, %v3403
      %v3405 = vlaneseq
      %v3406 = vshrl.u32 %v3405, 7
      %v3407 = vsub.s32 2, %v3406
      %v3408 = vrot.slane %v3395, %v3407
      %v3412 = vmul.f32 %v3347, %v3400
      %v3413 = vmul.f32 %v3348, %v3404
      %v3414 = vmul.f32 %v3349, %v3408
      %v3415 = vmul.f32 %v3350, %v3400
      %v3416 = vmul.f32 %v3351, %v3404
      %v3417 = vmul.f32 %v3352, %v3408
      %v3418 = vmul.f32 %v3353, %v3400
      %v3419 = vmul.f32 %v3354, %v3404
      %v3420 = vmul.f32 %v3355, %v3408
      %v3421 = vmul.f32 %v3356, %v3400
      %v3422 = vmul.f32 %v3357, %v3404
      %v3423 = vmul.f32 %v3358, %v3408
      %v3424 = vmul.f32 %v3359, %v3400
      %v3425 = vmul.f32 %v3360, %v3404
      %v3426 = vmul.f32 %v3361, %v3408
      %v3427 = vmul.f32 %v3362, %v3400
      %v3428 = vmul.f32 %v3363, %v3404
      %v3429 = vmul.f32 %v3364, %v3408
      %v3430 = vmul.f32 %v3365, %v3400
      %v3431 = vmul.f32 %v3366, %v3404
      %v3432 = vmul.f32 %v3367, %v3408
      %v3433 = vmul.f32 %v3368, %v3400
      %v3434 = vmul.f32 %v3369, %v3404
      %v3435 = vmul.f32 %v3370, %v3408
      %v3436 = vmul.f32 %v3371, %v3400
      %v3437 = vmul.f32 %v3372, %v3404
      %v3438 = vmul.f32 %v3373, %v3408
      %v3439 = vmul.f32 %v3374, %v3400
      %v3440 = vmul.f32 %v3375, %v3404
      %v3441 = vmul.f32 %v3376, %v3408
      %v3442 = vmul.f32 %v3377, %v3400
      %v3443 = vmul.f32 %v3378, %v3404
      %v3444 = vmul.f32 %v3379, %v3408
      %v3445 = vmul.f32 %v3380, %v3400
      %v3446 = vmul.f32 %v3381, %v3404
      %v3447 = vmul.f32 %v3382, %v3408
      %v3448 = vmul.f32 %v3383, %v3400
      %v3449 = vmul.f32 %v3384, %v3404
      %v3450 = vmul.f32 %v3385, %v3408
      %v3451 = vmul.f32 %v3386, %v3400
      %v3452 = vmul.f32 %v3387, %v3404
      %v3453 = vmul.f32 %v3388, %v3408
      %v3454 = vmul.f32 %v3389, %v3400
      %v3455 = vmul.f32 %v3390, %v3404
      %v3456 = vmul.f32 %v3391, %v3408
      %v3457 = vmul.f32 %v3392, %v3400
      %v3458 = vmul.f32 %v3393, %v3404
      %v3459 = vmul.f32 %v3394, %v3408
      %v3460 = vpack.c.bf16 %v3415, %v3412
      %v3461 = vpack.c.bf16 %v3416, %v3413
      %v3462 = vpack.c.bf16 %v3417, %v3414
      %v3463 = vpack.c.bf16 %v3421, %v3418
      %v3464 = vpack.c.bf16 %v3422, %v3419
      %v3465 = vpack.c.bf16 %v3423, %v3420
      %v3466 = vpack.c.bf16 %v3427, %v3424
      %v3467 = vpack.c.bf16 %v3428, %v3425
      %v3468 = vpack.c.bf16 %v3429, %v3426
      %v3469 = vpack.c.bf16 %v3433, %v3430
      %v3470 = vpack.c.bf16 %v3434, %v3431
      %v3471 = vpack.c.bf16 %v3435, %v3432
      %v3472 = vpack.c.bf16 %v3439, %v3436
      %v3473 = vpack.c.bf16 %v3440, %v3437
      %v3474 = vpack.c.bf16 %v3441, %v3438
      %v3475 = vpack.c.bf16 %v3445, %v3442
      %v3476 = vpack.c.bf16 %v3446, %v3443
      %v3477 = vpack.c.bf16 %v3447, %v3444
      %v3478 = vpack.c.bf16 %v3451, %v3448
      %v3479 = vpack.c.bf16 %v3452, %v3449
      %v3480 = vpack.c.bf16 %v3453, %v3450
      %v3481 = vpack.c.bf16 %v3457, %v3454
      %v3482 = vpack.c.bf16 %v3458, %v3455
      %v3483 = vpack.c.bf16 %v3459, %v3456
      %v3484 = vld [vmem:[%s1] sm:$0xf]
      %v3485 = vld [vmem:[%s1 + $0x4] sm:$0xf]
      %v3488 = vunpack.c.l.b16 %v3484
      %v3489 = vunpack.c.l.b16 %v3485
      %v3490 = vpack.c.b16 %v3489, %v3488
      %3492 = vmatprep.subr.bf16.mxu0 %v3461
      %3493 = vmatpush1.bf16.msra.mxu0 %v3460
      %3494 = vmatprep.subr.bf16.mxu0 %v3464
      %3495 = vmatpush1.bf16.msra.mxu0 %v3463
      %3496 = vmatprep.subr.bf16.mxu0 %v3467
      %3497 = vmatpush1.bf16.msra.mxu0 %v3466
      %3498 = vmatprep.subr.bf16.mxu0 %v3470
      %3499 = vmatpush1.bf16.msra.mxu0 %v3469
      %3500 = vmatprep.subr.bf16.mxu0 %v3473
      %3501 = vmatpush1.bf16.msra.mxu0 %v3472
      %3502 = vmatprep.subr.bf16.mxu0 %v3476
      %3503 = vmatpush1.bf16.msra.mxu0 %v3475
      %3504 = vmatprep.subr.bf16.mxu0 %v3479
      %3505 = vmatpush1.bf16.msra.mxu0 %v3478
      %3506 = vmatprep.subr.bf16.mxu0 %v3482
      %3507 = vmatpush1.bf16.msra.mxu0 %v3481
      %3508 = vmatprep.subr.bf16.mxu0 0
      %3509 = vmatpush1.bf16.msra.mxu0 0
      %3510 = vmatprep.subr.bf16.mxu0 0
      %3511 = vmatpush1.bf16.msra.mxu0 0
      %3512 = vmatprep.subr.bf16.mxu0 0
      %3513 = vmatpush1.bf16.msra.mxu0 0
      %3514 = vmatprep.subr.bf16.mxu0 0
      %3515 = vmatpush1.bf16.msra.mxu0 0
      %3516 = vmatprep.subr.bf16.mxu0 0
      %3517 = vmatpush1.bf16.msra.mxu0 0
      %3518 = vmatprep.subr.bf16.mxu0 0
      %3519 = vmatpush1.bf16.msra.mxu0 0
      %3520 = vmatprep.subr.bf16.mxu0 0
      %3521 = vmatpush1.bf16.msra.mxu0 0
      %3522 = vmatprep.subr.bf16.mxu0 0
      %3523 = vmatpush1.bf16.msra.mxu0 0
      %3524 = vmatprep.mubr.bf16.mxu0 0
      %3525 = vmatmul.mubr.bf16.gmra.mrb[0].mxu0 %v3490
      %v3526 = vpop.f32.mrb[0].mxu0
      %v3527 = vadd.f32 0.0, %v3526
      %v3528 = vpop.f32.mrb[0].mxu0
      %v3529 = vadd.f32 0.0, %v3528
      %v3530 = vpop.f32.mrb[0].mxu0
      %v3531 = vadd.f32 0.0, %v3530
      %v3532 = vpop.f32.mrb[0].mxu0
      %v3533 = vadd.f32 0.0, %v3532
      %3534 = vdwg.mxu0
      %3535 = vmatprep.subr.bf16.mxu0 0
      %3536 = vmatpush1.bf16.msra.mxu0 %v3462
      %3537 = vmatprep.subr.bf16.mxu0 0
      %3538 = vmatpush1.bf16.msra.mxu0 %v3465
      %3539 = vmatprep.subr.bf16.mxu0 0
      %3540 = vmatpush1.bf16.msra.mxu0 %v3468
      %3541 = vmatprep.subr.bf16.mxu0 0
      %3542 = vmatpush1.bf16.msra.mxu0 %v3471
      %3543 = vmatprep.subr.bf16.mxu0 0
      %3544 = vmatpush1.bf16.msra.mxu0 %v3474
      %3545 = vmatprep.subr.bf16.mxu0 0
      %3546 = vmatpush1.bf16.msra.mxu0 %v3477
      %3547 = vmatprep.subr.bf16.mxu0 0
      %3548 = vmatpush1.bf16.msra.mxu0 %v3480
      %3549 = vmatprep.subr.bf16.mxu0 0
      %3550 = vmatpush1.bf16.msra.mxu0 %v3483
      %3551 = vmatprep.subr.bf16.mxu0 0
      %3552 = vmatpush1.bf16.msra.mxu0 0
      %3553 = vmatprep.subr.bf16.mxu0 0
      %3554 = vmatpush1.bf16.msra.mxu0 0
      %3555 = vmatprep.subr.bf16.mxu0 0
      %3556 = vmatpush1.bf16.msra.mxu0 0
      %3557 = vmatprep.subr.bf16.mxu0 0
      %3558 = vmatpush1.bf16.msra.mxu0 0
      %3559 = vmatprep.subr.bf16.mxu0 0
      %3560 = vmatpush1.bf16.msra.mxu0 0
      %3561 = vmatprep.subr.bf16.mxu0 0
      %3562 = vmatpush1.bf16.msra.mxu0 0
      %3563 = vmatprep.subr.bf16.mxu0 0
      %3564 = vmatpush1.bf16.msra.mxu0 0
      %3565 = vmatprep.subr.bf16.mxu0 0
      %3566 = vmatpush1.bf16.msra.mxu0 0
      %3567 = vmatprep.mubr.bf16.mxu0 0
      %3568 = vmatmul.mubr.bf16.gmra.mrb[0].mxu0 %v3490
      %v3569 = vpop.f32.mrb[0].mxu0
      %v3570 = vadd.f32 0.0, %v3569
      %v3571 = vpop.f32.mrb[0].mxu0
      %v3572 = vpop.f32.mrb[0].mxu0
      %v3573 = vadd.f32 0.0, %v3572
      %v3574 = vpop.f32.mrb[0].mxu0
      %3575 = vdwg.mxu0
      %3576 = vrot.lane.b32.xlu0 %v3527, 19
      %v3577 = vpop.permute.xlu0 %3576
      %3578 = vrot.lane.b32.xlu0 %v3531, 19
      %v3579 = vpop.permute.xlu0 %3578
      %3580 = vrot.lane.b32.xlu0 %v3529, 19
      %v3581 = vpop.permute.xlu0 %3580
      %3582 = vrot.lane.b32.xlu0 %v3533, 19
      %v3583 = vpop.permute.xlu0 %3582
      %3584 = vrot.lane.b32.xlu0 %v3570, 19
      %v3585 = vpop.permute.xlu0 %3584
      %3586 = vrot.lane.b32.xlu0 %v3573, 19
      %v3587 = vpop.permute.xlu0 %3586
      %v3588 = vsel %vm257, %v3581, %v3585
      %v3589 = vsel %vm257, %v3583, %v3587
      %v3590 = vsel %vm257, %v3577, %v3581
      %v3591 = vsel %vm257, %v3579, %v3583
      %v3592 = vsel %vm257, %v3585, %v3577
      %v3593 = vsel %vm257, %v3587, %v3579
      %s3594 = scalar_lea.vmem %s1, 8
      %v3595 = vld [vmem:[%s3594] sm:$0xf]
      %v3596 = vld [vmem:[%s3594 + $0x4] sm:$0xf]
      %v3599 = vunpack.c.l.b16 %v3595
      %v3600 = vunpack.c.l.b16 %v3596
      %v3601 = vpack.c.b16 %v3600, %v3599
      %3603 = vmatprep.subr.bf16.mxu0 %v3461
      %3604 = vmatpush1.bf16.msra.mxu0 %v3460
      %3605 = vmatprep.subr.bf16.mxu0 %v3464
      %3606 = vmatpush1.bf16.msra.mxu0 %v3463
      %3607 = vmatprep.subr.bf16.mxu0 %v3467
      %3608 = vmatpush1.bf16.msra.mxu0 %v3466
      %3609 = vmatprep.subr.bf16.mxu0 %v3470
      %3610 = vmatpush1.bf16.msra.mxu0 %v3469
      %3611 = vmatprep.subr.bf16.mxu0 %v3473
      %3612 = vmatpush1.bf16.msra.mxu0 %v3472
      %3613 = vmatprep.subr.bf16.mxu0 %v3476
      %3614 = vmatpush1.bf16.msra.mxu0 %v3475
      %3615 = vmatprep.subr.bf16.mxu0 %v3479
      %3616 = vmatpush1.bf16.msra.mxu0 %v3478
      %3617 = vmatprep.subr.bf16.mxu0 %v3482
      %3618 = vmatpush1.bf16.msra.mxu0 %v3481
      %3619 = vmatprep.subr.bf16.mxu0 0
      %3620 = vmatpush1.bf16.msra.mxu0 0
      %3621 = vmatprep.subr.bf16.mxu0 0
      %3622 = vmatpush1.bf16.msra.mxu0 0
      %3623 = vmatprep.subr.bf16.mxu0 0
      %3624 = vmatpush1.bf16.msra.mxu0 0
      %3625 = vmatprep.subr.bf16.mxu0 0
      %3626 = vmatpush1.bf16.msra.mxu0 0
      %3627 = vmatprep.subr.bf16.mxu0 0
      %3628 = vmatpush1.bf16.msra.mxu0 0
      %3629 = vmatprep.subr.bf16.mxu0 0
      %3630 = vmatpush1.bf16.msra.mxu0 0
      %3631 = vmatprep.subr.bf16.mxu0 0
      %3632 = vmatpush1.bf16.msra.mxu0 0
      %3633 = vmatprep.subr.bf16.mxu0 0
      %3634 = vmatpush1.bf16.msra.mxu0 0
      %3635 = vmatprep.mubr.bf16.mxu0 0
      %3636 = vmatmul.mubr.bf16.gmra.mrb[0].mxu0 %v3601
      %v3637 = vpop.f32.mrb[0].mxu0
      %v3638 = vadd.f32 0.0, %v3637
      %v3639 = vpop.f32.mrb[0].mxu0
      %v3640 = vadd.f32 0.0, %v3639
      %v3641 = vpop.f32.mrb[0].mxu0
      %v3642 = vadd.f32 0.0, %v3641
      %v3643 = vpop.f32.mrb[0].mxu0
      %v3644 = vadd.f32 0.0, %v3643
      %3645 = vdwg.mxu0
      %3646 = vmatprep.subr.bf16.mxu0 0
      %3647 = vmatpush1.bf16.msra.mxu0 %v3462
      %3648 = vmatprep.subr.bf16.mxu0 0
      %3649 = vmatpush1.bf16.msra.mxu0 %v3465
      %3650 = vmatprep.subr.bf16.mxu0 0
      %3651 = vmatpush1.bf16.msra.mxu0 %v3468
      %3652 = vmatprep.subr.bf16.mxu0 0
      %3653 = vmatpush1.bf16.msra.mxu0 %v3471
      %3654 = vmatprep.subr.bf16.mxu0 0
      %3655 = vmatpush1.bf16.msra.mxu0 %v3474
      %3656 = vmatprep.subr.bf16.mxu0 0
      %3657 = vmatpush1.bf16.msra.mxu0 %v3477
      %3658 = vmatprep.subr.bf16.mxu0 0
      %3659 = vmatpush1.bf16.msra.mxu0 %v3480
      %3660 = vmatprep.subr.bf16.mxu0 0
      %3661 = vmatpush1.bf16.msra.mxu0 %v3483
      %3662 = vmatprep.subr.bf16.mxu0 0
      %3663 = vmatpush1.bf16.msra.mxu0 0
      %3664 = vmatprep.subr.bf16.mxu0 0
      %3665 = vmatpush1.bf16.msra.mxu0 0
      %3666 = vmatprep.subr.bf16.mxu0 0
      %3667 = vmatpush1.bf16.msra.mxu0 0
      %3668 = vmatprep.subr.bf16.mxu0 0
      %3669 = vmatpush1.bf16.msra.mxu0 0
      %3670 = vmatprep.subr.bf16.mxu0 0
      %3671 = vmatpush1.bf16.msra.mxu0 0
      %3672 = vmatprep.subr.bf16.mxu0 0
      %3673 = vmatpush1.bf16.msra.mxu0 0
      %3674 = vmatprep.subr.bf16.mxu0 0
      %3675 = vmatpush1.bf16.msra.mxu0 0
      %3676 = vmatprep.subr.bf16.mxu0 0
      %3677 = vmatpush1.bf16.msra.mxu0 0
      %3678 = vmatprep.mubr.bf16.mxu0 0
      %3679 = vmatmul.mubr.bf16.gmra.mrb[0].mxu0 %v3601
      %v3680 = vpop.f32.mrb[0].mxu0
      %v3681 = vadd.f32 0.0, %v3680
      %v3682 = vpop.f32.mrb[0].mxu0
      %v3683 = vpop.f32.mrb[0].mxu0
      %v3684 = vadd.f32 0.0, %v3683
      %v3685 = vpop.f32.mrb[0].mxu0
      %3686 = vdwg.mxu0
      %3687 = vrot.lane.b32.xlu0 %v3638, 18
      %v3688 = vpop.permute.xlu0 %3687
      %3689 = vrot.lane.b32.xlu0 %v3642, 18
      %v3690 = vpop.permute.xlu0 %3689
      %3691 = vrot.lane.b32.xlu0 %v3640, 18
      %v3692 = vpop.permute.xlu0 %3691
      %3693 = vrot.lane.b32.xlu0 %v3644, 18
      %v3694 = vpop.permute.xlu0 %3693
      %3695 = vrot.lane.b32.xlu0 %v3681, 18
      %v3696 = vpop.permute.xlu0 %3695
      %3697 = vrot.lane.b32.xlu0 %v3684, 18
      %v3698 = vpop.permute.xlu0 %3697
      %v3699 = vsel %vm286, %v3692, %v3696
      %v3700 = vsel %vm286, %v3694, %v3698
      %v3701 = vsel %vm286, %v3688, %v3692
      %v3702 = vsel %vm286, %v3690, %v3694
      %v3703 = vsel %vm286, %v3696, %v3688
      %v3704 = vsel %vm286, %v3698, %v3690
      %v3705 = vadd.f32 %v3592, %v3703
      %v3706 = vadd.f32 %v3590, %v3701
      %v3707 = vadd.f32 %v3588, %v3699
      %v3708 = vadd.f32 %v3593, %v3704
      %v3709 = vadd.f32 %v3591, %v3702
      %v3710 = vadd.f32 %v3589, %v3700
      %s3711 = scalar_lea.vmem %s1, 16
      %v3712 = vld [vmem:[%s3711] sm:$0xf]
      %v3713 = vld [vmem:[%s3711 + $0x4] sm:$0xf]
      %v3716 = vunpack.c.l.b16 %v3712
      %v3717 = vunpack.c.l.b16 %v3713
      %v3718 = vpack.c.b16 %v3717, %v3716
      %3720 = vmatprep.subr.bf16.mxu0 %v3461
      %3721 = vmatpush1.bf16.msra.mxu0 %v3460
      %3722 = vmatprep.subr.bf16.mxu0 %v3464
      %3723 = vmatpush1.bf16.msra.mxu0 %v3463
      %3724 = vmatprep.subr.bf16.mxu0 %v3467
      %3725 = vmatpush1.bf16.msra.mxu0 %v3466
      %3726 = vmatprep.subr.bf16.mxu0 %v3470
      %3727 = vmatpush1.bf16.msra.mxu0 %v3469
      %3728 = vmatprep.subr.bf16.mxu0 %v3473
      %3729 = vmatpush1.bf16.msra.mxu0 %v3472
      %3730 = vmatprep.subr.bf16.mxu0 %v3476
      %3731 = vmatpush1.bf16.msra.mxu0 %v3475
      %3732 = vmatprep.subr.bf16.mxu0 %v3479
      %3733 = vmatpush1.bf16.msra.mxu0 %v3478
      %3734 = vmatprep.subr.bf16.mxu0 %v3482
      %3735 = vmatpush1.bf16.msra.mxu0 %v3481
      %3736 = vmatprep.subr.bf16.mxu0 0
      %3737 = vmatpush1.bf16.msra.mxu0 0
      %3738 = vmatprep.subr.bf16.mxu0 0
      %3739 = vmatpush1.bf16.msra.mxu0 0
      %3740 = vmatprep.subr.bf16.mxu0 0
      %3741 = vmatpush1.bf16.msra.mxu0 0
      %3742 = vmatprep.subr.bf16.mxu0 0
      %3743 = vmatpush1.bf16.msra.mxu0 0
      %3744 = vmatprep.subr.bf16.mxu0 0
      %3745 = vmatpush1.bf16.msra.mxu0 0
      %3746 = vmatprep.subr.bf16.mxu0 0
      %3747 = vmatpush1.bf16.msra.mxu0 0
      %3748 = vmatprep.subr.bf16.mxu0 0
      %3749 = vmatpush1.bf16.msra.mxu0 0
      %3750 = vmatprep.subr.bf16.mxu0 0
      %3751 = vmatpush1.bf16.msra.mxu0 0
      %3752 = vmatprep.mubr.bf16.mxu0 0
      %3753 = vmatmul.mubr.bf16.gmra.mrb[0].mxu0 %v3718
      %v3754 = vpop.f32.mrb[0].mxu0
      %v3755 = vadd.f32 0.0, %v3754
      %v3756 = vpop.f32.mrb[0].mxu0
      %v3757 = vadd.f32 0.0, %v3756
      %v3758 = vpop.f32.mrb[0].mxu0
      %v3759 = vadd.f32 0.0, %v3758
      %v3760 = vpop.f32.mrb[0].mxu0
      %v3761 = vadd.f32 0.0, %v3760
      %3762 = vdwg.mxu0
      %3763 = vmatprep.subr.bf16.mxu0 0
      %3764 = vmatpush1.bf16.msra.mxu0 %v3462
      %3765 = vmatprep.subr.bf16.mxu0 0
      %3766 = vmatpush1.bf16.msra.mxu0 %v3465
      %3767 = vmatprep.subr.bf16.mxu0 0
      %3768 = vmatpush1.bf16.msra.mxu0 %v3468
      %3769 = vmatprep.subr.bf16.mxu0 0
      %3770 = vmatpush1.bf16.msra.mxu0 %v3471
      %3771 = vmatprep.subr.bf16.mxu0 0
      %3772 = vmatpush1.bf16.msra.mxu0 %v3474
      %3773 = vmatprep.subr.bf16.mxu0 0
      %3774 = vmatpush1.bf16.msra.mxu0 %v3477
      %3775 = vmatprep.subr.bf16.mxu0 0
      %3776 = vmatpush1.bf16.msra.mxu0 %v3480
      %3777 = vmatprep.subr.bf16.mxu0 0
      %3778 = vmatpush1.bf16.msra.mxu0 %v3483
      %3779 = vmatprep.subr.bf16.mxu0 0
      %3780 = vmatpush1.bf16.msra.mxu0 0
      %3781 = vmatprep.subr.bf16.mxu0 0
      %3782 = vmatpush1.bf16.msra.mxu0 0
      %3783 = vmatprep.subr.bf16.mxu0 0
      %3784 = vmatpush1.bf16.msra.mxu0 0
      %3785 = vmatprep.subr.bf16.mxu0 0
      %3786 = vmatpush1.bf16.msra.mxu0 0
      %3787 = vmatprep.subr.bf16.mxu0 0
      %3788 = vmatpush1.bf16.msra.mxu0 0
      %3789 = vmatprep.subr.bf16.mxu0 0
      %3790 = vmatpush1.bf16.msra.mxu0 0
      %3791 = vmatprep.subr.bf16.mxu0 0
      %3792 = vmatpush1.bf16.msra.mxu0 0
      %3793 = vmatprep.subr.bf16.mxu0 0
      %3794 = vmatpush1.bf16.msra.mxu0 0
      %3795 = vmatprep.mubr.bf16.mxu0 0
      %3796 = vmatmul.mubr.bf16.gmra.mrb[0].mxu0 %v3718
      %v3797 = vpop.f32.mrb[0].mxu0
      %v3798 = vadd.f32 0.0, %v3797
      %v3799 = vpop.f32.mrb[0].mxu0
      %v3800 = vpop.f32.mrb[0].mxu0
      %v3801 = vadd.f32 0.0, %v3800
      %v3802 = vpop.f32.mrb[0].mxu0
      %3803 = vdwg.mxu0
      %3804 = vrot.lane.b32.xlu0 %v3755, 17
      %v3805 = vpop.permute.xlu0 %3804
      %3806 = vrot.lane.b32.xlu0 %v3759, 17
      %v3807 = vpop.permute.xlu0 %3806
      %3808 = vrot.lane.b32.xlu0 %v3757, 17
      %v3809 = vpop.permute.xlu0 %3808
      %3810 = vrot.lane.b32.xlu0 %v3761, 17
      %v3811 = vpop.permute.xlu0 %3810
      %3812 = vrot.lane.b32.xlu0 %v3798, 17
      %v3813 = vpop.permute.xlu0 %3812
      %3814 = vrot.lane.b32.xlu0 %v3801, 17
      %v3815 = vpop.permute.xlu0 %3814
      %v3816 = vsel %vm884, %v3809, %v3813
      %v3817 = vsel %vm884, %v3811, %v3815
      %v3818 = vsel %vm884, %v3805, %v3809
      %v3819 = vsel %vm884, %v3807, %v3811
      %v3820 = vsel %vm884, %v3813, %v3805
      %v3821 = vsel %vm884, %v3815, %v3807
      %v3822 = vadd.f32 %v3705, %v3820
      %v3823 = vadd.f32 %v3706, %v3818
      %v3824 = vadd.f32 %v3707, %v3816
      %v3825 = vadd.f32 %v3708, %v3821
      %v3826 = vadd.f32 %v3709, %v3819
      %v3827 = vadd.f32 %v3710, %v3817
      %s3828 = scalar_lea.vmem %s1, 24
      %v3829 = vld [vmem:[%s3828] sm:$0xf]
      %v3830 = vld [vmem:[%s3828 + $0x4] sm:$0xf]
      %v3833 = vunpack.c.l.b16 %v3829
      %v3834 = vunpack.c.l.b16 %v3830
      %v3835 = vpack.c.b16 %v3834, %v3833
      %3837 = vmatprep.subr.bf16.mxu0 %v3461
      %3838 = vmatpush1.bf16.msra.mxu0 %v3460
      %3839 = vmatprep.subr.bf16.mxu0 %v3464
      %3840 = vmatpush1.bf16.msra.mxu0 %v3463
      %3841 = vmatprep.subr.bf16.mxu0 %v3467
      %3842 = vmatpush1.bf16.msra.mxu0 %v3466
      %3843 = vmatprep.subr.bf16.mxu0 %v3470
      %3844 = vmatpush1.bf16.msra.mxu0 %v3469
      %3845 = vmatprep.subr.bf16.mxu0 %v3473
      %3846 = vmatpush1.bf16.msra.mxu0 %v3472
      %3847 = vmatprep.subr.bf16.mxu0 %v3476
      %3848 = vmatpush1.bf16.msra.mxu0 %v3475
      %3849 = vmatprep.subr.bf16.mxu0 %v3479
      %3850 = vmatpush1.bf16.msra.mxu0 %v3478
      %3851 = vmatprep.subr.bf16.mxu0 %v3482
      %3852 = vmatpush1.bf16.msra.mxu0 %v3481
      %3853 = vmatprep.subr.bf16.mxu0 0
      %3854 = vmatpush1.bf16.msra.mxu0 0
      %3855 = vmatprep.subr.bf16.mxu0 0
      %3856 = vmatpush1.bf16.msra.mxu0 0
      %3857 = vmatprep.subr.bf16.mxu0 0
      %3858 = vmatpush1.bf16.msra.mxu0 0
      %3859 = vmatprep.subr.bf16.mxu0 0
      %3860 = vmatpush1.bf16.msra.mxu0 0
      %3861 = vmatprep.subr.bf16.mxu0 0
      %3862 = vmatpush1.bf16.msra.mxu0 0
      %3863 = vmatprep.subr.bf16.mxu0 0
      %3864 = vmatpush1.bf16.msra.mxu0 0
      %3865 = vmatprep.subr.bf16.mxu0 0
      %3866 = vmatpush1.bf16.msra.mxu0 0
      %3867 = vmatprep.subr.bf16.mxu0 0
      %3868 = vmatpush1.bf16.msra.mxu0 0
      %3869 = vmatprep.mubr.bf16.mxu0 0
      %3870 = vmatmul.mubr.bf16.gmra.mrb[0].mxu0 %v3835
      %v3871 = vpop.f32.mrb[0].mxu0
      %v3872 = vadd.f32 0.0, %v3871
      %v3873 = vpop.f32.mrb[0].mxu0
      %v3874 = vadd.f32 0.0, %v3873
      %v3875 = vpop.f32.mrb[0].mxu0
      %v3876 = vadd.f32 0.0, %v3875
      %v3877 = vpop.f32.mrb[0].mxu0
      %v3878 = vadd.f32 0.0, %v3877
      %3879 = vdwg.mxu0
      %3880 = vmatprep.subr.bf16.mxu0 0
      %3881 = vmatpush1.bf16.msra.mxu0 %v3462
      %3882 = vmatprep.subr.bf16.mxu0 0
      %3883 = vmatpush1.bf16.msra.mxu0 %v3465
      %3884 = vmatprep.subr.bf16.mxu0 0
      %3885 = vmatpush1.bf16.msra.mxu0 %v3468
      %3886 = vmatprep.subr.bf16.mxu0 0
      %3887 = vmatpush1.bf16.msra.mxu0 %v3471
      %3888 = vmatprep.subr.bf16.mxu0 0
      %3889 = vmatpush1.bf16.msra.mxu0 %v3474
      %3890 = vmatprep.subr.bf16.mxu0 0
      %3891 = vmatpush1.bf16.msra.mxu0 %v3477
      %3892 = vmatprep.subr.bf16.mxu0 0
      %3893 = vmatpush1.bf16.msra.mxu0 %v3480
      %3894 = vmatprep.subr.bf16.mxu0 0
      %3895 = vmatpush1.bf16.msra.mxu0 %v3483
      %3896 = vmatprep.subr.bf16.mxu0 0
      %3897 = vmatpush1.bf16.msra.mxu0 0
      %3898 = vmatprep.subr.bf16.mxu0 0
      %3899 = vmatpush1.bf16.msra.mxu0 0
      %3900 = vmatprep.subr.bf16.mxu0 0
      %3901 = vmatpush1.bf16.msra.mxu0 0
      %3902 = vmatprep.subr.bf16.mxu0 0
      %3903 = vmatpush1.bf16.msra.mxu0 0
      %3904 = vmatprep.subr.bf16.mxu0 0
      %3905 = vmatpush1.bf16.msra.mxu0 0
      %3906 = vmatprep.subr.bf16.mxu0 0
      %3907 = vmatpush1.bf16.msra.mxu0 0
      %3908 = vmatprep.subr.bf16.mxu0 0
      %3909 = vmatpush1.bf16.msra.mxu0 0
      %3910 = vmatprep.subr.bf16.mxu0 0
      %3911 = vmatpush1.bf16.msra.mxu0 0
      %3912 = vmatprep.mubr.bf16.mxu0 0
      %3913 = vmatmul.mubr.bf16.gmra.mrb[0].mxu0 %v3835
      %v3914 = vpop.f32.mrb[0].mxu0
      %v3915 = vadd.f32 0.0, %v3914
      %v3916 = vpop.f32.mrb[0].mxu0
      %v3917 = vpop.f32.mrb[0].mxu0
      %v3918 = vadd.f32 0.0, %v3917
      %v3919 = vpop.f32.mrb[0].mxu0
      %3920 = vdwg.mxu0
      %3921 = vrot.lane.b32.xlu0 %v3872, 1
      %v3922 = vpop.permute.xlu0 %3921
      %3923 = vrot.lane.b32.xlu0 %v3876, 1
      %v3924 = vpop.permute.xlu0 %3923
      %3925 = vrot.lane.b32.xlu0 %v3874, 1
      %v3926 = vpop.permute.xlu0 %3925
      %3927 = vrot.lane.b32.xlu0 %v3878, 1
      %v3928 = vpop.permute.xlu0 %3927
      %3929 = vrot.lane.b32.xlu0 %v3915, 1
      %v3930 = vpop.permute.xlu0 %3929
      %3931 = vrot.lane.b32.xlu0 %v3918, 1
      %v3932 = vpop.permute.xlu0 %3931
      %v3933 = vsel %vm1245, %v3926, %v3930
      %v3934 = vsel %vm1245, %v3928, %v3932
      %v3935 = vsel %vm1245, %v3922, %v3926
      %v3936 = vsel %vm1245, %v3924, %v3928
      %v3937 = vsel %vm1245, %v3930, %v3922
      %v3938 = vsel %vm1245, %v3932, %v3924
      %v3939 = vadd.f32 %v3822, %v3937
      %v3940 = vadd.f32 %v3823, %v3935
      %v3941 = vadd.f32 %v3824, %v3933
      %v3942 = vadd.f32 %v3825, %v3938
      %v3943 = vadd.f32 %v3826, %v3936
      %v3944 = vadd.f32 %v3827, %v3934
      %s3945 = scalar_lea.vmem %s1, 32
      %v3946 = vld [vmem:[%s3945] sm:$0xf]
      %v3947 = vld [vmem:[%s3945 + $0x4] sm:$0xf]
      %v3950 = vunpack.c.l.b16 %v3946
      %v3951 = vunpack.c.l.b16 %v3947
      %v3952 = vpack.c.b16 %v3951, %v3950
      %3954 = vmatprep.subr.bf16.mxu0 %v3461
      %3955 = vmatpush1.bf16.msra.mxu0 %v3460
      %3956 = vmatprep.subr.bf16.mxu0 %v3464
      %3957 = vmatpush1.bf16.msra.mxu0 %v3463
      %3958 = vmatprep.subr.bf16.mxu0 %v3467
      %3959 = vmatpush1.bf16.msra.mxu0 %v3466
      %3960 = vmatprep.subr.bf16.mxu0 %v3470
      %3961 = vmatpush1.bf16.msra.mxu0 %v3469
      %3962 = vmatprep.subr.bf16.mxu0 %v3473
      %3963 = vmatpush1.bf16.msra.mxu0 %v3472
      %3964 = vmatprep.subr.bf16.mxu0 %v3476
      %3965 = vmatpush1.bf16.msra.mxu0 %v3475
      %3966 = vmatprep.subr.bf16.mxu0 %v3479
      %3967 = vmatpush1.bf16.msra.mxu0 %v3478
      %3968 = vmatprep.subr.bf16.mxu0 %v3482
      %3969 = vmatpush1.bf16.msra.mxu0 %v3481
      %3970 = vmatprep.subr.bf16.mxu0 0
      %3971 = vmatpush1.bf16.msra.mxu0 0
      %3972 = vmatprep.subr.bf16.mxu0 0
      %3973 = vmatpush1.bf16.msra.mxu0 0
      %3974 = vmatprep.subr.bf16.mxu0 0
      %3975 = vmatpush1.bf16.msra.mxu0 0
      %3976 = vmatprep.subr.bf16.mxu0 0
      %3977 = vmatpush1.bf16.msra.mxu0 0
      %3978 = vmatprep.subr.bf16.mxu0 0
      %3979 = vmatpush1.bf16.msra.mxu0 0
      %3980 = vmatprep.subr.bf16.mxu0 0
      %3981 = vmatpush1.bf16.msra.mxu0 0
      %3982 = vmatprep.subr.bf16.mxu0 0
      %3983 = vmatpush1.bf16.msra.mxu0 0
      %3984 = vmatprep.subr.bf16.mxu0 0
      %3985 = vmatpush1.bf16.msra.mxu0 0
      %3986 = vmatprep.mubr.bf16.mxu0 0
      %3987 = vmatmul.mubr.bf16.gmra.mrb[0].mxu0 %v3952
      %v3988 = vpop.f32.mrb[0].mxu0
      %v3989 = vadd.f32 0.0, %v3988
      %v3990 = vpop.f32.mrb[0].mxu0
      %v3991 = vadd.f32 0.0, %v3990
      %v3992 = vpop.f32.mrb[0].mxu0
      %v3993 = vadd.f32 0.0, %v3992
      %v3994 = vpop.f32.mrb[0].mxu0
      %v3995 = vadd.f32 0.0, %v3994
      %3996 = vdwg.mxu0
      %3997 = vmatprep.subr.bf16.mxu0 0
      %3998 = vmatpush1.bf16.msra.mxu0 %v3462
      %3999 = vmatprep.subr.bf16.mxu0 0
      %4000 = vmatpush1.bf16.msra.mxu0 %v3465
      %4001 = vmatprep.subr.bf16.mxu0 0
      %4002 = vmatpush1.bf16.msra.mxu0 %v3468
      %4003 = vmatprep.subr.bf16.mxu0 0
      %4004 = vmatpush1.bf16.msra.mxu0 %v3471
      %4005 = vmatprep.subr.bf16.mxu0 0
      %4006 = vmatpush1.bf16.msra.mxu0 %v3474
      %4007 = vmatprep.subr.bf16.mxu0 0
      %4008 = vmatpush1.bf16.msra.mxu0 %v3477
      %4009 = vmatprep.subr.bf16.mxu0 0
      %4010 = vmatpush1.bf16.msra.mxu0 %v3480
      %4011 = vmatprep.subr.bf16.mxu0 0
      %4012 = vmatpush1.bf16.msra.mxu0 %v3483
      %4013 = vmatprep.subr.bf16.mxu0 0
      %4014 = vmatpush1.bf16.msra.mxu0 0
      %4015 = vmatprep.subr.bf16.mxu0 0
      %4016 = vmatpush1.bf16.msra.mxu0 0
      %4017 = vmatprep.subr.bf16.mxu0 0
      %4018 = vmatpush1.bf16.msra.mxu0 0
      %4019 = vmatprep.subr.bf16.mxu0 0
      %4020 = vmatpush1.bf16.msra.mxu0 0
      %4021 = vmatprep.subr.bf16.mxu0 0
      %4022 = vmatpush1.bf16.msra.mxu0 0
      %4023 = vmatprep.subr.bf16.mxu0 0
      %4024 = vmatpush1.bf16.msra.mxu0 0
      %4025 = vmatprep.subr.bf16.mxu0 0
      %4026 = vmatpush1.bf16.msra.mxu0 0
      %4027 = vmatprep.subr.bf16.mxu0 0
      %4028 = vmatpush1.bf16.msra.mxu0 0
      %4029 = vmatprep.mubr.bf16.mxu0 0
      %4030 = vmatmul.mubr.bf16.gmra.mrb[0].mxu0 %v3952
      %v4031 = vpop.f32.mrb[0].mxu0
      %v4032 = vadd.f32 0.0, %v4031
      %v4033 = vpop.f32.mrb[0].mxu0
      %v4034 = vpop.f32.mrb[0].mxu0
      %v4035 = vadd.f32 0.0, %v4034
      %v4036 = vpop.f32.mrb[0].mxu0
      %4037 = vdwg.mxu0
      %v4038 = vadd.f32 %v3939, %v3989
      %v4039 = vadd.f32 %v3940, %v3991
      %v4040 = vadd.f32 %v3941, %v4032
      %v4041 = vadd.f32 %v3942, %v3993
      %v4042 = vadd.f32 %v3943, %v3995
      %v4043 = vadd.f32 %v3944, %v4035
      %s4044 = scalar_lea.vmem %s1, 40
      %v4045 = vld [vmem:[%s4044] sm:$0xf]
      %v4046 = vld [vmem:[%s4044 + $0x4] sm:$0xf]
      %v4049 = vunpack.c.l.b16 %v4045
      %v4050 = vunpack.c.l.b16 %v4046
      %v4051 = vpack.c.b16 %v4050, %v4049
      %4053 = vmatprep.subr.bf16.mxu0 %v3461
      %4054 = vmatpush1.bf16.msra.mxu0 %v3460
      %4055 = vmatprep.subr.bf16.mxu0 %v3464
      %4056 = vmatpush1.bf16.msra.mxu0 %v3463
      %4057 = vmatprep.subr.bf16.mxu0 %v3467
      %4058 = vmatpush1.bf16.msra.mxu0 %v3466
      %4059 = vmatprep.subr.bf16.mxu0 %v3470
      %4060 = vmatpush1.bf16.msra.mxu0 %v3469
      %4061 = vmatprep.subr.bf16.mxu0 %v3473
      %4062 = vmatpush1.bf16.msra.mxu0 %v3472
      %4063 = vmatprep.subr.bf16.mxu0 %v3476
      %4064 = vmatpush1.bf16.msra.mxu0 %v3475
      %4065 = vmatprep.subr.bf16.mxu0 %v3479
      %4066 = vmatpush1.bf16.msra.mxu0 %v3478
      %4067 = vmatprep.subr.bf16.mxu0 %v3482
      %4068 = vmatpush1.bf16.msra.mxu0 %v3481
      %4069 = vmatprep.subr.bf16.mxu0 0
      %4070 = vmatpush1.bf16.msra.mxu0 0
      %4071 = vmatprep.subr.bf16.mxu0 0
      %4072 = vmatpush1.bf16.msra.mxu0 0
      %4073 = vmatprep.subr.bf16.mxu0 0
      %4074 = vmatpush1.bf16.msra.mxu0 0
      %4075 = vmatprep.subr.bf16.mxu0 0
      %4076 = vmatpush1.bf16.msra.mxu0 0
      %4077 = vmatprep.subr.bf16.mxu0 0
      %4078 = vmatpush1.bf16.msra.mxu0 0
      %4079 = vmatprep.subr.bf16.mxu0 0
      %4080 = vmatpush1.bf16.msra.mxu0 0
      %4081 = vmatprep.subr.bf16.mxu0 0
      %4082 = vmatpush1.bf16.msra.mxu0 0
      %4083 = vmatprep.subr.bf16.mxu0 0
      %4084 = vmatpush1.bf16.msra.mxu0 0
      %4085 = vmatprep.mubr.bf16.mxu0 0
      %4086 = vmatmul.mubr.bf16.gmra.mrb[0].mxu0 %v4051
      %v4087 = vpop.f32.mrb[0].mxu0
      %v4088 = vadd.f32 0.0, %v4087
      %v4089 = vpop.f32.mrb[0].mxu0
      %v4090 = vadd.f32 0.0, %v4089
      %v4091 = vpop.f32.mrb[0].mxu0
      %v4092 = vadd.f32 0.0, %v4091
      %v4093 = vpop.f32.mrb[0].mxu0
      %v4094 = vadd.f32 0.0, %v4093
      %4095 = vdwg.mxu0
      %4096 = vmatprep.subr.bf16.mxu0 0
      %4097 = vmatpush1.bf16.msra.mxu0 %v3462
      %4098 = vmatprep.subr.bf16.mxu0 0
      %4099 = vmatpush1.bf16.msra.mxu0 %v3465
      %4100 = vmatprep.subr.bf16.mxu0 0
      %4101 = vmatpush1.bf16.msra.mxu0 %v3468
      %4102 = vmatprep.subr.bf16.mxu0 0
      %4103 = vmatpush1.bf16.msra.mxu0 %v3471
      %4104 = vmatprep.subr.bf16.mxu0 0
      %4105 = vmatpush1.bf16.msra.mxu0 %v3474
      %4106 = vmatprep.subr.bf16.mxu0 0
      %4107 = vmatpush1.bf16.msra.mxu0 %v3477
      %4108 = vmatprep.subr.bf16.mxu0 0
      %4109 = vmatpush1.bf16.msra.mxu0 %v3480
      %4110 = vmatprep.subr.bf16.mxu0 0
      %4111 = vmatpush1.bf16.msra.mxu0 %v3483
      %4112 = vmatprep.subr.bf16.mxu0 0
      %4113 = vmatpush1.bf16.msra.mxu0 0
      %4114 = vmatprep.subr.bf16.mxu0 0
      %4115 = vmatpush1.bf16.msra.mxu0 0
      %4116 = vmatprep.subr.bf16.mxu0 0
      %4117 = vmatpush1.bf16.msra.mxu0 0
      %4118 = vmatprep.subr.bf16.mxu0 0
      %4119 = vmatpush1.bf16.msra.mxu0 0
      %4120 = vmatprep.subr.bf16.mxu0 0
      %4121 = vmatpush1.bf16.msra.mxu0 0
      %4122 = vmatprep.subr.bf16.mxu0 0
      %4123 = vmatpush1.bf16.msra.mxu0 0
      %4124 = vmatprep.subr.bf16.mxu0 0
      %4125 = vmatpush1.bf16.msra.mxu0 0
      %4126 = vmatprep.subr.bf16.mxu0 0
      %4127 = vmatpush1.bf16.msra.mxu0 0
      %4128 = vmatprep.mubr.bf16.mxu0 0
      %4129 = vmatmul.mubr.bf16.gmra.mrb[0].mxu0 %v4051
      %v4130 = vpop.f32.mrb[0].mxu0
      %v4131 = vadd.f32 0.0, %v4130
      %v4132 = vpop.f32.mrb[0].mxu0
      %v4133 = vpop.f32.mrb[0].mxu0
      %v4134 = vadd.f32 0.0, %v4133
      %v4135 = vpop.f32.mrb[0].mxu0
      %4136 = vdwg.mxu0
      %4137 = vrot.lane.b32.xlu0 %v4088, 127
      %v4138 = vpop.permute.xlu0 %4137
      %4139 = vrot.lane.b32.xlu0 %v4092, 127
      %v4140 = vpop.permute.xlu0 %4139
      %4141 = vrot.lane.b32.xlu0 %v4090, 127
      %v4142 = vpop.permute.xlu0 %4141
      %4143 = vrot.lane.b32.xlu0 %v4094, 127
      %v4144 = vpop.permute.xlu0 %4143
      %4145 = vrot.lane.b32.xlu0 %v4131, 127
      %v4146 = vpop.permute.xlu0 %4145
      %4147 = vrot.lane.b32.xlu0 %v4134, 127
      %v4148 = vpop.permute.xlu0 %4147
      %v4149 = vsel %vm1957, %v4142, %v4146
      %v4150 = vsel %vm1957, %v4144, %v4148
      %v4151 = vsel %vm1957, %v4138, %v4142
      %v4152 = vsel %vm1957, %v4140, %v4144
      %v4153 = vsel %vm1957, %v4146, %v4138
      %v4154 = vsel %vm1957, %v4148, %v4140
      %v4155 = vadd.f32 %v4038, %v4151
      %v4156 = vadd.f32 %v4039, %v4149
      %v4157 = vadd.f32 %v4040, %v4153
      %v4158 = vadd.f32 %v4041, %v4152
      %v4159 = vadd.f32 %v4042, %v4150
      %v4160 = vadd.f32 %v4043, %v4154
      %s4161 = scalar_lea.vmem %s1, 48
      %v4162 = vld [vmem:[%s4161] sm:$0xf]
      %v4163 = vld [vmem:[%s4161 + $0x4] sm:$0xf]
      %v4166 = vunpack.c.l.b16 %v4162
      %v4167 = vunpack.c.l.b16 %v4163
      %v4168 = vpack.c.b16 %v4167, %v4166
      %4170 = vmatprep.subr.bf16.mxu0 %v3461
      %4171 = vmatpush1.bf16.msra.mxu0 %v3460
      %4172 = vmatprep.subr.bf16.mxu0 %v3464
      %4173 = vmatpush1.bf16.msra.mxu0 %v3463
      %4174 = vmatprep.subr.bf16.mxu0 %v3467
      %4175 = vmatpush1.bf16.msra.mxu0 %v3466
      %4176 = vmatprep.subr.bf16.mxu0 %v3470
      %4177 = vmatpush1.bf16.msra.mxu0 %v3469
      %4178 = vmatprep.subr.bf16.mxu0 %v3473
      %4179 = vmatpush1.bf16.msra.mxu0 %v3472
      %4180 = vmatprep.subr.bf16.mxu0 %v3476
      %4181 = vmatpush1.bf16.msra.mxu0 %v3475
      %4182 = vmatprep.subr.bf16.mxu0 %v3479
      %4183 = vmatpush1.bf16.msra.mxu0 %v3478
      %4184 = vmatprep.subr.bf16.mxu0 %v3482
      %4185 = vmatpush1.bf16.msra.mxu0 %v3481
      %4186 = vmatprep.subr.bf16.mxu0 0
      %4187 = vmatpush1.bf16.msra.mxu0 0
      %4188 = vmatprep.subr.bf16.mxu0 0
      %4189 = vmatpush1.bf16.msra.mxu0 0
      %4190 = vmatprep.subr.bf16.mxu0 0
      %4191 = vmatpush1.bf16.msra.mxu0 0
      %4192 = vmatprep.subr.bf16.mxu0 0
      %4193 = vmatpush1.bf16.msra.mxu0 0
      %4194 = vmatprep.subr.bf16.mxu0 0
      %4195 = vmatpush1.bf16.msra.mxu0 0
      %4196 = vmatprep.subr.bf16.mxu0 0
      %4197 = vmatpush1.bf16.msra.mxu0 0
      %4198 = vmatprep.subr.bf16.mxu0 0
      %4199 = vmatpush1.bf16.msra.mxu0 0
      %4200 = vmatprep.subr.bf16.mxu0 0
      %4201 = vmatpush1.bf16.msra.mxu0 0
      %4202 = vmatprep.mubr.bf16.mxu0 0
      %4203 = vmatmul.mubr.bf16.gmra.mrb[0].mxu0 %v4168
      %v4204 = vpop.f32.mrb[0].mxu0
      %v4205 = vadd.f32 0.0, %v4204
      %v4206 = vpop.f32.mrb[0].mxu0
      %v4207 = vadd.f32 0.0, %v4206
      %v4208 = vpop.f32.mrb[0].mxu0
      %v4209 = vadd.f32 0.0, %v4208
      %v4210 = vpop.f32.mrb[0].mxu0
      %v4211 = vadd.f32 0.0, %v4210
      %4212 = vdwg.mxu0
      %4213 = vmatprep.subr.bf16.mxu0 0
      %4214 = vmatpush1.bf16.msra.mxu0 %v3462
      %4215 = vmatprep.subr.bf16.mxu0 0
      %4216 = vmatpush1.bf16.msra.mxu0 %v3465
      %4217 = vmatprep.subr.bf16.mxu0 0
      %4218 = vmatpush1.bf16.msra.mxu0 %v3468
      %4219 = vmatprep.subr.bf16.mxu0 0
      %4220 = vmatpush1.bf16.msra.mxu0 %v3471
      %4221 = vmatprep.subr.bf16.mxu0 0
      %4222 = vmatpush1.bf16.msra.mxu0 %v3474
      %4223 = vmatprep.subr.bf16.mxu0 0
      %4224 = vmatpush1.bf16.msra.mxu0 %v3477
      %4225 = vmatprep.subr.bf16.mxu0 0
      %4226 = vmatpush1.bf16.msra.mxu0 %v3480
      %4227 = vmatprep.subr.bf16.mxu0 0
      %4228 = vmatpush1.bf16.msra.mxu0 %v3483
      %4229 = vmatprep.subr.bf16.mxu0 0
      %4230 = vmatpush1.bf16.msra.mxu0 0
      %4231 = vmatprep.subr.bf16.mxu0 0
      %4232 = vmatpush1.bf16.msra.mxu0 0
      %4233 = vmatprep.subr.bf16.mxu0 0
      %4234 = vmatpush1.bf16.msra.mxu0 0
      %4235 = vmatprep.subr.bf16.mxu0 0
      %4236 = vmatpush1.bf16.msra.mxu0 0
      %4237 = vmatprep.subr.bf16.mxu0 0
      %4238 = vmatpush1.bf16.msra.mxu0 0
      %4239 = vmatprep.subr.bf16.mxu0 0
      %4240 = vmatpush1.bf16.msra.mxu0 0
      %4241 = vmatprep.subr.bf16.mxu0 0
      %4242 = vmatpush1.bf16.msra.mxu0 0
      %4243 = vmatprep.subr.bf16.mxu0 0
      %4244 = vmatpush1.bf16.msra.mxu0 0
      %4245 = vmatprep.mubr.bf16.mxu0 0
      %4246 = vmatmul.mubr.bf16.gmra.mrb[0].mxu0 %v4168
      %v4247 = vpop.f32.mrb[0].mxu0
      %v4248 = vadd.f32 0.0, %v4247
      %v4249 = vpop.f32.mrb[0].mxu0
      %v4250 = vpop.f32.mrb[0].mxu0
      %v4251 = vadd.f32 0.0, %v4250
      %v4252 = vpop.f32.mrb[0].mxu0
      %4253 = vdwg.mxu0
      %4254 = vrot.lane.b32.xlu0 %v4205, 111
      %v4255 = vpop.permute.xlu0 %4254
      %4256 = vrot.lane.b32.xlu0 %v4209, 111
      %v4257 = vpop.permute.xlu0 %4256
      %4258 = vrot.lane.b32.xlu0 %v4207, 111
      %v4259 = vpop.permute.xlu0 %4258
      %4260 = vrot.lane.b32.xlu0 %v4211, 111
      %v4261 = vpop.permute.xlu0 %4260
      %4262 = vrot.lane.b32.xlu0 %v4248, 111
      %v4263 = vpop.permute.xlu0 %4262
      %4264 = vrot.lane.b32.xlu0 %v4251, 111
      %v4265 = vpop.permute.xlu0 %4264
      %v4266 = vsel %vm2318, %v4259, %v4263
      %v4267 = vsel %vm2318, %v4261, %v4265
      %v4268 = vsel %vm2318, %v4255, %v4259
      %v4269 = vsel %vm2318, %v4257, %v4261
      %v4270 = vsel %vm2318, %v4263, %v4255
      %v4271 = vsel %vm2318, %v4265, %v4257
      %v4272 = vadd.f32 %v4155, %v4268
      %v4273 = vadd.f32 %v4156, %v4266
      %v4274 = vadd.f32 %v4157, %v4270
      %v4275 = vadd.f32 %v4158, %v4269
      %v4276 = vadd.f32 %v4159, %v4267
      %v4277 = vadd.f32 %v4160, %v4271
      %s4278 = scalar_lea.vmem %s1, 56
      %v4279 = vld [vmem:[%s4278] sm:$0xf]
      %v4280 = vld [vmem:[%s4278 + $0x4] sm:$0xf]
      %v4283 = vunpack.c.l.b16 %v4279
      %v4284 = vunpack.c.l.b16 %v4280
      %v4285 = vpack.c.b16 %v4284, %v4283
      %4287 = vmatprep.subr.bf16.mxu0 %v3461
      %4288 = vmatpush1.bf16.msra.mxu0 %v3460
      %4289 = vmatprep.subr.bf16.mxu0 %v3464
      %4290 = vmatpush1.bf16.msra.mxu0 %v3463
      %4291 = vmatprep.subr.bf16.mxu0 %v3467
      %4292 = vmatpush1.bf16.msra.mxu0 %v3466
      %4293 = vmatprep.subr.bf16.mxu0 %v3470
      %4294 = vmatpush1.bf16.msra.mxu0 %v3469
      %4295 = vmatprep.subr.bf16.mxu0 %v3473
      %4296 = vmatpush1.bf16.msra.mxu0 %v3472
      %4297 = vmatprep.subr.bf16.mxu0 %v3476
      %4298 = vmatpush1.bf16.msra.mxu0 %v3475
      %4299 = vmatprep.subr.bf16.mxu0 %v3479
      %4300 = vmatpush1.bf16.msra.mxu0 %v3478
      %4301 = vmatprep.subr.bf16.mxu0 %v3482
      %4302 = vmatpush1.bf16.msra.mxu0 %v3481
      %4303 = vmatprep.subr.bf16.mxu0 0
      %4304 = vmatpush1.bf16.msra.mxu0 0
      %4305 = vmatprep.subr.bf16.mxu0 0
      %4306 = vmatpush1.bf16.msra.mxu0 0
      %4307 = vmatprep.subr.bf16.mxu0 0
      %4308 = vmatpush1.bf16.msra.mxu0 0
      %4309 = vmatprep.subr.bf16.mxu0 0
      %4310 = vmatpush1.bf16.msra.mxu0 0
      %4311 = vmatprep.subr.bf16.mxu0 0
      %4312 = vmatpush1.bf16.msra.mxu0 0
      %4313 = vmatprep.subr.bf16.mxu0 0
      %4314 = vmatpush1.bf16.msra.mxu0 0
      %4315 = vmatprep.subr.bf16.mxu0 0
      %4316 = vmatpush1.bf16.msra.mxu0 0
      %4317 = vmatprep.subr.bf16.mxu0 0
      %4318 = vmatpush1.bf16.msra.mxu0 0
      %4319 = vmatprep.mubr.bf16.mxu0 0
      %4320 = vmatmul.mubr.bf16.gmra.mrb[0].mxu0 %v4285
      %v4321 = vpop.f32.mrb[0].mxu0
      %v4322 = vadd.f32 0.0, %v4321
      %v4323 = vpop.f32.mrb[0].mxu0
      %v4324 = vadd.f32 0.0, %v4323
      %v4325 = vpop.f32.mrb[0].mxu0
      %v4326 = vadd.f32 0.0, %v4325
      %v4327 = vpop.f32.mrb[0].mxu0
      %v4328 = vadd.f32 0.0, %v4327
      %4329 = vdwg.mxu0
      %4330 = vmatprep.subr.bf16.mxu0 0
      %4331 = vmatpush1.bf16.msra.mxu0 %v3462
      %4332 = vmatprep.subr.bf16.mxu0 0
      %4333 = vmatpush1.bf16.msra.mxu0 %v3465
      %4334 = vmatprep.subr.bf16.mxu0 0
      %4335 = vmatpush1.bf16.msra.mxu0 %v3468
      %4336 = vmatprep.subr.bf16.mxu0 0
      %4337 = vmatpush1.bf16.msra.mxu0 %v3471
      %4338 = vmatprep.subr.bf16.mxu0 0
      %4339 = vmatpush1.bf16.msra.mxu0 %v3474
      %4340 = vmatprep.subr.bf16.mxu0 0
      %4341 = vmatpush1.bf16.msra.mxu0 %v3477
      %4342 = vmatprep.subr.bf16.mxu0 0
      %4343 = vmatpush1.bf16.msra.mxu0 %v3480
      %4344 = vmatprep.subr.bf16.mxu0 0
      %4345 = vmatpush1.bf16.msra.mxu0 %v3483
      %4346 = vmatprep.subr.bf16.mxu0 0
      %4347 = vmatpush1.bf16.msra.mxu0 0
      %4348 = vmatprep.subr.bf16.mxu0 0
      %4349 = vmatpush1.bf16.msra.mxu0 0
      %4350 = vmatprep.subr.bf16.mxu0 0
      %4351 = vmatpush1.bf16.msra.mxu0 0
      %4352 = vmatprep.subr.bf16.mxu0 0
      %4353 = vmatpush1.bf16.msra.mxu0 0
      %4354 = vmatprep.subr.bf16.mxu0 0
      %4355 = vmatpush1.bf16.msra.mxu0 0
      %4356 = vmatprep.subr.bf16.mxu0 0
      %4357 = vmatpush1.bf16.msra.mxu0 0
      %4358 = vmatprep.subr.bf16.mxu0 0
      %4359 = vmatpush1.bf16.msra.mxu0 0
      %4360 = vmatprep.subr.bf16.mxu0 0
      %4361 = vmatpush1.bf16.msra.mxu0 0
      %4362 = vmatprep.mubr.bf16.mxu0 0
      %4363 = vmatmul.mubr.bf16.gmra.mrb[0].mxu0 %v4285
      %v4364 = vpop.f32.mrb[0].mxu0
      %v4365 = vadd.f32 0.0, %v4364
      %v4366 = vpop.f32.mrb[0].mxu0
      %v4367 = vpop.f32.mrb[0].mxu0
      %v4368 = vadd.f32 0.0, %v4367
      %v4369 = vpop.f32.mrb[0].mxu0
      %4370 = vdwg.mxu0
      %4371 = vrot.lane.b32.xlu0 %v4322, 110
      %v4372 = vpop.permute.xlu0 %4371
      %4373 = vrot.lane.b32.xlu0 %v4326, 110
      %v4374 = vpop.permute.xlu0 %4373
      %4375 = vrot.lane.b32.xlu0 %v4324, 110
      %v4376 = vpop.permute.xlu0 %4375
      %4377 = vrot.lane.b32.xlu0 %v4328, 110
      %v4378 = vpop.permute.xlu0 %4377
      %4379 = vrot.lane.b32.xlu0 %v4365, 110
      %v4380 = vpop.permute.xlu0 %4379
      %4381 = vrot.lane.b32.xlu0 %v4368, 110
      %v4382 = vpop.permute.xlu0 %4381
      %v4383 = vsel %vm2679, %v4376, %v4380
      %v4384 = vsel %vm2679, %v4378, %v4382
      %v4385 = vsel %vm2679, %v4372, %v4376
      %v4386 = vsel %vm2679, %v4374, %v4378
      %v4387 = vsel %vm2679, %v4380, %v4372
      %v4388 = vsel %vm2679, %v4382, %v4374
      %v4389 = vadd.f32 %v4272, %v4385
      %v4390 = vadd.f32 %v4273, %v4383
      %v4391 = vadd.f32 %v4274, %v4387
      %v4392 = vadd.f32 %v4275, %v4386
      %v4393 = vadd.f32 %v4276, %v4384
      %v4394 = vadd.f32 %v4277, %v4388
      %s4395 = scalar_lea.vmem %s1, 64
      %v4396 = vld [vmem:[%s4395] sm:$0xf]
      %v4397 = vld [vmem:[%s4395 + $0x4] sm:$0xf]
      %v4400 = vunpack.c.l.b16 %v4396
      %v4401 = vunpack.c.l.b16 %v4397
      %v4402 = vpack.c.b16 %v4401, %v4400
      %4404 = vmatprep.subr.bf16.mxu0 %v3461
      %4405 = vmatpush1.bf16.msra.mxu0 %v3460
      %4406 = vmatprep.subr.bf16.mxu0 %v3464
      %4407 = vmatpush1.bf16.msra.mxu0 %v3463
      %4408 = vmatprep.subr.bf16.mxu0 %v3467
      %4409 = vmatpush1.bf16.msra.mxu0 %v3466
      %4410 = vmatprep.subr.bf16.mxu0 %v3470
      %4411 = vmatpush1.bf16.msra.mxu0 %v3469
      %4412 = vmatprep.subr.bf16.mxu0 %v3473
      %4413 = vmatpush1.bf16.msra.mxu0 %v3472
      %4414 = vmatprep.subr.bf16.mxu0 %v3476
      %4415 = vmatpush1.bf16.msra.mxu0 %v3475
      %4416 = vmatprep.subr.bf16.mxu0 %v3479
      %4417 = vmatpush1.bf16.msra.mxu0 %v3478
      %4418 = vmatprep.subr.bf16.mxu0 %v3482
      %4419 = vmatpush1.bf16.msra.mxu0 %v3481
      %4420 = vmatprep.subr.bf16.mxu0 0
      %4421 = vmatpush1.bf16.msra.mxu0 0
      %4422 = vmatprep.subr.bf16.mxu0 0
      %4423 = vmatpush1.bf16.msra.mxu0 0
      %4424 = vmatprep.subr.bf16.mxu0 0
      %4425 = vmatpush1.bf16.msra.mxu0 0
      %4426 = vmatprep.subr.bf16.mxu0 0
      %4427 = vmatpush1.bf16.msra.mxu0 0
      %4428 = vmatprep.subr.bf16.mxu0 0
      %4429 = vmatpush1.bf16.msra.mxu0 0
      %4430 = vmatprep.subr.bf16.mxu0 0
      %4431 = vmatpush1.bf16.msra.mxu0 0
      %4432 = vmatprep.subr.bf16.mxu0 0
      %4433 = vmatpush1.bf16.msra.mxu0 0
      %4434 = vmatprep.subr.bf16.mxu0 0
      %4435 = vmatpush1.bf16.msra.mxu0 0
      %4436 = vmatprep.mubr.bf16.mxu0 0
      %4437 = vmatmul.mubr.bf16.gmra.mrb[0].mxu0 %v4402
      %v4438 = vpop.f32.mrb[0].mxu0
      %v4439 = vadd.f32 0.0, %v4438
      %v4440 = vpop.f32.mrb[0].mxu0
      %v4441 = vadd.f32 0.0, %v4440
      %v4442 = vpop.f32.mrb[0].mxu0
      %v4443 = vadd.f32 0.0, %v4442
      %v4444 = vpop.f32.mrb[0].mxu0
      %v4445 = vadd.f32 0.0, %v4444
      %4446 = vdwg.mxu0
      %4447 = vmatprep.subr.bf16.mxu0 0
      %4448 = vmatpush1.bf16.msra.mxu0 %v3462
      %4449 = vmatprep.subr.bf16.mxu0 0
      %4450 = vmatpush1.bf16.msra.mxu0 %v3465
      %4451 = vmatprep.subr.bf16.mxu0 0
      %4452 = vmatpush1.bf16.msra.mxu0 %v3468
      %4453 = vmatprep.subr.bf16.mxu0 0
      %4454 = vmatpush1.bf16.msra.mxu0 %v3471
      %4455 = vmatprep.subr.bf16.mxu0 0
      %4456 = vmatpush1.bf16.msra.mxu0 %v3474
      %4457 = vmatprep.subr.bf16.mxu0 0
      %4458 = vmatpush1.bf16.msra.mxu0 %v3477
      %4459 = vmatprep.subr.bf16.mxu0 0
      %4460 = vmatpush1.bf16.msra.mxu0 %v3480
      %4461 = vmatprep.subr.bf16.mxu0 0
      %4462 = vmatpush1.bf16.msra.mxu0 %v3483
      %4463 = vmatprep.subr.bf16.mxu0 0
      %4464 = vmatpush1.bf16.msra.mxu0 0
      %4465 = vmatprep.subr.bf16.mxu0 0
      %4466 = vmatpush1.bf16.msra.mxu0 0
      %4467 = vmatprep.subr.bf16.mxu0 0
      %4468 = vmatpush1.bf16.msra.mxu0 0
      %4469 = vmatprep.subr.bf16.mxu0 0
      %4470 = vmatpush1.bf16.msra.mxu0 0
      %4471 = vmatprep.subr.bf16.mxu0 0
      %4472 = vmatpush1.bf16.msra.mxu0 0
      %4473 = vmatprep.subr.bf16.mxu0 0
      %4474 = vmatpush1.bf16.msra.mxu0 0
      %4475 = vmatprep.subr.bf16.mxu0 0
      %4476 = vmatpush1.bf16.msra.mxu0 0
      %4477 = vmatprep.subr.bf16.mxu0 0
      %4478 = vmatpush1.bf16.msra.mxu0 0
      %4479 = vmatprep.mubr.bf16.mxu0 0
      %4480 = vmatmul.mubr.bf16.gmra.mrb[0].mxu0 %v4402
      %v4481 = vpop.f32.mrb[0].mxu0
      %v4482 = vadd.f32 0.0, %v4481
      %v4483 = vpop.f32.mrb[0].mxu0
      %v4484 = vpop.f32.mrb[0].mxu0
      %v4485 = vadd.f32 0.0, %v4484
      %v4486 = vpop.f32.mrb[0].mxu0
      %4487 = vdwg.mxu0
      %4488 = vrot.lane.b32.xlu0 %v4439, 109
      %v4489 = vpop.permute.xlu0 %4488
      %4490 = vrot.lane.b32.xlu0 %v4443, 109
      %v4491 = vpop.permute.xlu0 %4490
      %4492 = vrot.lane.b32.xlu0 %v4441, 109
      %v4493 = vpop.permute.xlu0 %4492
      %4494 = vrot.lane.b32.xlu0 %v4445, 109
      %v4495 = vpop.permute.xlu0 %4494
      %4496 = vrot.lane.b32.xlu0 %v4482, 109
      %v4497 = vpop.permute.xlu0 %4496
      %4498 = vrot.lane.b32.xlu0 %v4485, 109
      %v4499 = vpop.permute.xlu0 %4498
      %v4500 = vsel %vm3040, %v4493, %v4497
      %v4501 = vsel %vm3040, %v4495, %v4499
      %v4502 = vsel %vm3040, %v4489, %v4493
      %v4503 = vsel %vm3040, %v4491, %v4495
      %v4504 = vsel %vm3040, %v4497, %v4489
      %v4505 = vsel %vm3040, %v4499, %v4491
      %v4506 = vadd.f32 %v4389, %v4502
      %v4507 = vadd.f32 %v4390, %v4500
      %v4508 = vadd.f32 %v4391, %v4504
      %v4509 = vadd.f32 %v4392, %v4503
      %v4510 = vadd.f32 %v4393, %v4501
      %v4511 = vadd.f32 %v4394, %v4505
      %v4512 = vld [vmem:[%s239] sm:$0xff]
      %v4513 = vld [vmem:[%s239 + $0x8] sm:$0xff]
      %v4514 = vld [vmem:[%s239 + $0x10] sm:$0xff]
      %v4515 = vmul.f32 %v4512, %v4506
      %v4516 = vmul.f32 %v4513, %v4507
      %v4517 = vmul.f32 %v4514, %v4508
      %v4518 = vadd.f32 %v4515, %v4509
      %v4519 = vadd.f32 %v4516, %v4510
      %v4520 = vadd.f32 %v4517, %v4511
      %4521 = vst [vmem:[%s244] sm:$0xff] %v4518
      %4522 = vst [vmem:[%s244 + $0x8] sm:$0xff] %v4519
      %4523 = vst [vmem:[%s244 + $0x10] sm:$0xff] %v4520
      %p4524 = scmp.lt.s32.totalorder %s16, 1
      %s4525 = scalar_select %p4524, %s16, 1
      %s4526 = smul.addr %s4525, 3
      %s4527 = smul.addr %s4526, 8
      %s4528 = scalar_lea.vmem %s5, %s4527
      // Predicated region
      $region41: #{acm_forward.1} parent=39 // pred_check
        %p4529 = pneg %p149
      $region42: #{acm_forward.1} parent=39 // pred_check_branch
        %4531 = sbr.rel (%p4529) target = $region44
      $region43: #{acm_forward.1} parent=39 // pred_region
        _
      $region44: #{acm_forward.1} parent=39 // pred_fallthru
        _
    $region40: #{acm_forward.1} parent=5 // pred_fallthru
      _
    %p4532 = scmp.le.s32.totalorder 2, %s11
    // Predicated region
    $region45: #{acm_forward.1} parent=5 // pred_check
      %p4533 = pneg %p4532
    $region46: #{acm_forward.1} parent=5 // pred_check_branch
      %4535 = sbr.rel (%p4533) target = $region48
    $region47: #{acm_forward.1} parent=5 // pred_region
      %s4536 = ssub.s32 %s11, 2
      // Predicated region
      $region49: #{acm_forward.1} parent=47 // pred_check
        %p4537 = pneg %p155
      $region50: #{acm_forward.1} parent=47 // pred_check_branch
        %4539 = sbr.rel (%p4537) target = $region52
      $region51: #{acm_forward.1} parent=47 // pred_region
        %p4540 = scmp.lt.s32.totalorder %s17, 1
        %s4541 = scalar_select %p4540, %s17, 1
        %s4542 = smul.addr %s4541, 3
        %s4543 = smul.addr %s4542, 8
        %s4544 = scalar_lea.vmem %s5, %s4543
      $region52: #{acm_forward.1} parent=47 // pred_fallthru
        _
    $region48: #{acm_forward.1} parent=5 // pred_fallthru
      _
  $region6: #{acm_forward.1} parent=0 // loop_footer
    %s15 = sadd.s32 1, %s11
  $region7: #{acm_forward.1} parent=0 // loop_footer_branch
    %10 = sbr.rel target = $region3
  $region8: #{acm_forward.1} parent=0 // loop_exit
    _

</llo_original>
